<compile_context>
chip_gen: v7x
topology: tpu7x:2x2x1
jax: 0.10.0
libtpu: 0.0.40
codegen_flags: <defaults>
</compile_context>

<pallas_src>
import functools
import math

import jax
import jax.numpy as jnp
from jax import lax
from jax.experimental import pallas as pl
from jax.experimental.pallas import tpu as pltpu


def _pick_tile(s, cap=256):
    """Largest divisor of s that is <= cap and sublane-aligned (or full s)."""
    for t in range(min(s, cap), 0, -1):
        if s % t == 0 and (t % 8 == 0 or t == s):
            return t
    return s


def _mha_flash_kernel(xq_ref, xkv_ref, wq_ref, bq_ref, wk_ref, bk_ref,
                      wv_ref, bv_ref, wo_ref, bo_ref, o_ref,
                      q_scr, m_scr, l_scr, acc_scr,
                      *, num_heads, head_dim, q_tile, kv_tile):
    qi = pl.program_id(1)
    ki = pl.program_id(2)
    n_kv = pl.num_programs(2)

    # ---- prologue (once per (batch, q_block)): Q projection + accumulator init
    @pl.when(ki == 0)
    def _():
        xq = xq_ref[0]                                          # (q_tile, d_in) bf16
        q = jnp.dot(xq, wq_ref[...],
                    preferred_element_type=jnp.float32) + bq_ref[...]
        # Fold 1/sqrt(head_dim) into q once (cheaper than scaling every score).
        q_scr[...] = (q * (1.0 / math.sqrt(head_dim))).astype(jnp.bfloat16)
        m_scr[...] = jnp.full_like(m_scr, -jnp.inf)
        l_scr[...] = jnp.zeros_like(l_scr)
        acc_scr[...] = jnp.zeros_like(acc_scr)

    # ---- online-softmax update; skip KV blocks entirely above the causal diag
    @pl.when(ki <= qi)
    def _():
        xkv = xkv_ref[0]                                        # (kv_tile, d_in) bf16
        k = (jnp.dot(xkv, wk_ref[...], preferred_element_type=jnp.float32)
             + bk_ref[...]).astype(jnp.bfloat16)                # (kv_tile, d_out)
        v = (jnp.dot(xkv, wv_ref[...], preferred_element_type=jnp.float32)
             + bv_ref[...]).astype(jnp.bfloat16)                # (kv_tile, d_out)

        row = qi * q_tile + lax.broadcasted_iota(jnp.int32, (q_tile, kv_tile), 0)
        col = ki * kv_tile + lax.broadcasted_iota(jnp.int32, (q_tile, kv_tile), 1)
        keep = col <= row                                       # causal mask

        nt_dims = (((1,), (1,)), ((), ()))   # q @ k.T without an XLU transpose
        for h in range(num_heads):           # static unroll; per-head column slices
            sl = slice(h * head_dim, (h + 1) * head_dim)
            q_h = q_scr[:, sl]                                  # (q_tile, hd)  bf16
            k_h = k[:, sl]                                      # (kv_tile, hd) bf16
            v_h = v[:, sl]                                      # (kv_tile, hd) bf16

            s = lax.dot_general(q_h, k_h, nt_dims,
                                preferred_element_type=jnp.float32)
            s = jnp.where(keep, s, -jnp.inf)

            m_prev = m_scr[h]                                   # (q_tile, 1)
            m_new = jnp.maximum(m_prev, jnp.max(s, axis=-1, keepdims=True))
            alpha = jnp.exp(m_prev - m_new)
            p = jnp.exp(s - m_new)

            l_scr[h] = alpha * l_scr[h] + jnp.sum(p, axis=-1, keepdims=True)
            acc_scr[:, sl] = alpha * acc_scr[:, sl] + jnp.dot(
                p.astype(jnp.bfloat16), v_h, preferred_element_type=jnp.float32)
            m_scr[h] = m_new

    # ---- epilogue: normalize AFTER the PV matmul, fused output projection
    @pl.when(ki == n_kv - 1)
    def _():
        for h in range(num_heads):
            sl = slice(h * head_dim, (h + 1) * head_dim)
            acc_scr[:, sl] = acc_scr[:, sl] * pl.reciprocal(l_scr[h], approx=True)
        ctx = acc_scr[...].astype(jnp.bfloat16)                 # (q_tile, d_out)
        out = jnp.dot(ctx, wo_ref[...],
                      preferred_element_type=jnp.float32) + bo_ref[...]
        o_ref[0] = out.astype(o_ref.dtype)


def multi_head_attention(x, params, *, num_heads):
    """x: (B, S, d_in) float32. params: (d_in,d_out)/(d_out,d_out) weights, (1,d_out) biases."""
    B, S, d_in = x.shape
    d_out = params["wq"].shape[1]
    assert d_out % num_heads == 0
    head_dim = d_out // num_heads

    q_tile = _pick_tile(S)
    kv_tile = q_tile
    n_q = S // q_tile
    n_kv = S // kv_tile

    # bf16 MXU operands; all accumulation stays f32 inside the kernel.
    xb = x.astype(jnp.bfloat16)
    wq = params["wq"].astype(jnp.bfloat16)
    wk = params["wk"].astype(jnp.bfloat16)
    wv = params["wv"].astype(jnp.bfloat16)
    wo = params["wo"].astype(jnp.bfloat16)
    bq, bk, bv, bo = params["bq"], params["bk"], params["bv"], params["bo"]

    kernel = functools.partial(_mha_flash_kernel, num_heads=num_heads,
                               head_dim=head_dim, q_tile=q_tile, kv_tile=kv_tile)

    vmem_limit = 64 * 1024 * 1024
    try:  # cap at physical VMEM where queryable (v7x has only 64 MiB per core)
        vmem_limit = min(vmem_limit, int(pltpu.get_tpu_info().vmem_capacity_bytes))
    except Exception:
        pass

    def build(weight_mode):
        def wspec(shape):
            kw = {} if weight_mode is None else {"pipeline_mode": weight_mode}
            return pl.BlockSpec(shape, lambda b, qi, ki: (0,) * len(shape), **kw)

        grid_spec = pltpu.PrefetchScalarGridSpec(
            num_scalar_prefetch=0,
            grid=(B, n_q, n_kv),
            in_specs=[
                pl.BlockSpec((1, q_tile, d_in), lambda b, qi, ki: (b, qi, 0)),   # x (q rows)
                pl.BlockSpec((1, kv_tile, d_in), lambda b, qi, ki: (b, ki, 0)),  # x (kv rows)
                wspec((d_in, d_out)), wspec((1, d_out)),                          # W_Q, b_Q
                wspec((d_in, d_out)), wspec((1, d_out)),                          # W_K, b_K
                wspec((d_in, d_out)), wspec((1, d_out)),                          # W_V, b_V
                wspec((d_out, d_out)), wspec((1, d_out)),                         # out_proj
            ],
            out_specs=pl.BlockSpec((1, q_tile, d_out), lambda b, qi, ki: (b, qi, 0)),
            scratch_shapes=[
                pltpu.VMEM((q_tile, d_out), jnp.bfloat16),          # scaled Q
                pltpu.VMEM((num_heads, q_tile, 1), jnp.float32),    # running max m
                pltpu.VMEM((num_heads, q_tile, 1), jnp.float32),    # running denom l
                pltpu.VMEM((q_tile, d_out), jnp.float32),           # PV accumulator
            ])
        return pl.pallas_call(
            kernel,
            out_shape=jax.ShapeDtypeStruct((B, S, d_out), x.dtype),
            grid_spec=grid_spec,
            compiler_params=pltpu.CompilerParams(
                dimension_semantics=("parallel", "parallel", "arbitrary"),
                vmem_limit_bytes=vmem_limit))

    args = (xb, xb, wq, bq, wk, bk, wv, bv, wo, bo)
    try:
        # Constant-index weight blocks are revisited, not re-fetched -> single-buffer them.
        return build(pl.Buffered(1))(*args)
    except Exception:
        # Fallback for jax versions without BlockSpec pipeline_mode support.
        return build(None)(*args)


def _reference(x, params, *, num_heads):
    """Pure-JAX f32 reference mirroring the PyTorch forward (eval mode, no dropout)."""
    B, S, d_in = x.shape
    d_out = params["wq"].shape[1]
    hd = d_out // num_heads
    scale = 1.0 / math.sqrt(hd)

    def proj(w, b):
        return (x @ w + b).reshape(B, S, num_heads, hd).transpose(0, 2, 1, 3)

    q = proj(params["wq"], params["bq"])
    k = proj(params["wk"], params["bk"])
    v = proj(params["wv"], params["bv"])
    s = jnp.einsum("bhqd,bhkd->bhqk", q, k)
    mask = jnp.triu(jnp.ones((S, S), dtype=bool), k=1)
    s = jnp.where(mask, -jnp.inf, s) * scale
    p = jax.nn.softmax(s, axis=-1)
    ctx = jnp.einsum("bhqk,bhkd->bhqd", p, v).transpose(0, 2, 1, 3).reshape(B, S, d_out)
    return ctx @ params["wo"] + params["bo"]


if __name__ == "__main__":
    # Small shapes consistent with the module.
    batch, seq, d_in, d_out, num_heads = 2, 8, 32, 32, 4

    key = jax.random.PRNGKey(0)
    ks = jax.random.split(key, 9)
    scale_in = 1.0 / math.sqrt(d_in)
    scale_out = 1.0 / math.sqrt(d_out)

    params = {
        "wq": jax.random.uniform(ks[0], (d_in, d_out), jnp.float32, -scale_in, scale_in),
        "bq": jax.random.uniform(ks[1], (1, d_out), jnp.float32, -scale_in, scale_in),
        "wk": jax.random.uniform(ks[2], (d_in, d_out), jnp.float32, -scale_in, scale_in),
        "bk": jax.random.uniform(ks[3], (1, d_out), jnp.float32, -scale_in, scale_in),
        "wv": jax.random.uniform(ks[4], (d_in, d_out), jnp.float32, -scale_in, scale_in),
        "bv": jax.random.uniform(ks[5], (1, d_out), jnp.float32, -scale_in, scale_in),
        "wo": jax.random.uniform(ks[6], (d_out, d_out), jnp.float32, -scale_out, scale_out),
        "bo": jax.random.uniform(ks[7], (1, d_out), jnp.float32, -scale_out, scale_out),
    }
    x = jax.random.normal(ks[8], (batch, seq, d_in), jnp.float32)

    out = multi_head_attention(x, params, num_heads=num_heads)
    out = jax.block_until_ready(out)

    ref = _reference(x, params, num_heads=num_heads)
    assert out.shape == (batch, seq, d_out)
    # Tolerance accounts for bf16 MXU operands and the approximate (EUP) reciprocal.
    assert jnp.allclose(out, ref, atol=3e-2, rtol=3e-2), "Pallas output mismatch vs reference"

    print("KERNEL_OK")
</pallas_src>

<mosaic_0001>
module attributes {stable_mosaic.version = 11 : i64} {
  func.func @_mha_flash_kernel(%arg0: i32, %arg1: i32, %arg2: i32, %arg3: memref<1x8x32xbf16, #tpu.memory_space<vmem>>, %arg4: memref<1x8x32xbf16, #tpu.memory_space<vmem>>, %arg5: memref<32x32xbf16, #tpu.memory_space<vmem>>, %arg6: memref<1x32xf32, #tpu.memory_space<vmem>>, %arg7: memref<32x32xbf16, #tpu.memory_space<vmem>>, %arg8: memref<1x32xf32, #tpu.memory_space<vmem>>, %arg9: memref<32x32xbf16, #tpu.memory_space<vmem>>, %arg10: memref<1x32xf32, #tpu.memory_space<vmem>>, %arg11: memref<32x32xbf16, #tpu.memory_space<vmem>>, %arg12: memref<1x32xf32, #tpu.memory_space<vmem>>, %arg13: memref<1x8x32xf32, #tpu.memory_space<vmem>>, %arg14: memref<8x32xbf16, #tpu.memory_space<vmem>>, %arg15: memref<4x8x1xf32, #tpu.memory_space<vmem>>, %arg16: memref<4x8x1xf32, #tpu.memory_space<vmem>>, %arg17: memref<8x32xf32, #tpu.memory_space<vmem>>) attributes {dimension_semantics = [#tpu.dimension_semantics<parallel>, #tpu.dimension_semantics<parallel>, #tpu.dimension_semantics<arbitrary>], iteration_bounds = array<i64: 2, 1, 1>, scalar_prefetch = 0 : i64, scratch_operands = 4 : i64, tpu.core_type = #tpu.core_type<tc>, window_params = [{transform_indices = @transform_0, window_bounds = array<i64: 1, 8, 32>}, {transform_indices = @transform_1, window_bounds = array<i64: 1, 8, 32>}, {pipeline_mode = #tpu.pipeline_mode<synchronous>, transform_indices = @transform_2, window_bounds = array<i64: 32, 32>}, {pipeline_mode = #tpu.pipeline_mode<synchronous>, transform_indices = @transform_3, window_bounds = array<i64: 1, 32>}, {pipeline_mode = #tpu.pipeline_mode<synchronous>, transform_indices = @transform_4, window_bounds = array<i64: 32, 32>}, {pipeline_mode = #tpu.pipeline_mode<synchronous>, transform_indices = @transform_5, window_bounds = array<i64: 1, 32>}, {pipeline_mode = #tpu.pipeline_mode<synchronous>, transform_indices = @transform_6, window_bounds = array<i64: 32, 32>}, {pipeline_mode = #tpu.pipeline_mode<synchronous>, transform_indices = @transform_7, window_bounds = array<i64: 1, 32>}, {pipeline_mode = #tpu.pipeline_mode<synchronous>, transform_indices = @transform_8, window_bounds = array<i64: 32, 32>}, {pipeline_mode = #tpu.pipeline_mode<synchronous>, transform_indices = @transform_9, window_bounds = array<i64: 1, 32>}, {transform_indices = @transform_10, window_bounds = array<i64: 1, 8, 32>}]} {
    %c0_i32 = arith.constant 0 : i32
    %0 = arith.cmpi eq, %arg2, %c0_i32 : i32
    %1 = arith.extui %0 : i1 to i32
    %c0_i32_0 = arith.constant 0 : i32
    %2 = arith.cmpi ne, %1, %c0_i32_0 : i32
    scf.if %2 {
      %c0 = arith.constant 0 : index
      %c0_4 = arith.constant 0 : index
      %c0_5 = arith.constant 0 : index
      %9 = vector.load %arg3[%c0, %c0_4, %c0_5] : memref<1x8x32xbf16, #tpu.memory_space<vmem>>, vector<1x8x32xbf16>
      %10 = vector.shape_cast %9 : vector<1x8x32xbf16> to vector<8x32xbf16>
      %c0_6 = arith.constant 0 : index
      %c0_7 = arith.constant 0 : index
      %11 = vector.load %arg5[%c0_6, %c0_7] : memref<32x32xbf16, #tpu.memory_space<vmem>>, vector<32x32xbf16>
      %cst = arith.constant dense<0.000000e+00> : vector<8x32xf32>
      %12 = tpu.matmul %10, %11, %cst {dimension_numbers = #tpu.dot_dimension_numbers<[1], [0], [0], [1], [0, 0, 1, 1], [], []>} : vector<8x32xbf16>, vector<32x32xbf16>, vector<8x32xf32> -> vector<8x32xf32>
      %c0_8 = arith.constant 0 : index
      %c0_9 = arith.constant 0 : index
      %13 = vector.load %arg6[%c0_8, %c0_9] : memref<1x32xf32, #tpu.memory_space<vmem>>, vector<1x32xf32>
      %14 = vector.broadcast %13 : vector<1x32xf32> to vector<8x32xf32>
      %15 = arith.addf %12, %14 : vector<8x32xf32>
      %cst_10 = arith.constant 0.353553385 : f32
      %16 = vector.broadcast %cst_10 : f32 to vector<8x32xf32>
      %17 = arith.mulf %15, %16 : vector<8x32xf32>
      %18 = arith.truncf %17 : vector<8x32xf32> to vector<8x32xbf16>
      %c0_11 = arith.constant 0 : index
      %c0_12 = arith.constant 0 : index
      %19 = vector.load %arg14[%c0_11, %c0_12] : memref<8x32xbf16, #tpu.memory_space<vmem>>, vector<8x32xbf16>
      tpu.vector_store %arg14[%c0_11, %c0_12], %18 {strides = array<i32>} : memref<8x32xbf16, #tpu.memory_space<vmem>>, vector<8x32xbf16>,
      %cst_13 = arith.constant 0xFF800000 : f32
      %20 = vector.broadcast %cst_13 : f32 to vector<4x8x1xf32>
      %c0_14 = arith.constant 0 : index
      %c0_15 = arith.constant 0 : index
      %c0_16 = arith.constant 0 : index
      %21 = vector.load %arg15[%c0_14, %c0_15, %c0_16] : memref<4x8x1xf32, #tpu.memory_space<vmem>>, vector<4x8x1xf32>
      tpu.vector_store %arg15[%c0_14, %c0_15, %c0_16], %20 {strides = array<i32>} : memref<4x8x1xf32, #tpu.memory_space<vmem>>, vector<4x8x1xf32>,
      %cst_17 = arith.constant 0.000000e+00 : f32
      %22 = vector.broadcast %cst_17 : f32 to vector<4x8x1xf32>
      %c0_18 = arith.constant 0 : index
      %c0_19 = arith.constant 0 : index
      %c0_20 = arith.constant 0 : index
      %23 = vector.load %arg16[%c0_18, %c0_19, %c0_20] : memref<4x8x1xf32, #tpu.memory_space<vmem>>, vector<4x8x1xf32>
      tpu.vector_store %arg16[%c0_18, %c0_19, %c0_20], %22 {strides = array<i32>} : memref<4x8x1xf32, #tpu.memory_space<vmem>>, vector<4x8x1xf32>,
      %cst_21 = arith.constant 0.000000e+00 : f32
      %24 = vector.broadcast %cst_21 : f32 to vector<8x32xf32>
      %c0_22 = arith.constant 0 : index
      %c0_23 = arith.constant 0 : index
      %25 = vector.load %arg17[%c0_22, %c0_23] : memref<8x32xf32, #tpu.memory_space<vmem>>, vector<8x32xf32>
      tpu.vector_store %arg17[%c0_22, %c0_23], %24 {strides = array<i32>} : memref<8x32xf32, #tpu.memory_space<vmem>>, vector<8x32xf32>,
    } else {
    }
    %3 = arith.cmpi sle, %arg2, %arg1 : i32
    %4 = arith.extui %3 : i1 to i32
    %c0_i32_1 = arith.constant 0 : i32
    %5 = arith.cmpi ne, %4, %c0_i32_1 : i32
    scf.if %5 {
      %c0 = arith.constant 0 : index
      %c0_4 = arith.constant 0 : index
      %c0_5 = arith.constant 0 : index
      %9 = vector.load %arg4[%c0, %c0_4, %c0_5] : memref<1x8x32xbf16, #tpu.memory_space<vmem>>, vector<1x8x32xbf16>
      %10 = vector.shape_cast %9 : vector<1x8x32xbf16> to vector<8x32xbf16>
      %c0_6 = arith.constant 0 : index
      %c0_7 = arith.constant 0 : index
      %11 = vector.load %arg7[%c0_6, %c0_7] : memref<32x32xbf16, #tpu.memory_space<vmem>>, vector<32x32xbf16>
      %cst = arith.constant dense<0.000000e+00> : vector<8x32xf32>
      %12 = tpu.matmul %10, %11, %cst {dimension_numbers = #tpu.dot_dimension_numbers<[1], [0], [0], [1], [0, 0, 1, 1], [], []>} : vector<8x32xbf16>, vector<32x32xbf16>, vector<8x32xf32> -> vector<8x32xf32>
      %c0_8 = arith.constant 0 : index
      %c0_9 = arith.constant 0 : index
      %13 = vector.load %arg8[%c0_8, %c0_9] : memref<1x32xf32, #tpu.memory_space<vmem>>, vector<1x32xf32>
      %14 = vector.broadcast %13 : vector<1x32xf32> to vector<8x32xf32>
      %15 = arith.addf %12, %14 : vector<8x32xf32>
      %16 = arith.truncf %15 : vector<8x32xf32> to vector<8x32xbf16>
      %c0_10 = arith.constant 0 : index
      %c0_11 = arith.constant 0 : index
      %17 = vector.load %arg9[%c0_10, %c0_11] : memref<32x32xbf16, #tpu.memory_space<vmem>>, vector<32x32xbf16>
      %cst_12 = arith.constant dense<0.000000e+00> : vector<8x32xf32>
      %18 = tpu.matmul %10, %17, %cst_12 {dimension_numbers = #tpu.dot_dimension_numbers<[1], [0], [0], [1], [0, 0, 1, 1], [], []>} : vector<8x32xbf16>, vector<32x32xbf16>, vector<8x32xf32> -> vector<8x32xf32>
      %c0_13 = arith.constant 0 : index
      %c0_14 = arith.constant 0 : index
      %19 = vector.load %arg10[%c0_13, %c0_14] : memref<1x32xf32, #tpu.memory_space<vmem>>, vector<1x32xf32>
      %20 = vector.broadcast %19 : vector<1x32xf32> to vector<8x32xf32>
      %21 = arith.addf %18, %20 : vector<8x32xf32>
      %22 = arith.truncf %21 : vector<8x32xf32> to vector<8x32xbf16>
      %c8_i32 = arith.constant 8 : i32
      %23 = arith.muli %arg1, %c8_i32 : i32
      %24 = tpu.iota {dimensions = array<i32: 0>} : vector<8x8xi32>
      %25 = vector.broadcast %23 : i32 to vector<8x8xi32>
      %26 = arith.addi %25, %24 : vector<8x8xi32>
      %c8_i32_15 = arith.constant 8 : i32
      %27 = arith.muli %arg2, %c8_i32_15 : i32
      %28 = tpu.iota {dimensions = array<i32: 1>} : vector<8x8xi32>
      %29 = vector.broadcast %27 : i32 to vector<8x8xi32>
      %30 = arith.addi %29, %28 : vector<8x8xi32>
      %31 = arith.cmpi sle, %30, %26 : vector<8x8xi32>
      %c0_16 = arith.constant 0 : index
      %c0_17 = arith.constant 0 : index
      %32 = vector.load %arg14[%c0_16, %c0_17] : memref<8x32xbf16, #tpu.memory_space<vmem>>, vector<8x8xbf16>
      %33 = vector.extract_strided_slice %16 {offsets = [0, 0], sizes = [8, 8], strides = [1, 1]} : vector<8x32xbf16> to vector<8x8xbf16>
      %34 = vector.extract_strided_slice %22 {offsets = [0, 0], sizes = [8, 8], strides = [1, 1]} : vector<8x32xbf16> to vector<8x8xbf16>
      %cst_18 = arith.constant dense<0.000000e+00> : vector<8x8xf32>
      %35 = tpu.matmul %32, %33, %cst_18 {dimension_numbers = #tpu.dot_dimension_numbers<[1], [1], [0], [0], [0, 0, 1, 0], [], []>} : vector<8x8xbf16>, vector<8x8xbf16>, vector<8x8xf32> -> vector<8x8xf32>
      %cst_19 = arith.constant 0xFF800000 : f32
      %36 = vector.broadcast %cst_19 : f32 to vector<8x8xf32>
      %37 = arith.select %31, %35, %36 : vector<8x8xi1>, vector<8x8xf32>
      %c0_20 = arith.constant 0 : index
      %c0_21 = arith.constant 0 : index
      %c0_22 = arith.constant 0 : index
      %38 = vector.load %arg15[%c0_20, %c0_21, %c0_22] : memref<4x8x1xf32, #tpu.memory_space<vmem>>, vector<1x8x1xf32>
      %39 = vector.shape_cast %38 : vector<1x8x1xf32> to vector<8x1xf32>
      %cst_23 = arith.constant dense<0xFF800000> : vector<8xf32>
      %40 = vector.multi_reduction <maximumf>, %37, %cst_23 [1] : vector<8x8xf32> to vector<8xf32>
      %41 = vector.shape_cast %40 : vector<8xf32> to vector<8x1xf32>
      %42 = arith.maximumf %39, %41 : vector<8x1xf32>
      %43 = arith.subf %39, %42 : vector<8x1xf32>
      %44 = math.exp %43 : vector<8x1xf32>
      %45 = vector.broadcast %42 : vector<8x1xf32> to vector<8x8xf32>
      %46 = arith.subf %37, %45 : vector<8x8xf32>
      %47 = math.exp %46 : vector<8x8xf32>
      %c0_24 = arith.constant 0 : index
      %c0_25 = arith.constant 0 : index
      %c0_26 = arith.constant 0 : index
      %48 = vector.load %arg16[%c0_24, %c0_25, %c0_26] : memref<4x8x1xf32, #tpu.memory_space<vmem>>, vector<1x8x1xf32>
      %49 = vector.shape_cast %48 : vector<1x8x1xf32> to vector<8x1xf32>
      %50 = arith.mulf %44, %49 : vector<8x1xf32>
      %cst_27 = arith.constant dense<0.000000e+00> : vector<8xf32>
      %51 = vector.multi_reduction <add>, %47, %cst_27 [1] : vector<8x8xf32> to vector<8xf32>
      %52 = vector.shape_cast %51 : vector<8xf32> to vector<8x1xf32>
      %53 = arith.addf %50, %52 : vector<8x1xf32>
      %c0_28 = arith.constant 0 : index
      %c0_29 = arith.constant 0 : index
      %c0_30 = arith.constant 0 : index
      %54 = vector.load %arg16[%c0_28, %c0_29, %c0_30] : memref<4x8x1xf32, #tpu.memory_space<vmem>>, vector<1x8x1xf32>
      %55 = vector.shape_cast %54 : vector<1x8x1xf32> to vector<8x1xf32>
      %56 = vector.shape_cast %53 : vector<8x1xf32> to vector<1x8x1xf32>
      tpu.vector_store %arg16[%c0_28, %c0_29, %c0_30], %56 {strides = array<i32>} : memref<4x8x1xf32, #tpu.memory_space<vmem>>, vector<1x8x1xf32>,
      %c0_31 = arith.constant 0 : index
      %c0_32 = arith.constant 0 : index
      %57 = vector.load %arg17[%c0_31, %c0_32] : memref<8x32xf32, #tpu.memory_space<vmem>>, vector<8x8xf32>
      %58 = vector.broadcast %44 : vector<8x1xf32> to vector<8x8xf32>
      %59 = arith.mulf %58, %57 : vector<8x8xf32>
      %60 = arith.truncf %47 : vector<8x8xf32> to vector<8x8xbf16>
      %cst_33 = arith.constant dense<0.000000e+00> : vector<8x8xf32>
      %61 = tpu.matmul %60, %34, %cst_33 {dimension_numbers = #tpu.dot_dimension_numbers<[1], [0], [0], [1], [0, 0, 1, 1], [], []>} : vector<8x8xbf16>, vector<8x8xbf16>, vector<8x8xf32> -> vector<8x8xf32>
      %62 = arith.addf %59, %61 : vector<8x8xf32>
      %c0_34 = arith.constant 0 : index
      %c0_35 = arith.constant 0 : index
      %63 = vector.load %arg17[%c0_34, %c0_35] : memref<8x32xf32, #tpu.memory_space<vmem>>, vector<8x8xf32>
      tpu.vector_store %arg17[%c0_34, %c0_35], %62 {strides = array<i32>} : memref<8x32xf32, #tpu.memory_space<vmem>>, vector<8x8xf32>,
      %c0_36 = arith.constant 0 : index
      %c0_37 = arith.constant 0 : index
      %c0_38 = arith.constant 0 : index
      %64 = vector.load %arg15[%c0_36, %c0_37, %c0_38] : memref<4x8x1xf32, #tpu.memory_space<vmem>>, vector<1x8x1xf32>
      %65 = vector.shape_cast %64 : vector<1x8x1xf32> to vector<8x1xf32>
      %66 = vector.shape_cast %42 : vector<8x1xf32> to vector<1x8x1xf32>
      tpu.vector_store %arg15[%c0_36, %c0_37, %c0_38], %66 {strides = array<i32>} : memref<4x8x1xf32, #tpu.memory_space<vmem>>, vector<1x8x1xf32>,
      %c0_39 = arith.constant 0 : index
      %c8 = arith.constant 8 : index
      %67 = vector.load %arg14[%c0_39, %c8] : memref<8x32xbf16, #tpu.memory_space<vmem>>, vector<8x8xbf16>
      %68 = vector.extract_strided_slice %16 {offsets = [0, 8], sizes = [8, 8], strides = [1, 1]} : vector<8x32xbf16> to vector<8x8xbf16>
      %69 = vector.extract_strided_slice %22 {offsets = [0, 8], sizes = [8, 8], strides = [1, 1]} : vector<8x32xbf16> to vector<8x8xbf16>
      %cst_40 = arith.constant dense<0.000000e+00> : vector<8x8xf32>
      %70 = tpu.matmul %67, %68, %cst_40 {dimension_numbers = #tpu.dot_dimension_numbers<[1], [1], [0], [0], [0, 0, 1, 0], [], []>} : vector<8x8xbf16>, vector<8x8xbf16>, vector<8x8xf32> -> vector<8x8xf32>
      %cst_41 = arith.constant 0xFF800000 : f32
      %71 = vector.broadcast %cst_41 : f32 to vector<8x8xf32>
      %72 = arith.select %31, %70, %71 : vector<8x8xi1>, vector<8x8xf32>
      %c1 = arith.constant 1 : index
      %c0_42 = arith.constant 0 : index
      %c0_43 = arith.constant 0 : index
      %73 = vector.load %arg15[%c1, %c0_42, %c0_43] : memref<4x8x1xf32, #tpu.memory_space<vmem>>, vector<1x8x1xf32>
      %74 = vector.shape_cast %73 : vector<1x8x1xf32> to vector<8x1xf32>
      %cst_44 = arith.constant dense<0xFF800000> : vector<8xf32>
      %75 = vector.multi_reduction <maximumf>, %72, %cst_44 [1] : vector<8x8xf32> to vector<8xf32>
      %76 = vector.shape_cast %75 : vector<8xf32> to vector<8x1xf32>
      %77 = arith.maximumf %74, %76 : vector<8x1xf32>
      %78 = arith.subf %74, %77 : vector<8x1xf32>
      %79 = math.exp %78 : vector<8x1xf32>
      %80 = vector.broadcast %77 : vector<8x1xf32> to vector<8x8xf32>
      %81 = arith.subf %72, %80 : vector<8x8xf32>
      %82 = math.exp %81 : vector<8x8xf32>
      %c1_45 = arith.constant 1 : index
      %c0_46 = arith.constant 0 : index
      %c0_47 = arith.constant 0 : index
      %83 = vector.load %arg16[%c1_45, %c0_46, %c0_47] : memref<4x8x1xf32, #tpu.memory_space<vmem>>, vector<1x8x1xf32>
      %84 = vector.shape_cast %83 : vector<1x8x1xf32> to vector<8x1xf32>
      %85 = arith.mulf %79, %84 : vector<8x1xf32>
      %cst_48 = arith.constant dense<0.000000e+00> : vector<8xf32>
      %86 = vector.multi_reduction <add>, %82, %cst_48 [1] : vector<8x8xf32> to vector<8xf32>
      %87 = vector.shape_cast %86 : vector<8xf32> to vector<8x1xf32>
      %88 = arith.addf %85, %87 : vector<8x1xf32>
      %c1_49 = arith.constant 1 : index
      %c0_50 = arith.constant 0 : index
      %c0_51 = arith.constant 0 : index
      %89 = vector.load %arg16[%c1_49, %c0_50, %c0_51] : memref<4x8x1xf32, #tpu.memory_space<vmem>>, vector<1x8x1xf32>
      %90 = vector.shape_cast %89 : vector<1x8x1xf32> to vector<8x1xf32>
      %91 = vector.shape_cast %88 : vector<8x1xf32> to vector<1x8x1xf32>
      tpu.vector_store %arg16[%c1_49, %c0_50, %c0_51], %91 {strides = array<i32>} : memref<4x8x1xf32, #tpu.memory_space<vmem>>, vector<1x8x1xf32>,
      %c0_52 = arith.constant 0 : index
      %c8_53 = arith.constant 8 : index
      %92 = vector.load %arg17[%c0_52, %c8_53] : memref<8x32xf32, #tpu.memory_space<vmem>>, vector<8x8xf32>
      %93 = vector.broadcast %79 : vector<8x1xf32> to vector<8x8xf32>
      %94 = arith.mulf %93, %92 : vector<8x8xf32>
      %95 = arith.truncf %82 : vector<8x8xf32> to vector<8x8xbf16>
      %cst_54 = arith.constant dense<0.000000e+00> : vector<8x8xf32>
      %96 = tpu.matmul %95, %69, %cst_54 {dimension_numbers = #tpu.dot_dimension_numbers<[1], [0], [0], [1], [0, 0, 1, 1], [], []>} : vector<8x8xbf16>, vector<8x8xbf16>, vector<8x8xf32> -> vector<8x8xf32>
      %97 = arith.addf %94, %96 : vector<8x8xf32>
      %c0_55 = arith.constant 0 : index
      %c8_56 = arith.constant 8 : index
      %98 = vector.load %arg17[%c0_55, %c8_56] : memref<8x32xf32, #tpu.memory_space<vmem>>, vector<8x8xf32>
      tpu.vector_store %arg17[%c0_55, %c8_56], %97 {strides = array<i32>} : memref<8x32xf32, #tpu.memory_space<vmem>>, vector<8x8xf32>,
      %c1_57 = arith.constant 1 : index
      %c0_58 = arith.constant 0 : index
      %c0_59 = arith.constant 0 : index
      %99 = vector.load %arg15[%c1_57, %c0_58, %c0_59] : memref<4x8x1xf32, #tpu.memory_space<vmem>>, vector<1x8x1xf32>
      %100 = vector.shape_cast %99 : vector<1x8x1xf32> to vector<8x1xf32>
      %101 = vector.shape_cast %77 : vector<8x1xf32> to vector<1x8x1xf32>
      tpu.vector_store %arg15[%c1_57, %c0_58, %c0_59], %101 {strides = array<i32>} : memref<4x8x1xf32, #tpu.memory_space<vmem>>, vector<1x8x1xf32>,
      %c0_60 = arith.constant 0 : index
      %c16 = arith.constant 16 : index
      %102 = vector.load %arg14[%c0_60, %c16] : memref<8x32xbf16, #tpu.memory_space<vmem>>, vector<8x8xbf16>
      %103 = vector.extract_strided_slice %16 {offsets = [0, 16], sizes = [8, 8], strides = [1, 1]} : vector<8x32xbf16> to vector<8x8xbf16>
      %104 = vector.extract_strided_slice %22 {offsets = [0, 16], sizes = [8, 8], strides = [1, 1]} : vector<8x32xbf16> to vector<8x8xbf16>
      %cst_61 = arith.constant dense<0.000000e+00> : vector<8x8xf32>
      %105 = tpu.matmul %102, %103, %cst_61 {dimension_numbers = #tpu.dot_dimension_numbers<[1], [1], [0], [0], [0, 0, 1, 0], [], []>} : vector<8x8xbf16>, vector<8x8xbf16>, vector<8x8xf32> -> vector<8x8xf32>
      %cst_62 = arith.constant 0xFF800000 : f32
      %106 = vector.broadcast %cst_62 : f32 to vector<8x8xf32>
      %107 = arith.select %31, %105, %106 : vector<8x8xi1>, vector<8x8xf32>
      %c2 = arith.constant 2 : index
      %c0_63 = arith.constant 0 : index
      %c0_64 = arith.constant 0 : index
      %108 = vector.load %arg15[%c2, %c0_63, %c0_64] : memref<4x8x1xf32, #tpu.memory_space<vmem>>, vector<1x8x1xf32>
      %109 = vector.shape_cast %108 : vector<1x8x1xf32> to vector<8x1xf32>
      %cst_65 = arith.constant dense<0xFF800000> : vector<8xf32>
      %110 = vector.multi_reduction <maximumf>, %107, %cst_65 [1] : vector<8x8xf32> to vector<8xf32>
      %111 = vector.shape_cast %110 : vector<8xf32> to vector<8x1xf32>
      %112 = arith.maximumf %109, %111 : vector<8x1xf32>
      %113 = arith.subf %109, %112 : vector<8x1xf32>
      %114 = math.exp %113 : vector<8x1xf32>
      %115 = vector.broadcast %112 : vector<8x1xf32> to vector<8x8xf32>
      %116 = arith.subf %107, %115 : vector<8x8xf32>
      %117 = math.exp %116 : vector<8x8xf32>
      %c2_66 = arith.constant 2 : index
      %c0_67 = arith.constant 0 : index
      %c0_68 = arith.constant 0 : index
      %118 = vector.load %arg16[%c2_66, %c0_67, %c0_68] : memref<4x8x1xf32, #tpu.memory_space<vmem>>, vector<1x8x1xf32>
      %119 = vector.shape_cast %118 : vector<1x8x1xf32> to vector<8x1xf32>
      %120 = arith.mulf %114, %119 : vector<8x1xf32>
      %cst_69 = arith.constant dense<0.000000e+00> : vector<8xf32>
      %121 = vector.multi_reduction <add>, %117, %cst_69 [1] : vector<8x8xf32> to vector<8xf32>
      %122 = vector.shape_cast %121 : vector<8xf32> to vector<8x1xf32>
      %123 = arith.addf %120, %122 : vector<8x1xf32>
      %c2_70 = arith.constant 2 : index
      %c0_71 = arith.constant 0 : index
      %c0_72 = arith.constant 0 : index
      %124 = vector.load %arg16[%c2_70, %c0_71, %c0_72] : memref<4x8x1xf32, #tpu.memory_space<vmem>>, vector<1x8x1xf32>
      %125 = vector.shape_cast %124 : vector<1x8x1xf32> to vector<8x1xf32>
      %126 = vector.shape_cast %123 : vector<8x1xf32> to vector<1x8x1xf32>
      tpu.vector_store %arg16[%c2_70, %c0_71, %c0_72], %126 {strides = array<i32>} : memref<4x8x1xf32, #tpu.memory_space<vmem>>, vector<1x8x1xf32>,
      %c0_73 = arith.constant 0 : index
      %c16_74 = arith.constant 16 : index
      %127 = vector.load %arg17[%c0_73, %c16_74] : memref<8x32xf32, #tpu.memory_space<vmem>>, vector<8x8xf32>
      %128 = vector.broadcast %114 : vector<8x1xf32> to vector<8x8xf32>
      %129 = arith.mulf %128, %127 : vector<8x8xf32>
      %130 = arith.truncf %117 : vector<8x8xf32> to vector<8x8xbf16>
      %cst_75 = arith.constant dense<0.000000e+00> : vector<8x8xf32>
      %131 = tpu.matmul %130, %104, %cst_75 {dimension_numbers = #tpu.dot_dimension_numbers<[1], [0], [0], [1], [0, 0, 1, 1], [], []>} : vector<8x8xbf16>, vector<8x8xbf16>, vector<8x8xf32> -> vector<8x8xf32>
      %132 = arith.addf %129, %131 : vector<8x8xf32>
      %c0_76 = arith.constant 0 : index
      %c16_77 = arith.constant 16 : index
      %133 = vector.load %arg17[%c0_76, %c16_77] : memref<8x32xf32, #tpu.memory_space<vmem>>, vector<8x8xf32>
      tpu.vector_store %arg17[%c0_76, %c16_77], %132 {strides = array<i32>} : memref<8x32xf32, #tpu.memory_space<vmem>>, vector<8x8xf32>,
      %c2_78 = arith.constant 2 : index
      %c0_79 = arith.constant 0 : index
      %c0_80 = arith.constant 0 : index
      %134 = vector.load %arg15[%c2_78, %c0_79, %c0_80] : memref<4x8x1xf32, #tpu.memory_space<vmem>>, vector<1x8x1xf32>
      %135 = vector.shape_cast %134 : vector<1x8x1xf32> to vector<8x1xf32>
      %136 = vector.shape_cast %112 : vector<8x1xf32> to vector<1x8x1xf32>
      tpu.vector_store %arg15[%c2_78, %c0_79, %c0_80], %136 {strides = array<i32>} : memref<4x8x1xf32, #tpu.memory_space<vmem>>, vector<1x8x1xf32>,
      %c0_81 = arith.constant 0 : index
      %c24 = arith.constant 24 : index
      %137 = vector.load %arg14[%c0_81, %c24] : memref<8x32xbf16, #tpu.memory_space<vmem>>, vector<8x8xbf16>
      %138 = vector.extract_strided_slice %16 {offsets = [0, 24], sizes = [8, 8], strides = [1, 1]} : vector<8x32xbf16> to vector<8x8xbf16>
      %139 = vector.extract_strided_slice %22 {offsets = [0, 24], sizes = [8, 8], strides = [1, 1]} : vector<8x32xbf16> to vector<8x8xbf16>
      %cst_82 = arith.constant dense<0.000000e+00> : vector<8x8xf32>
      %140 = tpu.matmul %137, %138, %cst_82 {dimension_numbers = #tpu.dot_dimension_numbers<[1], [1], [0], [0], [0, 0, 1, 0], [], []>} : vector<8x8xbf16>, vector<8x8xbf16>, vector<8x8xf32> -> vector<8x8xf32>
      %cst_83 = arith.constant 0xFF800000 : f32
      %141 = vector.broadcast %cst_83 : f32 to vector<8x8xf32>
      %142 = arith.select %31, %140, %141 : vector<8x8xi1>, vector<8x8xf32>
      %c3 = arith.constant 3 : index
      %c0_84 = arith.constant 0 : index
      %c0_85 = arith.constant 0 : index
      %143 = vector.load %arg15[%c3, %c0_84, %c0_85] : memref<4x8x1xf32, #tpu.memory_space<vmem>>, vector<1x8x1xf32>
      %144 = vector.shape_cast %143 : vector<1x8x1xf32> to vector<8x1xf32>
      %cst_86 = arith.constant dense<0xFF800000> : vector<8xf32>
      %145 = vector.multi_reduction <maximumf>, %142, %cst_86 [1] : vector<8x8xf32> to vector<8xf32>
      %146 = vector.shape_cast %145 : vector<8xf32> to vector<8x1xf32>
      %147 = arith.maximumf %144, %146 : vector<8x1xf32>
      %148 = arith.subf %144, %147 : vector<8x1xf32>
      %149 = math.exp %148 : vector<8x1xf32>
      %150 = vector.broadcast %147 : vector<8x1xf32> to vector<8x8xf32>
      %151 = arith.subf %142, %150 : vector<8x8xf32>
      %152 = math.exp %151 : vector<8x8xf32>
      %c3_87 = arith.constant 3 : index
      %c0_88 = arith.constant 0 : index
      %c0_89 = arith.constant 0 : index
      %153 = vector.load %arg16[%c3_87, %c0_88, %c0_89] : memref<4x8x1xf32, #tpu.memory_space<vmem>>, vector<1x8x1xf32>
      %154 = vector.shape_cast %153 : vector<1x8x1xf32> to vector<8x1xf32>
      %155 = arith.mulf %149, %154 : vector<8x1xf32>
      %cst_90 = arith.constant dense<0.000000e+00> : vector<8xf32>
      %156 = vector.multi_reduction <add>, %152, %cst_90 [1] : vector<8x8xf32> to vector<8xf32>
      %157 = vector.shape_cast %156 : vector<8xf32> to vector<8x1xf32>
      %158 = arith.addf %155, %157 : vector<8x1xf32>
      %c3_91 = arith.constant 3 : index
      %c0_92 = arith.constant 0 : index
      %c0_93 = arith.constant 0 : index
      %159 = vector.load %arg16[%c3_91, %c0_92, %c0_93] : memref<4x8x1xf32, #tpu.memory_space<vmem>>, vector<1x8x1xf32>
      %160 = vector.shape_cast %159 : vector<1x8x1xf32> to vector<8x1xf32>
      %161 = vector.shape_cast %158 : vector<8x1xf32> to vector<1x8x1xf32>
      tpu.vector_store %arg16[%c3_91, %c0_92, %c0_93], %161 {strides = array<i32>} : memref<4x8x1xf32, #tpu.memory_space<vmem>>, vector<1x8x1xf32>,
      %c0_94 = arith.constant 0 : index
      %c24_95 = arith.constant 24 : index
      %162 = vector.load %arg17[%c0_94, %c24_95] : memref<8x32xf32, #tpu.memory_space<vmem>>, vector<8x8xf32>
      %163 = vector.broadcast %149 : vector<8x1xf32> to vector<8x8xf32>
      %164 = arith.mulf %163, %162 : vector<8x8xf32>
      %165 = arith.truncf %152 : vector<8x8xf32> to vector<8x8xbf16>
      %cst_96 = arith.constant dense<0.000000e+00> : vector<8x8xf32>
      %166 = tpu.matmul %165, %139, %cst_96 {dimension_numbers = #tpu.dot_dimension_numbers<[1], [0], [0], [1], [0, 0, 1, 1], [], []>} : vector<8x8xbf16>, vector<8x8xbf16>, vector<8x8xf32> -> vector<8x8xf32>
      %167 = arith.addf %164, %166 : vector<8x8xf32>
      %c0_97 = arith.constant 0 : index
      %c24_98 = arith.constant 24 : index
      %168 = vector.load %arg17[%c0_97, %c24_98] : memref<8x32xf32, #tpu.memory_space<vmem>>, vector<8x8xf32>
      tpu.vector_store %arg17[%c0_97, %c24_98], %167 {strides = array<i32>} : memref<8x32xf32, #tpu.memory_space<vmem>>, vector<8x8xf32>,
      %c3_99 = arith.constant 3 : index
      %c0_100 = arith.constant 0 : index
      %c0_101 = arith.constant 0 : index
      %169 = vector.load %arg15[%c3_99, %c0_100, %c0_101] : memref<4x8x1xf32, #tpu.memory_space<vmem>>, vector<1x8x1xf32>
      %170 = vector.shape_cast %169 : vector<1x8x1xf32> to vector<8x1xf32>
      %171 = vector.shape_cast %147 : vector<8x1xf32> to vector<1x8x1xf32>
      tpu.vector_store %arg15[%c3_99, %c0_100, %c0_101], %171 {strides = array<i32>} : memref<4x8x1xf32, #tpu.memory_space<vmem>>, vector<1x8x1xf32>,
    } else {
    }
    %c0_i32_2 = arith.constant 0 : i32
    %6 = arith.cmpi eq, %arg2, %c0_i32_2 : i32
    %7 = arith.extui %6 : i1 to i32
    %c0_i32_3 = arith.constant 0 : i32
    %8 = arith.cmpi ne, %7, %c0_i32_3 : i32
    scf.if %8 {
      %c0 = arith.constant 0 : index
      %c0_4 = arith.constant 0 : index
      %9 = vector.load %arg17[%c0, %c0_4] : memref<8x32xf32, #tpu.memory_space<vmem>>, vector<8x8xf32>
      %c0_5 = arith.constant 0 : index
      %c0_6 = arith.constant 0 : index
      %c0_7 = arith.constant 0 : index
      %10 = vector.load %arg16[%c0_5, %c0_6, %c0_7] : memref<4x8x1xf32, #tpu.memory_space<vmem>>, vector<1x8x1xf32>
      %11 = vector.shape_cast %10 : vector<1x8x1xf32> to vector<8x1xf32>
      %12 = tpu.reciprocal %11 {approx = true} : vector<8x1xf32> -> vector<8x1xf32>
      %13 = vector.broadcast %12 : vector<8x1xf32> to vector<8x8xf32>
      %14 = arith.mulf %9, %13 : vector<8x8xf32>
      %c0_8 = arith.constant 0 : index
      %c0_9 = arith.constant 0 : index
      %15 = vector.load %arg17[%c0_8, %c0_9] : memref<8x32xf32, #tpu.memory_space<vmem>>, vector<8x8xf32>
      tpu.vector_store %arg17[%c0_8, %c0_9], %14 {strides = array<i32>} : memref<8x32xf32, #tpu.memory_space<vmem>>, vector<8x8xf32>,
      %c0_10 = arith.constant 0 : index
      %c8 = arith.constant 8 : index
      %16 = vector.load %arg17[%c0_10, %c8] : memref<8x32xf32, #tpu.memory_space<vmem>>, vector<8x8xf32>
      %c1 = arith.constant 1 : index
      %c0_11 = arith.constant 0 : index
      %c0_12 = arith.constant 0 : index
      %17 = vector.load %arg16[%c1, %c0_11, %c0_12] : memref<4x8x1xf32, #tpu.memory_space<vmem>>, vector<1x8x1xf32>
      %18 = vector.shape_cast %17 : vector<1x8x1xf32> to vector<8x1xf32>
      %19 = tpu.reciprocal %18 {approx = true} : vector<8x1xf32> -> vector<8x1xf32>
      %20 = vector.broadcast %19 : vector<8x1xf32> to vector<8x8xf32>
      %21 = arith.mulf %16, %20 : vector<8x8xf32>
      %c0_13 = arith.constant 0 : index
      %c8_14 = arith.constant 8 : index
      %22 = vector.load %arg17[%c0_13, %c8_14] : memref<8x32xf32, #tpu.memory_space<vmem>>, vector<8x8xf32>
      tpu.vector_store %arg17[%c0_13, %c8_14], %21 {strides = array<i32>} : memref<8x32xf32, #tpu.memory_space<vmem>>, vector<8x8xf32>,
      %c0_15 = arith.constant 0 : index
      %c16 = arith.constant 16 : index
      %23 = vector.load %arg17[%c0_15, %c16] : memref<8x32xf32, #tpu.memory_space<vmem>>, vector<8x8xf32>
      %c2 = arith.constant 2 : index
      %c0_16 = arith.constant 0 : index
      %c0_17 = arith.constant 0 : index
      %24 = vector.load %arg16[%c2, %c0_16, %c0_17] : memref<4x8x1xf32, #tpu.memory_space<vmem>>, vector<1x8x1xf32>
      %25 = vector.shape_cast %24 : vector<1x8x1xf32> to vector<8x1xf32>
      %26 = tpu.reciprocal %25 {approx = true} : vector<8x1xf32> -> vector<8x1xf32>
      %27 = vector.broadcast %26 : vector<8x1xf32> to vector<8x8xf32>
      %28 = arith.mulf %23, %27 : vector<8x8xf32>
      %c0_18 = arith.constant 0 : index
      %c16_19 = arith.constant 16 : index
      %29 = vector.load %arg17[%c0_18, %c16_19] : memref<8x32xf32, #tpu.memory_space<vmem>>, vector<8x8xf32>
      tpu.vector_store %arg17[%c0_18, %c16_19], %28 {strides = array<i32>} : memref<8x32xf32, #tpu.memory_space<vmem>>, vector<8x8xf32>,
      %c0_20 = arith.constant 0 : index
      %c24 = arith.constant 24 : index
      %30 = vector.load %arg17[%c0_20, %c24] : memref<8x32xf32, #tpu.memory_space<vmem>>, vector<8x8xf32>
      %c3 = arith.constant 3 : index
      %c0_21 = arith.constant 0 : index
      %c0_22 = arith.constant 0 : index
      %31 = vector.load %arg16[%c3, %c0_21, %c0_22] : memref<4x8x1xf32, #tpu.memory_space<vmem>>, vector<1x8x1xf32>
      %32 = vector.shape_cast %31 : vector<1x8x1xf32> to vector<8x1xf32>
      %33 = tpu.reciprocal %32 {approx = true} : vector<8x1xf32> -> vector<8x1xf32>
      %34 = vector.broadcast %33 : vector<8x1xf32> to vector<8x8xf32>
      %35 = arith.mulf %30, %34 : vector<8x8xf32>
      %c0_23 = arith.constant 0 : index
      %c24_24 = arith.constant 24 : index
      %36 = vector.load %arg17[%c0_23, %c24_24] : memref<8x32xf32, #tpu.memory_space<vmem>>, vector<8x8xf32>
      tpu.vector_store %arg17[%c0_23, %c24_24], %35 {strides = array<i32>} : memref<8x32xf32, #tpu.memory_space<vmem>>, vector<8x8xf32>,
      %c0_25 = arith.constant 0 : index
      %c0_26 = arith.constant 0 : index
      %37 = vector.load %arg17[%c0_25, %c0_26] : memref<8x32xf32, #tpu.memory_space<vmem>>, vector<8x32xf32>
      %38 = arith.truncf %37 : vector<8x32xf32> to vector<8x32xbf16>
      %c0_27 = arith.constant 0 : index
      %c0_28 = arith.constant 0 : index
      %39 = vector.load %arg11[%c0_27, %c0_28] : memref<32x32xbf16, #tpu.memory_space<vmem>>, vector<32x32xbf16>
      %cst = arith.constant dense<0.000000e+00> : vector<8x32xf32>
      %40 = tpu.matmul %38, %39, %cst {dimension_numbers = #tpu.dot_dimension_numbers<[1], [0], [0], [1], [0, 0, 1, 1], [], []>} : vector<8x32xbf16>, vector<32x32xbf16>, vector<8x32xf32> -> vector<8x32xf32>
      %c0_29 = arith.constant 0 : index
      %c0_30 = arith.constant 0 : index
      %41 = vector.load %arg12[%c0_29, %c0_30] : memref<1x32xf32, #tpu.memory_space<vmem>>, vector<1x32xf32>
      %42 = vector.broadcast %41 : vector<1x32xf32> to vector<8x32xf32>
      %43 = arith.addf %40, %42 : vector<8x32xf32>
      %c0_31 = arith.constant 0 : index
      %c0_32 = arith.constant 0 : index
      %c0_33 = arith.constant 0 : index
      %44 = vector.load %arg13[%c0_31, %c0_32, %c0_33] : memref<1x8x32xf32, #tpu.memory_space<vmem>>, vector<1x8x32xf32>
      %45 = vector.shape_cast %44 : vector<1x8x32xf32> to vector<8x32xf32>
      %46 = vector.shape_cast %43 : vector<8x32xf32> to vector<1x8x32xf32>
      tpu.vector_store %arg13[%c0_31, %c0_32, %c0_33], %46 {strides = array<i32>} : memref<1x8x32xf32, #tpu.memory_space<vmem>>, vector<1x8x32xf32>,
    } else {
    }
    return
  }
  func.func @transform_0(%arg0: i32, %arg1: i32, %arg2: i32) -> (i32, i32, i32) {
    %c0_i32 = arith.constant 0 : i32
    %c0_i32_0 = arith.constant 0 : i32
    return %arg0, %arg1, %c0_i32 : i32, i32, i32
  }
  func.func @transform_1(%arg0: i32, %arg1: i32, %arg2: i32) -> (i32, i32, i32) {
    %c0_i32 = arith.constant 0 : i32
    %c0_i32_0 = arith.constant 0 : i32
    return %arg0, %arg2, %c0_i32 : i32, i32, i32
  }
  func.func @transform_2(%arg0: i32, %arg1: i32, %arg2: i32) -> (i32, i32) {
    %c0_i32 = arith.constant 0 : i32
    %c0_i32_0 = arith.constant 0 : i32
    %c0_i32_1 = arith.constant 0 : i32
    return %c0_i32, %c0_i32_0 : i32, i32
  }
  func.func @transform_3(%arg0: i32, %arg1: i32, %arg2: i32) -> (i32, i32) {
    %c0_i32 = arith.constant 0 : i32
    %c0_i32_0 = arith.constant 0 : i32
    %c0_i32_1 = arith.constant 0 : i32
    return %c0_i32, %c0_i32_0 : i32, i32
  }
  func.func @transform_4(%arg0: i32, %arg1: i32, %arg2: i32) -> (i32, i32) {
    %c0_i32 = arith.constant 0 : i32
    %c0_i32_0 = arith.constant 0 : i32
    %c0_i32_1 = arith.constant 0 : i32
    return %c0_i32, %c0_i32_0 : i32, i32
  }
  func.func @transform_5(%arg0: i32, %arg1: i32, %arg2: i32) -> (i32, i32) {
    %c0_i32 = arith.constant 0 : i32
    %c0_i32_0 = arith.constant 0 : i32
    %c0_i32_1 = arith.constant 0 : i32
    return %c0_i32, %c0_i32_0 : i32, i32
  }
  func.func @transform_6(%arg0: i32, %arg1: i32, %arg2: i32) -> (i32, i32) {
    %c0_i32 = arith.constant 0 : i32
    %c0_i32_0 = arith.constant 0 : i32
    %c0_i32_1 = arith.constant 0 : i32
    return %c0_i32, %c0_i32_0 : i32, i32
  }
  func.func @transform_7(%arg0: i32, %arg1: i32, %arg2: i32) -> (i32, i32) {
    %c0_i32 = arith.constant 0 : i32
    %c0_i32_0 = arith.constant 0 : i32
    %c0_i32_1 = arith.constant 0 : i32
    return %c0_i32, %c0_i32_0 : i32, i32
  }
  func.func @transform_8(%arg0: i32, %arg1: i32, %arg2: i32) -> (i32, i32) {
    %c0_i32 = arith.constant 0 : i32
    %c0_i32_0 = arith.constant 0 : i32
    %c0_i32_1 = arith.constant 0 : i32
    return %c0_i32, %c0_i32_0 : i32, i32
  }
  func.func @transform_9(%arg0: i32, %arg1: i32, %arg2: i32) -> (i32, i32) {
    %c0_i32 = arith.constant 0 : i32
    %c0_i32_0 = arith.constant 0 : i32
    %c0_i32_1 = arith.constant 0 : i32
    return %c0_i32, %c0_i32_0 : i32, i32
  }
  func.func @transform_10(%arg0: i32, %arg1: i32, %arg2: i32) -> (i32, i32, i32) {
    %c0_i32 = arith.constant 0 : i32
    %c0_i32_0 = arith.constant 0 : i32
    return %arg0, %arg1, %c0_i32 : i32, i32, i32
  }
}

module attributes {stable_mosaic.version = 11 : i64} {
  func.func @_mha_flash_kernel(%arg0: i32, %arg1: i32, %arg2: i32, %arg3: memref<1x8x32xbf16, #tpu.memory_space<vmem>>, %arg4: memref<1x8x32xbf16, #tpu.memory_space<vmem>>, %arg5: memref<32x32xbf16, #tpu.memory_space<vmem>>, %arg6: memref<1x32xf32, #tpu.memory_space<vmem>>, %arg7: memref<32x32xbf16, #tpu.memory_space<vmem>>, %arg8: memref<1x32xf32, #tpu.memory_space<vmem>>, %arg9: memref<32x32xbf16, #tpu.memory_space<vmem>>, %arg10: memref<1x32xf32, #tpu.memory_space<vmem>>, %arg11: memref<32x32xbf16, #tpu.memory_space<vmem>>, %arg12: memref<1x32xf32, #tpu.memory_space<vmem>>, %arg13: memref<1x8x32xf32, #tpu.memory_space<vmem>>, %arg14: memref<8x32xbf16, #tpu.memory_space<vmem>>, %arg15: memref<4x8x1xf32, #tpu.memory_space<vmem>>, %arg16: memref<4x8x1xf32, #tpu.memory_space<vmem>>, %arg17: memref<8x32xf32, #tpu.memory_space<vmem>>) attributes {dimension_semantics = [#tpu.dimension_semantics<parallel>, #tpu.dimension_semantics<parallel>, #tpu.dimension_semantics<arbitrary>], iteration_bounds = array<i64: 2, 1, 1>, scalar_prefetch = 0 : i64, scratch_operands = 4 : i64, tpu.core_type = #tpu.core_type<tc>, window_params = [{transform_indices = @transform_0, window_bounds = array<i64: 1, 8, 32>}, {transform_indices = @transform_1, window_bounds = array<i64: 1, 8, 32>}, {pipeline_mode = #tpu.pipeline_mode<synchronous>, transform_indices = @transform_2, window_bounds = array<i64: 32, 32>}, {pipeline_mode = #tpu.pipeline_mode<synchronous>, transform_indices = @transform_3, window_bounds = array<i64: 1, 32>}, {pipeline_mode = #tpu.pipeline_mode<synchronous>, transform_indices = @transform_4, window_bounds = array<i64: 32, 32>}, {pipeline_mode = #tpu.pipeline_mode<synchronous>, transform_indices = @transform_5, window_bounds = array<i64: 1, 32>}, {pipeline_mode = #tpu.pipeline_mode<synchronous>, transform_indices = @transform_6, window_bounds = array<i64: 32, 32>}, {pipeline_mode = #tpu.pipeline_mode<synchronous>, transform_indices = @transform_7, window_bounds = array<i64: 1, 32>}, {pipeline_mode = #tpu.pipeline_mode<synchronous>, transform_indices = @transform_8, window_bounds = array<i64: 32, 32>}, {pipeline_mode = #tpu.pipeline_mode<synchronous>, transform_indices = @transform_9, window_bounds = array<i64: 1, 32>}, {transform_indices = @transform_10, window_bounds = array<i64: 1, 8, 32>}]} {
    %c0_i32 = arith.constant 0 : i32
    %0 = arith.cmpi eq, %arg2, %c0_i32 : i32
    %1 = arith.extui %0 : i1 to i32
    %c0_i32_0 = arith.constant 0 : i32
    %2 = arith.cmpi ne, %1, %c0_i32_0 : i32
    scf.if %2 {
      %c0 = arith.constant 0 : index
      %c0_4 = arith.constant 0 : index
      %c0_5 = arith.constant 0 : index
      %9 = vector.load %arg3[%c0, %c0_4, %c0_5] : memref<1x8x32xbf16, #tpu.memory_space<vmem>>, vector<1x8x32xbf16>
      %10 = vector.shape_cast %9 : vector<1x8x32xbf16> to vector<8x32xbf16>
      %c0_6 = arith.constant 0 : index
      %c0_7 = arith.constant 0 : index
      %11 = vector.load %arg5[%c0_6, %c0_7] : memref<32x32xbf16, #tpu.memory_space<vmem>>, vector<32x32xbf16>
      %cst = arith.constant dense<0.000000e+00> : vector<8x32xf32>
      %12 = tpu.matmul %10, %11, %cst {dimension_numbers = #tpu.dot_dimension_numbers<[1], [0], [0], [1], [0, 0, 1, 1], [], []>} : vector<8x32xbf16>, vector<32x32xbf16>, vector<8x32xf32> -> vector<8x32xf32>
      %c0_8 = arith.constant 0 : index
      %c0_9 = arith.constant 0 : index
      %13 = vector.load %arg6[%c0_8, %c0_9] : memref<1x32xf32, #tpu.memory_space<vmem>>, vector<1x32xf32>
      %14 = vector.broadcast %13 : vector<1x32xf32> to vector<8x32xf32>
      %15 = arith.addf %12, %14 : vector<8x32xf32>
      %cst_10 = arith.constant 0.353553385 : f32
      %16 = vector.broadcast %cst_10 : f32 to vector<8x32xf32>
      %17 = arith.mulf %15, %16 : vector<8x32xf32>
      %18 = arith.truncf %17 : vector<8x32xf32> to vector<8x32xbf16>
      %c0_11 = arith.constant 0 : index
      %c0_12 = arith.constant 0 : index
      %19 = vector.load %arg14[%c0_11, %c0_12] : memref<8x32xbf16, #tpu.memory_space<vmem>>, vector<8x32xbf16>
      tpu.vector_store %arg14[%c0_11, %c0_12], %18 {strides = array<i32>} : memref<8x32xbf16, #tpu.memory_space<vmem>>, vector<8x32xbf16>,
      %cst_13 = arith.constant 0xFF800000 : f32
      %20 = vector.broadcast %cst_13 : f32 to vector<4x8x1xf32>
      %c0_14 = arith.constant 0 : index
      %c0_15 = arith.constant 0 : index
      %c0_16 = arith.constant 0 : index
      %21 = vector.load %arg15[%c0_14, %c0_15, %c0_16] : memref<4x8x1xf32, #tpu.memory_space<vmem>>, vector<4x8x1xf32>
      tpu.vector_store %arg15[%c0_14, %c0_15, %c0_16], %20 {strides = array<i32>} : memref<4x8x1xf32, #tpu.memory_space<vmem>>, vector<4x8x1xf32>,
      %cst_17 = arith.constant 0.000000e+00 : f32
      %22 = vector.broadcast %cst_17 : f32 to vector<4x8x1xf32>
      %c0_18 = arith.constant 0 : index
      %c0_19 = arith.constant 0 : index
      %c0_20 = arith.constant 0 : index
      %23 = vector.load %arg16[%c0_18, %c0_19, %c0_20] : memref<4x8x1xf32, #tpu.memory_space<vmem>>, vector<4x8x1xf32>
      tpu.vector_store %arg16[%c0_18, %c0_19, %c0_20], %22 {strides = array<i32>} : memref<4x8x1xf32, #tpu.memory_space<vmem>>, vector<4x8x1xf32>,
      %cst_21 = arith.constant 0.000000e+00 : f32
      %24 = vector.broadcast %cst_21 : f32 to vector<8x32xf32>
      %c0_22 = arith.constant 0 : index
      %c0_23 = arith.constant 0 : index
      %25 = vector.load %arg17[%c0_22, %c0_23] : memref<8x32xf32, #tpu.memory_space<vmem>>, vector<8x32xf32>
      tpu.vector_store %arg17[%c0_22, %c0_23], %24 {strides = array<i32>} : memref<8x32xf32, #tpu.memory_space<vmem>>, vector<8x32xf32>,
    } else {
    }
    %3 = arith.cmpi sle, %arg2, %arg1 : i32
    %4 = arith.extui %3 : i1 to i32
    %c0_i32_1 = arith.constant 0 : i32
    %5 = arith.cmpi ne, %4, %c0_i32_1 : i32
    scf.if %5 {
      %c0 = arith.constant 0 : index
      %c0_4 = arith.constant 0 : index
      %c0_5 = arith.constant 0 : index
      %9 = vector.load %arg4[%c0, %c0_4, %c0_5] : memref<1x8x32xbf16, #tpu.memory_space<vmem>>, vector<1x8x32xbf16>
      %10 = vector.shape_cast %9 : vector<1x8x32xbf16> to vector<8x32xbf16>
      %c0_6 = arith.constant 0 : index
      %c0_7 = arith.constant 0 : index
      %11 = vector.load %arg7[%c0_6, %c0_7] : memref<32x32xbf16, #tpu.memory_space<vmem>>, vector<32x32xbf16>
      %cst = arith.constant dense<0.000000e+00> : vector<8x32xf32>
      %12 = tpu.matmul %10, %11, %cst {dimension_numbers = #tpu.dot_dimension_numbers<[1], [0], [0], [1], [0, 0, 1, 1], [], []>} : vector<8x32xbf16>, vector<32x32xbf16>, vector<8x32xf32> -> vector<8x32xf32>
      %c0_8 = arith.constant 0 : index
      %c0_9 = arith.constant 0 : index
      %13 = vector.load %arg8[%c0_8, %c0_9] : memref<1x32xf32, #tpu.memory_space<vmem>>, vector<1x32xf32>
      %14 = vector.broadcast %13 : vector<1x32xf32> to vector<8x32xf32>
      %15 = arith.addf %12, %14 : vector<8x32xf32>
      %16 = arith.truncf %15 : vector<8x32xf32> to vector<8x32xbf16>
      %c0_10 = arith.constant 0 : index
      %c0_11 = arith.constant 0 : index
      %17 = vector.load %arg9[%c0_10, %c0_11] : memref<32x32xbf16, #tpu.memory_space<vmem>>, vector<32x32xbf16>
      %cst_12 = arith.constant dense<0.000000e+00> : vector<8x32xf32>
      %18 = tpu.matmul %10, %17, %cst_12 {dimension_numbers = #tpu.dot_dimension_numbers<[1], [0], [0], [1], [0, 0, 1, 1], [], []>} : vector<8x32xbf16>, vector<32x32xbf16>, vector<8x32xf32> -> vector<8x32xf32>
      %c0_13 = arith.constant 0 : index
      %c0_14 = arith.constant 0 : index
      %19 = vector.load %arg10[%c0_13, %c0_14] : memref<1x32xf32, #tpu.memory_space<vmem>>, vector<1x32xf32>
      %20 = vector.broadcast %19 : vector<1x32xf32> to vector<8x32xf32>
      %21 = arith.addf %18, %20 : vector<8x32xf32>
      %22 = arith.truncf %21 : vector<8x32xf32> to vector<8x32xbf16>
      %c8_i32 = arith.constant 8 : i32
      %23 = arith.muli %arg1, %c8_i32 : i32
      %24 = tpu.iota {dimensions = array<i32: 0>} : vector<8x8xi32>
      %25 = vector.broadcast %23 : i32 to vector<8x8xi32>
      %26 = arith.addi %25, %24 : vector<8x8xi32>
      %c8_i32_15 = arith.constant 8 : i32
      %27 = arith.muli %arg2, %c8_i32_15 : i32
      %28 = tpu.iota {dimensions = array<i32: 1>} : vector<8x8xi32>
      %29 = vector.broadcast %27 : i32 to vector<8x8xi32>
      %30 = arith.addi %29, %28 : vector<8x8xi32>
      %31 = arith.cmpi sle, %30, %26 : vector<8x8xi32>
      %c0_16 = arith.constant 0 : index
      %c0_17 = arith.constant 0 : index
      %32 = vector.load %arg14[%c0_16, %c0_17] : memref<8x32xbf16, #tpu.memory_space<vmem>>, vector<8x8xbf16>
      %33 = vector.extract_strided_slice %16 {offsets = [0, 0], sizes = [8, 8], strides = [1, 1]} : vector<8x32xbf16> to vector<8x8xbf16>
      %34 = vector.extract_strided_slice %22 {offsets = [0, 0], sizes = [8, 8], strides = [1, 1]} : vector<8x32xbf16> to vector<8x8xbf16>
      %cst_18 = arith.constant dense<0.000000e+00> : vector<8x8xf32>
      %35 = tpu.matmul %32, %33, %cst_18 {dimension_numbers = #tpu.dot_dimension_numbers<[1], [1], [0], [0], [0, 0, 1, 0], [], []>} : vector<8x8xbf16>, vector<8x8xbf16>, vector<8x8xf32> -> vector<8x8xf32>
      %cst_19 = arith.constant 0xFF800000 : f32
      %36 = vector.broadcast %cst_19 : f32 to vector<8x8xf32>
      %37 = arith.select %31, %35, %36 : vector<8x8xi1>, vector<8x8xf32>
      %c0_20 = arith.constant 0 : index
      %c0_21 = arith.constant 0 : index
      %c0_22 = arith.constant 0 : index
      %38 = vector.load %arg15[%c0_20, %c0_21, %c0_22] : memref<4x8x1xf32, #tpu.memory_space<vmem>>, vector<1x8x1xf32>
      %39 = vector.shape_cast %38 : vector<1x8x1xf32> to vector<8x1xf32>
      %cst_23 = arith.constant dense<0xFF800000> : vector<8xf32>
      %40 = vector.multi_reduction <maximumf>, %37, %cst_23 [1] : vector<8x8xf32> to vector<8xf32>
      %41 = vector.shape_cast %40 : vector<8xf32> to vector<8x1xf32>
      %42 = arith.maximumf %39, %41 : vector<8x1xf32>
      %43 = arith.subf %39, %42 : vector<8x1xf32>
      %44 = math.exp %43 : vector<8x1xf32>
      %45 = vector.broadcast %42 : vector<8x1xf32> to vector<8x8xf32>
      %46 = arith.subf %37, %45 : vector<8x8xf32>
      %47 = math.exp %46 : vector<8x8xf32>
      %c0_24 = arith.constant 0 : index
      %c0_25 = arith.constant 0 : index
      %c0_26 = arith.constant 0 : index
      %48 = vector.load %arg16[%c0_24, %c0_25, %c0_26] : memref<4x8x1xf32, #tpu.memory_space<vmem>>, vector<1x8x1xf32>
      %49 = vector.shape_cast %48 : vector<1x8x1xf32> to vector<8x1xf32>
      %50 = arith.mulf %44, %49 : vector<8x1xf32>
      %cst_27 = arith.constant dense<0.000000e+00> : vector<8xf32>
      %51 = vector.multi_reduction <add>, %47, %cst_27 [1] : vector<8x8xf32> to vector<8xf32>
      %52 = vector.shape_cast %51 : vector<8xf32> to vector<8x1xf32>
      %53 = arith.addf %50, %52 : vector<8x1xf32>
      %c0_28 = arith.constant 0 : index
      %c0_29 = arith.constant 0 : index
      %c0_30 = arith.constant 0 : index
      %54 = vector.load %arg16[%c0_28, %c0_29, %c0_30] : memref<4x8x1xf32, #tpu.memory_space<vmem>>, vector<1x8x1xf32>
      %55 = vector.shape_cast %54 : vector<1x8x1xf32> to vector<8x1xf32>
      %56 = vector.shape_cast %53 : vector<8x1xf32> to vector<1x8x1xf32>
      tpu.vector_store %arg16[%c0_28, %c0_29, %c0_30], %56 {strides = array<i32>} : memref<4x8x1xf32, #tpu.memory_space<vmem>>, vector<1x8x1xf32>,
      %c0_31 = arith.constant 0 : index
      %c0_32 = arith.constant 0 : index
      %57 = vector.load %arg17[%c0_31, %c0_32] : memref<8x32xf32, #tpu.memory_space<vmem>>, vector<8x8xf32>
      %58 = vector.broadcast %44 : vector<8x1xf32> to vector<8x8xf32>
      %59 = arith.mulf %58, %57 : vector<8x8xf32>
      %60 = arith.truncf %47 : vector<8x8xf32> to vector<8x8xbf16>
      %cst_33 = arith.constant dense<0.000000e+00> : vector<8x8xf32>
      %61 = tpu.matmul %60, %34, %cst_33 {dimension_numbers = #tpu.dot_dimension_numbers<[1], [0], [0], [1], [0, 0, 1, 1], [], []>} : vector<8x8xbf16>, vector<8x8xbf16>, vector<8x8xf32> -> vector<8x8xf32>
      %62 = arith.addf %59, %61 : vector<8x8xf32>
      %c0_34 = arith.constant 0 : index
      %c0_35 = arith.constant 0 : index
      %63 = vector.load %arg17[%c0_34, %c0_35] : memref<8x32xf32, #tpu.memory_space<vmem>>, vector<8x8xf32>
      tpu.vector_store %arg17[%c0_34, %c0_35], %62 {strides = array<i32>} : memref<8x32xf32, #tpu.memory_space<vmem>>, vector<8x8xf32>,
      %c0_36 = arith.constant 0 : index
      %c0_37 = arith.constant 0 : index
      %c0_38 = arith.constant 0 : index
      %64 = vector.load %arg15[%c0_36, %c0_37, %c0_38] : memref<4x8x1xf32, #tpu.memory_space<vmem>>, vector<1x8x1xf32>
      %65 = vector.shape_cast %64 : vector<1x8x1xf32> to vector<8x1xf32>
      %66 = vector.shape_cast %42 : vector<8x1xf32> to vector<1x8x1xf32>
      tpu.vector_store %arg15[%c0_36, %c0_37, %c0_38], %66 {strides = array<i32>} : memref<4x8x1xf32, #tpu.memory_space<vmem>>, vector<1x8x1xf32>,
      %c0_39 = arith.constant 0 : index
      %c8 = arith.constant 8 : index
      %67 = vector.load %arg14[%c0_39, %c8] : memref<8x32xbf16, #tpu.memory_space<vmem>>, vector<8x8xbf16>
      %68 = vector.extract_strided_slice %16 {offsets = [0, 8], sizes = [8, 8], strides = [1, 1]} : vector<8x32xbf16> to vector<8x8xbf16>
      %69 = vector.extract_strided_slice %22 {offsets = [0, 8], sizes = [8, 8], strides = [1, 1]} : vector<8x32xbf16> to vector<8x8xbf16>
      %cst_40 = arith.constant dense<0.000000e+00> : vector<8x8xf32>
      %70 = tpu.matmul %67, %68, %cst_40 {dimension_numbers = #tpu.dot_dimension_numbers<[1], [1], [0], [0], [0, 0, 1, 0], [], []>} : vector<8x8xbf16>, vector<8x8xbf16>, vector<8x8xf32> -> vector<8x8xf32>
      %cst_41 = arith.constant 0xFF800000 : f32
      %71 = vector.broadcast %cst_41 : f32 to vector<8x8xf32>
      %72 = arith.select %31, %70, %71 : vector<8x8xi1>, vector<8x8xf32>
      %c1 = arith.constant 1 : index
      %c0_42 = arith.constant 0 : index
      %c0_43 = arith.constant 0 : index
      %73 = vector.load %arg15[%c1, %c0_42, %c0_43] : memref<4x8x1xf32, #tpu.memory_space<vmem>>, vector<1x8x1xf32>
      %74 = vector.shape_cast %73 : vector<1x8x1xf32> to vector<8x1xf32>
      %cst_44 = arith.constant dense<0xFF800000> : vector<8xf32>
      %75 = vector.multi_reduction <maximumf>, %72, %cst_44 [1] : vector<8x8xf32> to vector<8xf32>
      %76 = vector.shape_cast %75 : vector<8xf32> to vector<8x1xf32>
      %77 = arith.maximumf %74, %76 : vector<8x1xf32>
      %78 = arith.subf %74, %77 : vector<8x1xf32>
      %79 = math.exp %78 : vector<8x1xf32>
      %80 = vector.broadcast %77 : vector<8x1xf32> to vector<8x8xf32>
      %81 = arith.subf %72, %80 : vector<8x8xf32>
      %82 = math.exp %81 : vector<8x8xf32>
      %c1_45 = arith.constant 1 : index
      %c0_46 = arith.constant 0 : index
      %c0_47 = arith.constant 0 : index
      %83 = vector.load %arg16[%c1_45, %c0_46, %c0_47] : memref<4x8x1xf32, #tpu.memory_space<vmem>>, vector<1x8x1xf32>
      %84 = vector.shape_cast %83 : vector<1x8x1xf32> to vector<8x1xf32>
      %85 = arith.mulf %79, %84 : vector<8x1xf32>
      %cst_48 = arith.constant dense<0.000000e+00> : vector<8xf32>
      %86 = vector.multi_reduction <add>, %82, %cst_48 [1] : vector<8x8xf32> to vector<8xf32>
      %87 = vector.shape_cast %86 : vector<8xf32> to vector<8x1xf32>
      %88 = arith.addf %85, %87 : vector<8x1xf32>
      %c1_49 = arith.constant 1 : index
      %c0_50 = arith.constant 0 : index
      %c0_51 = arith.constant 0 : index
      %89 = vector.load %arg16[%c1_49, %c0_50, %c0_51] : memref<4x8x1xf32, #tpu.memory_space<vmem>>, vector<1x8x1xf32>
      %90 = vector.shape_cast %89 : vector<1x8x1xf32> to vector<8x1xf32>
      %91 = vector.shape_cast %88 : vector<8x1xf32> to vector<1x8x1xf32>
      tpu.vector_store %arg16[%c1_49, %c0_50, %c0_51], %91 {strides = array<i32>} : memref<4x8x1xf32, #tpu.memory_space<vmem>>, vector<1x8x1xf32>,
      %c0_52 = arith.constant 0 : index
      %c8_53 = arith.constant 8 : index
      %92 = vector.load %arg17[%c0_52, %c8_53] : memref<8x32xf32, #tpu.memory_space<vmem>>, vector<8x8xf32>
      %93 = vector.broadcast %79 : vector<8x1xf32> to vector<8x8xf32>
      %94 = arith.mulf %93, %92 : vector<8x8xf32>
      %95 = arith.truncf %82 : vector<8x8xf32> to vector<8x8xbf16>
      %cst_54 = arith.constant dense<0.000000e+00> : vector<8x8xf32>
      %96 = tpu.matmul %95, %69, %cst_54 {dimension_numbers = #tpu.dot_dimension_numbers<[1], [0], [0], [1], [0, 0, 1, 1], [], []>} : vector<8x8xbf16>, vector<8x8xbf16>, vector<8x8xf32> -> vector<8x8xf32>
      %97 = arith.addf %94, %96 : vector<8x8xf32>
      %c0_55 = arith.constant 0 : index
      %c8_56 = arith.constant 8 : index
      %98 = vector.load %arg17[%c0_55, %c8_56] : memref<8x32xf32, #tpu.memory_space<vmem>>, vector<8x8xf32>
      tpu.vector_store %arg17[%c0_55, %c8_56], %97 {strides = array<i32>} : memref<8x32xf32, #tpu.memory_space<vmem>>, vector<8x8xf32>,
      %c1_57 = arith.constant 1 : index
      %c0_58 = arith.constant 0 : index
      %c0_59 = arith.constant 0 : index
      %99 = vector.load %arg15[%c1_57, %c0_58, %c0_59] : memref<4x8x1xf32, #tpu.memory_space<vmem>>, vector<1x8x1xf32>
      %100 = vector.shape_cast %99 : vector<1x8x1xf32> to vector<8x1xf32>
      %101 = vector.shape_cast %77 : vector<8x1xf32> to vector<1x8x1xf32>
      tpu.vector_store %arg15[%c1_57, %c0_58, %c0_59], %101 {strides = array<i32>} : memref<4x8x1xf32, #tpu.memory_space<vmem>>, vector<1x8x1xf32>,
      %c0_60 = arith.constant 0 : index
      %c16 = arith.constant 16 : index
      %102 = vector.load %arg14[%c0_60, %c16] : memref<8x32xbf16, #tpu.memory_space<vmem>>, vector<8x8xbf16>
      %103 = vector.extract_strided_slice %16 {offsets = [0, 16], sizes = [8, 8], strides = [1, 1]} : vector<8x32xbf16> to vector<8x8xbf16>
      %104 = vector.extract_strided_slice %22 {offsets = [0, 16], sizes = [8, 8], strides = [1, 1]} : vector<8x32xbf16> to vector<8x8xbf16>
      %cst_61 = arith.constant dense<0.000000e+00> : vector<8x8xf32>
      %105 = tpu.matmul %102, %103, %cst_61 {dimension_numbers = #tpu.dot_dimension_numbers<[1], [1], [0], [0], [0, 0, 1, 0], [], []>} : vector<8x8xbf16>, vector<8x8xbf16>, vector<8x8xf32> -> vector<8x8xf32>
      %cst_62 = arith.constant 0xFF800000 : f32
      %106 = vector.broadcast %cst_62 : f32 to vector<8x8xf32>
      %107 = arith.select %31, %105, %106 : vector<8x8xi1>, vector<8x8xf32>
      %c2 = arith.constant 2 : index
      %c0_63 = arith.constant 0 : index
      %c0_64 = arith.constant 0 : index
      %108 = vector.load %arg15[%c2, %c0_63, %c0_64] : memref<4x8x1xf32, #tpu.memory_space<vmem>>, vector<1x8x1xf32>
      %109 = vector.shape_cast %108 : vector<1x8x1xf32> to vector<8x1xf32>
      %cst_65 = arith.constant dense<0xFF800000> : vector<8xf32>
      %110 = vector.multi_reduction <maximumf>, %107, %cst_65 [1] : vector<8x8xf32> to vector<8xf32>
      %111 = vector.shape_cast %110 : vector<8xf32> to vector<8x1xf32>
      %112 = arith.maximumf %109, %111 : vector<8x1xf32>
      %113 = arith.subf %109, %112 : vector<8x1xf32>
      %114 = math.exp %113 : vector<8x1xf32>
      %115 = vector.broadcast %112 : vector<8x1xf32> to vector<8x8xf32>
      %116 = arith.subf %107, %115 : vector<8x8xf32>
      %117 = math.exp %116 : vector<8x8xf32>
      %c2_66 = arith.constant 2 : index
      %c0_67 = arith.constant 0 : index
      %c0_68 = arith.constant 0 : index
      %118 = vector.load %arg16[%c2_66, %c0_67, %c0_68] : memref<4x8x1xf32, #tpu.memory_space<vmem>>, vector<1x8x1xf32>
      %119 = vector.shape_cast %118 : vector<1x8x1xf32> to vector<8x1xf32>
      %120 = arith.mulf %114, %119 : vector<8x1xf32>
      %cst_69 = arith.constant dense<0.000000e+00> : vector<8xf32>
      %121 = vector.multi_reduction <add>, %117, %cst_69 [1] : vector<8x8xf32> to vector<8xf32>
      %122 = vector.shape_cast %121 : vector<8xf32> to vector<8x1xf32>
      %123 = arith.addf %120, %122 : vector<8x1xf32>
      %c2_70 = arith.constant 2 : index
      %c0_71 = arith.constant 0 : index
      %c0_72 = arith.constant 0 : index
      %124 = vector.load %arg16[%c2_70, %c0_71, %c0_72] : memref<4x8x1xf32, #tpu.memory_space<vmem>>, vector<1x8x1xf32>
      %125 = vector.shape_cast %124 : vector<1x8x1xf32> to vector<8x1xf32>
      %126 = vector.shape_cast %123 : vector<8x1xf32> to vector<1x8x1xf32>
      tpu.vector_store %arg16[%c2_70, %c0_71, %c0_72], %126 {strides = array<i32>} : memref<4x8x1xf32, #tpu.memory_space<vmem>>, vector<1x8x1xf32>,
      %c0_73 = arith.constant 0 : index
      %c16_74 = arith.constant 16 : index
      %127 = vector.load %arg17[%c0_73, %c16_74] : memref<8x32xf32, #tpu.memory_space<vmem>>, vector<8x8xf32>
      %128 = vector.broadcast %114 : vector<8x1xf32> to vector<8x8xf32>
      %129 = arith.mulf %128, %127 : vector<8x8xf32>
      %130 = arith.truncf %117 : vector<8x8xf32> to vector<8x8xbf16>
      %cst_75 = arith.constant dense<0.000000e+00> : vector<8x8xf32>
      %131 = tpu.matmul %130, %104, %cst_75 {dimension_numbers = #tpu.dot_dimension_numbers<[1], [0], [0], [1], [0, 0, 1, 1], [], []>} : vector<8x8xbf16>, vector<8x8xbf16>, vector<8x8xf32> -> vector<8x8xf32>
      %132 = arith.addf %129, %131 : vector<8x8xf32>
      %c0_76 = arith.constant 0 : index
      %c16_77 = arith.constant 16 : index
      %133 = vector.load %arg17[%c0_76, %c16_77] : memref<8x32xf32, #tpu.memory_space<vmem>>, vector<8x8xf32>
      tpu.vector_store %arg17[%c0_76, %c16_77], %132 {strides = array<i32>} : memref<8x32xf32, #tpu.memory_space<vmem>>, vector<8x8xf32>,
      %c2_78 = arith.constant 2 : index
      %c0_79 = arith.constant 0 : index
      %c0_80 = arith.constant 0 : index
      %134 = vector.load %arg15[%c2_78, %c0_79, %c0_80] : memref<4x8x1xf32, #tpu.memory_space<vmem>>, vector<1x8x1xf32>
      %135 = vector.shape_cast %134 : vector<1x8x1xf32> to vector<8x1xf32>
      %136 = vector.shape_cast %112 : vector<8x1xf32> to vector<1x8x1xf32>
      tpu.vector_store %arg15[%c2_78, %c0_79, %c0_80], %136 {strides = array<i32>} : memref<4x8x1xf32, #tpu.memory_space<vmem>>, vector<1x8x1xf32>,
      %c0_81 = arith.constant 0 : index
      %c24 = arith.constant 24 : index
      %137 = vector.load %arg14[%c0_81, %c24] : memref<8x32xbf16, #tpu.memory_space<vmem>>, vector<8x8xbf16>
      %138 = vector.extract_strided_slice %16 {offsets = [0, 24], sizes = [8, 8], strides = [1, 1]} : vector<8x32xbf16> to vector<8x8xbf16>
      %139 = vector.extract_strided_slice %22 {offsets = [0, 24], sizes = [8, 8], strides = [1, 1]} : vector<8x32xbf16> to vector<8x8xbf16>
      %cst_82 = arith.constant dense<0.000000e+00> : vector<8x8xf32>
      %140 = tpu.matmul %137, %138, %cst_82 {dimension_numbers = #tpu.dot_dimension_numbers<[1], [1], [0], [0], [0, 0, 1, 0], [], []>} : vector<8x8xbf16>, vector<8x8xbf16>, vector<8x8xf32> -> vector<8x8xf32>
      %cst_83 = arith.constant 0xFF800000 : f32
      %141 = vector.broadcast %cst_83 : f32 to vector<8x8xf32>
      %142 = arith.select %31, %140, %141 : vector<8x8xi1>, vector<8x8xf32>
      %c3 = arith.constant 3 : index
      %c0_84 = arith.constant 0 : index
      %c0_85 = arith.constant 0 : index
      %143 = vector.load %arg15[%c3, %c0_84, %c0_85] : memref<4x8x1xf32, #tpu.memory_space<vmem>>, vector<1x8x1xf32>
      %144 = vector.shape_cast %143 : vector<1x8x1xf32> to vector<8x1xf32>
      %cst_86 = arith.constant dense<0xFF800000> : vector<8xf32>
      %145 = vector.multi_reduction <maximumf>, %142, %cst_86 [1] : vector<8x8xf32> to vector<8xf32>
      %146 = vector.shape_cast %145 : vector<8xf32> to vector<8x1xf32>
      %147 = arith.maximumf %144, %146 : vector<8x1xf32>
      %148 = arith.subf %144, %147 : vector<8x1xf32>
      %149 = math.exp %148 : vector<8x1xf32>
      %150 = vector.broadcast %147 : vector<8x1xf32> to vector<8x8xf32>
      %151 = arith.subf %142, %150 : vector<8x8xf32>
      %152 = math.exp %151 : vector<8x8xf32>
      %c3_87 = arith.constant 3 : index
      %c0_88 = arith.constant 0 : index
      %c0_89 = arith.constant 0 : index
      %153 = vector.load %arg16[%c3_87, %c0_88, %c0_89] : memref<4x8x1xf32, #tpu.memory_space<vmem>>, vector<1x8x1xf32>
      %154 = vector.shape_cast %153 : vector<1x8x1xf32> to vector<8x1xf32>
      %155 = arith.mulf %149, %154 : vector<8x1xf32>
      %cst_90 = arith.constant dense<0.000000e+00> : vector<8xf32>
      %156 = vector.multi_reduction <add>, %152, %cst_90 [1] : vector<8x8xf32> to vector<8xf32>
      %157 = vector.shape_cast %156 : vector<8xf32> to vector<8x1xf32>
      %158 = arith.addf %155, %157 : vector<8x1xf32>
      %c3_91 = arith.constant 3 : index
      %c0_92 = arith.constant 0 : index
      %c0_93 = arith.constant 0 : index
      %159 = vector.load %arg16[%c3_91, %c0_92, %c0_93] : memref<4x8x1xf32, #tpu.memory_space<vmem>>, vector<1x8x1xf32>
      %160 = vector.shape_cast %159 : vector<1x8x1xf32> to vector<8x1xf32>
      %161 = vector.shape_cast %158 : vector<8x1xf32> to vector<1x8x1xf32>
      tpu.vector_store %arg16[%c3_91, %c0_92, %c0_93], %161 {strides = array<i32>} : memref<4x8x1xf32, #tpu.memory_space<vmem>>, vector<1x8x1xf32>,
      %c0_94 = arith.constant 0 : index
      %c24_95 = arith.constant 24 : index
      %162 = vector.load %arg17[%c0_94, %c24_95] : memref<8x32xf32, #tpu.memory_space<vmem>>, vector<8x8xf32>
      %163 = vector.broadcast %149 : vector<8x1xf32> to vector<8x8xf32>
      %164 = arith.mulf %163, %162 : vector<8x8xf32>
      %165 = arith.truncf %152 : vector<8x8xf32> to vector<8x8xbf16>
      %cst_96 = arith.constant dense<0.000000e+00> : vector<8x8xf32>
      %166 = tpu.matmul %165, %139, %cst_96 {dimension_numbers = #tpu.dot_dimension_numbers<[1], [0], [0], [1], [0, 0, 1, 1], [], []>} : vector<8x8xbf16>, vector<8x8xbf16>, vector<8x8xf32> -> vector<8x8xf32>
      %167 = arith.addf %164, %166 : vector<8x8xf32>
      %c0_97 = arith.constant 0 : index
      %c24_98 = arith.constant 24 : index
      %168 = vector.load %arg17[%c0_97, %c24_98] : memref<8x32xf32, #tpu.memory_space<vmem>>, vector<8x8xf32>
      tpu.vector_store %arg17[%c0_97, %c24_98], %167 {strides = array<i32>} : memref<8x32xf32, #tpu.memory_space<vmem>>, vector<8x8xf32>,
      %c3_99 = arith.constant 3 : index
      %c0_100 = arith.constant 0 : index
      %c0_101 = arith.constant 0 : index
      %169 = vector.load %arg15[%c3_99, %c0_100, %c0_101] : memref<4x8x1xf32, #tpu.memory_space<vmem>>, vector<1x8x1xf32>
      %170 = vector.shape_cast %169 : vector<1x8x1xf32> to vector<8x1xf32>
      %171 = vector.shape_cast %147 : vector<8x1xf32> to vector<1x8x1xf32>
      tpu.vector_store %arg15[%c3_99, %c0_100, %c0_101], %171 {strides = array<i32>} : memref<4x8x1xf32, #tpu.memory_space<vmem>>, vector<1x8x1xf32>,
    } else {
    }
    %c0_i32_2 = arith.constant 0 : i32
    %6 = arith.cmpi eq, %arg2, %c0_i32_2 : i32
    %7 = arith.extui %6 : i1 to i32
    %c0_i32_3 = arith.constant 0 : i32
    %8 = arith.cmpi ne, %7, %c0_i32_3 : i32
    scf.if %8 {
      %c0 = arith.constant 0 : index
      %c0_4 = arith.constant 0 : index
      %9 = vector.load %arg17[%c0, %c0_4] : memref<8x32xf32, #tpu.memory_space<vmem>>, vector<8x8xf32>
      %c0_5 = arith.constant 0 : index
      %c0_6 = arith.constant 0 : index
      %c0_7 = arith.constant 0 : index
      %10 = vector.load %arg16[%c0_5, %c0_6, %c0_7] : memref<4x8x1xf32, #tpu.memory_space<vmem>>, vector<1x8x1xf32>
      %11 = vector.shape_cast %10 : vector<1x8x1xf32> to vector<8x1xf32>
      %12 = tpu.reciprocal %11 {approx = true} : vector<8x1xf32> -> vector<8x1xf32>
      %13 = vector.broadcast %12 : vector<8x1xf32> to vector<8x8xf32>
      %14 = arith.mulf %9, %13 : vector<8x8xf32>
      %c0_8 = arith.constant 0 : index
      %c0_9 = arith.constant 0 : index
      %15 = vector.load %arg17[%c0_8, %c0_9] : memref<8x32xf32, #tpu.memory_space<vmem>>, vector<8x8xf32>
      tpu.vector_store %arg17[%c0_8, %c0_9], %14 {strides = array<i32>} : memref<8x32xf32, #tpu.memory_space<vmem>>, vector<8x8xf32>,
      %c0_10 = arith.constant 0 : index
      %c8 = arith.constant 8 : index
      %16 = vector.load %arg17[%c0_10, %c8] : memref<8x32xf32, #tpu.memory_space<vmem>>, vector<8x8xf32>
      %c1 = arith.constant 1 : index
      %c0_11 = arith.constant 0 : index
      %c0_12 = arith.constant 0 : index
      %17 = vector.load %arg16[%c1, %c0_11, %c0_12] : memref<4x8x1xf32, #tpu.memory_space<vmem>>, vector<1x8x1xf32>
      %18 = vector.shape_cast %17 : vector<1x8x1xf32> to vector<8x1xf32>
      %19 = tpu.reciprocal %18 {approx = true} : vector<8x1xf32> -> vector<8x1xf32>
      %20 = vector.broadcast %19 : vector<8x1xf32> to vector<8x8xf32>
      %21 = arith.mulf %16, %20 : vector<8x8xf32>
      %c0_13 = arith.constant 0 : index
      %c8_14 = arith.constant 8 : index
      %22 = vector.load %arg17[%c0_13, %c8_14] : memref<8x32xf32, #tpu.memory_space<vmem>>, vector<8x8xf32>
      tpu.vector_store %arg17[%c0_13, %c8_14], %21 {strides = array<i32>} : memref<8x32xf32, #tpu.memory_space<vmem>>, vector<8x8xf32>,
      %c0_15 = arith.constant 0 : index
      %c16 = arith.constant 16 : index
      %23 = vector.load %arg17[%c0_15, %c16] : memref<8x32xf32, #tpu.memory_space<vmem>>, vector<8x8xf32>
      %c2 = arith.constant 2 : index
      %c0_16 = arith.constant 0 : index
      %c0_17 = arith.constant 0 : index
      %24 = vector.load %arg16[%c2, %c0_16, %c0_17] : memref<4x8x1xf32, #tpu.memory_space<vmem>>, vector<1x8x1xf32>
      %25 = vector.shape_cast %24 : vector<1x8x1xf32> to vector<8x1xf32>
      %26 = tpu.reciprocal %25 {approx = true} : vector<8x1xf32> -> vector<8x1xf32>
      %27 = vector.broadcast %26 : vector<8x1xf32> to vector<8x8xf32>
      %28 = arith.mulf %23, %27 : vector<8x8xf32>
      %c0_18 = arith.constant 0 : index
      %c16_19 = arith.constant 16 : index
      %29 = vector.load %arg17[%c0_18, %c16_19] : memref<8x32xf32, #tpu.memory_space<vmem>>, vector<8x8xf32>
      tpu.vector_store %arg17[%c0_18, %c16_19], %28 {strides = array<i32>} : memref<8x32xf32, #tpu.memory_space<vmem>>, vector<8x8xf32>,
      %c0_20 = arith.constant 0 : index
      %c24 = arith.constant 24 : index
      %30 = vector.load %arg17[%c0_20, %c24] : memref<8x32xf32, #tpu.memory_space<vmem>>, vector<8x8xf32>
      %c3 = arith.constant 3 : index
      %c0_21 = arith.constant 0 : index
      %c0_22 = arith.constant 0 : index
      %31 = vector.load %arg16[%c3, %c0_21, %c0_22] : memref<4x8x1xf32, #tpu.memory_space<vmem>>, vector<1x8x1xf32>
      %32 = vector.shape_cast %31 : vector<1x8x1xf32> to vector<8x1xf32>
      %33 = tpu.reciprocal %32 {approx = true} : vector<8x1xf32> -> vector<8x1xf32>
      %34 = vector.broadcast %33 : vector<8x1xf32> to vector<8x8xf32>
      %35 = arith.mulf %30, %34 : vector<8x8xf32>
      %c0_23 = arith.constant 0 : index
      %c24_24 = arith.constant 24 : index
      %36 = vector.load %arg17[%c0_23, %c24_24] : memref<8x32xf32, #tpu.memory_space<vmem>>, vector<8x8xf32>
      tpu.vector_store %arg17[%c0_23, %c24_24], %35 {strides = array<i32>} : memref<8x32xf32, #tpu.memory_space<vmem>>, vector<8x8xf32>,
      %c0_25 = arith.constant 0 : index
      %c0_26 = arith.constant 0 : index
      %37 = vector.load %arg17[%c0_25, %c0_26] : memref<8x32xf32, #tpu.memory_space<vmem>>, vector<8x32xf32>
      %38 = arith.truncf %37 : vector<8x32xf32> to vector<8x32xbf16>
      %c0_27 = arith.constant 0 : index
      %c0_28 = arith.constant 0 : index
      %39 = vector.load %arg11[%c0_27, %c0_28] : memref<32x32xbf16, #tpu.memory_space<vmem>>, vector<32x32xbf16>
      %cst = arith.constant dense<0.000000e+00> : vector<8x32xf32>
      %40 = tpu.matmul %38, %39, %cst {dimension_numbers = #tpu.dot_dimension_numbers<[1], [0], [0], [1], [0, 0, 1, 1], [], []>} : vector<8x32xbf16>, vector<32x32xbf16>, vector<8x32xf32> -> vector<8x32xf32>
      %c0_29 = arith.constant 0 : index
      %c0_30 = arith.constant 0 : index
      %41 = vector.load %arg12[%c0_29, %c0_30] : memref<1x32xf32, #tpu.memory_space<vmem>>, vector<1x32xf32>
      %42 = vector.broadcast %41 : vector<1x32xf32> to vector<8x32xf32>
      %43 = arith.addf %40, %42 : vector<8x32xf32>
      %c0_31 = arith.constant 0 : index
      %c0_32 = arith.constant 0 : index
      %c0_33 = arith.constant 0 : index
      %44 = vector.load %arg13[%c0_31, %c0_32, %c0_33] : memref<1x8x32xf32, #tpu.memory_space<vmem>>, vector<1x8x32xf32>
      %45 = vector.shape_cast %44 : vector<1x8x32xf32> to vector<8x32xf32>
      %46 = vector.shape_cast %43 : vector<8x32xf32> to vector<1x8x32xf32>
      tpu.vector_store %arg13[%c0_31, %c0_32, %c0_33], %46 {strides = array<i32>} : memref<1x8x32xf32, #tpu.memory_space<vmem>>, vector<1x8x32xf32>,
    } else {
    }
    return
  }
  func.func @transform_0(%arg0: i32, %arg1: i32, %arg2: i32) -> (i32, i32, i32) {
    %c0_i32 = arith.constant 0 : i32
    %c0_i32_0 = arith.constant 0 : i32
    return %arg0, %arg1, %c0_i32 : i32, i32, i32
  }
  func.func @transform_1(%arg0: i32, %arg1: i32, %arg2: i32) -> (i32, i32, i32) {
    %c0_i32 = arith.constant 0 : i32
    %c0_i32_0 = arith.constant 0 : i32
    return %arg0, %arg2, %c0_i32 : i32, i32, i32
  }
  func.func @transform_2(%arg0: i32, %arg1: i32, %arg2: i32) -> (i32, i32) {
    %c0_i32 = arith.constant 0 : i32
    %c0_i32_0 = arith.constant 0 : i32
    %c0_i32_1 = arith.constant 0 : i32
    return %c0_i32, %c0_i32_0 : i32, i32
  }
  func.func @transform_3(%arg0: i32, %arg1: i32, %arg2: i32) -> (i32, i32) {
    %c0_i32 = arith.constant 0 : i32
    %c0_i32_0 = arith.constant 0 : i32
    %c0_i32_1 = arith.constant 0 : i32
    return %c0_i32, %c0_i32_0 : i32, i32
  }
  func.func @transform_4(%arg0: i32, %arg1: i32, %arg2: i32) -> (i32, i32) {
    %c0_i32 = arith.constant 0 : i32
    %c0_i32_0 = arith.constant 0 : i32
    %c0_i32_1 = arith.constant 0 : i32
    return %c0_i32, %c0_i32_0 : i32, i32
  }
  func.func @transform_5(%arg0: i32, %arg1: i32, %arg2: i32) -> (i32, i32) {
    %c0_i32 = arith.constant 0 : i32
    %c0_i32_0 = arith.constant 0 : i32
    %c0_i32_1 = arith.constant 0 : i32
    return %c0_i32, %c0_i32_0 : i32, i32
  }
  func.func @transform_6(%arg0: i32, %arg1: i32, %arg2: i32) -> (i32, i32) {
    %c0_i32 = arith.constant 0 : i32
    %c0_i32_0 = arith.constant 0 : i32
    %c0_i32_1 = arith.constant 0 : i32
    return %c0_i32, %c0_i32_0 : i32, i32
  }
  func.func @transform_7(%arg0: i32, %arg1: i32, %arg2: i32) -> (i32, i32) {
    %c0_i32 = arith.constant 0 : i32
    %c0_i32_0 = arith.constant 0 : i32
    %c0_i32_1 = arith.constant 0 : i32
    return %c0_i32, %c0_i32_0 : i32, i32
  }
  func.func @transform_8(%arg0: i32, %arg1: i32, %arg2: i32) -> (i32, i32) {
    %c0_i32 = arith.constant 0 : i32
    %c0_i32_0 = arith.constant 0 : i32
    %c0_i32_1 = arith.constant 0 : i32
    return %c0_i32, %c0_i32_0 : i32, i32
  }
  func.func @transform_9(%arg0: i32, %arg1: i32, %arg2: i32) -> (i32, i32) {
    %c0_i32 = arith.constant 0 : i32
    %c0_i32_0 = arith.constant 0 : i32
    %c0_i32_1 = arith.constant 0 : i32
    return %c0_i32, %c0_i32_0 : i32, i32
  }
  func.func @transform_10(%arg0: i32, %arg1: i32, %arg2: i32) -> (i32, i32, i32) {
    %c0_i32 = arith.constant 0 : i32
    %c0_i32_0 = arith.constant 0 : i32
    return %arg0, %arg1, %c0_i32 : i32, i32, i32
  }
}

</mosaic_0001>

<llo_original>
// kernel: tpu_custom_call.1
$region0: #{tpu_custom_call.1}
  #allocation0 [shape = 'u32[]', space=smem, size = 0x4, offset = 0x4, fixed_abs, tag = 'smem constant byte address 0x4 - core index']
  #allocation1 [shape = 'u32[144,128]{1,0:T(1,128)}', space=vmem, size = 0x12000, scoped, tag = 'internal scratch']
  #allocation2 [shape = 'bf16[8,32]{1,0:T(8,128)(2,1)}', space=vmem, size = 0x800, scoped, tag = 'scratch operand']
  #allocation3 [shape = 'f32[4,8,1]{2,1,0:T(8,128)}', space=vmem, size = 0x4000, scoped, tag = 'scratch operand']
  #allocation4 [shape = 'f32[4,8,1]{2,1,0:T(8,128)}', space=vmem, size = 0x4000, scoped, tag = 'scratch operand']
  #allocation5 [shape = 'f32[8,32]{1,0:T(8,128)}', space=vmem, size = 0x1000, scoped, tag = 'scratch operand']
  %s0 = inlined_call_operand.hbm [shape: bf16[2,8,32], index: 0, kind: input, shape index: {}]
  %s1 = inlined_call_operand.hbm [shape: bf16[2,8,32], index: 1, kind: input, shape index: {}]
  %s2 = inlined_call_operand.hbm [shape: bf16[32,32], index: 2, kind: input, shape index: {}]
  %s3 = inlined_call_operand.hbm [shape: f32[1,32], index: 3, kind: input, shape index: {}]
  %s4 = inlined_call_operand.hbm [shape: bf16[32,32], index: 4, kind: input, shape index: {}]
  %s5 = inlined_call_operand.hbm [shape: f32[1,32], index: 5, kind: input, shape index: {}]
  %s6 = inlined_call_operand.hbm [shape: bf16[32,32], index: 6, kind: input, shape index: {}]
  %s7 = inlined_call_operand.hbm [shape: f32[1,32], index: 7, kind: input, shape index: {}]
  %s8 = inlined_call_operand.hbm [shape: bf16[32,32], index: 8, kind: input, shape index: {}]
  %s9 = inlined_call_operand.hbm [shape: f32[1,32], index: 9, kind: input, shape index: {}]
  %s10 = inlined_call_operand.hbm [shape: f32[2,8,32], index: 10, kind: output, shape index: {}]
  %s11 = sld [smem:[#allocation0]]
  $region125: #{tpu_custom_call.1} parent=0
    _
  %s13 = ssub.s32 1, %s11
  %s14 = scalar_select 0, %s13, %s11
  $region1: #{tpu_custom_call.1} parent=0
    #allocation6 [shape = 'u8[4096]{0}', space=vmem, size = 0x1000, scoped, tag = 'input window, operand 0']
    #allocation7 [shape = 's32[2]{0}', space=sflag, size = 0x8, scoped, tag = 'scoped memory for tpu_custom_call.1']
    #allocation8 [shape = 's32[2]{0}', space=sflag, size = 0x8, scoped, tag = 'scoped memory for tpu_custom_call.1']
    #allocation9 [shape = 'u8[4096]{0}', space=vmem, size = 0x1000, scoped, tag = 'input window, operand 1']
    #allocation10 [shape = 's32[2]{0}', space=sflag, size = 0x8, scoped, tag = 'scoped memory for tpu_custom_call.1']
    #allocation11 [shape = 'u8[8192]{0}', space=vmem, size = 0x2000, scoped, tag = 'input window, operand 2, single buffered']
    #allocation12 [shape = 'u8[512]{0}', space=vmem, size = 0x400, scoped, tag = 'input window, operand 3, single buffered']
    #allocation13 [shape = 's32[1]{0}', space=sflag, size = 0x4, scoped, tag = 'scoped memory for tpu_custom_call.1']
    #allocation14 [shape = 'u8[8192]{0}', space=vmem, size = 0x2000, scoped, tag = 'input window, operand 4, single buffered']
    #allocation15 [shape = 'u8[512]{0}', space=vmem, size = 0x400, scoped, tag = 'input window, operand 5, single buffered']
    #allocation16 [shape = 's32[1]{0}', space=sflag, size = 0x4, scoped, tag = 'scoped memory for tpu_custom_call.1']
    #allocation17 [shape = 'u8[8192]{0}', space=vmem, size = 0x2000, scoped, tag = 'input window, operand 6, single buffered']
    #allocation18 [shape = 'u8[512]{0}', space=vmem, size = 0x400, scoped, tag = 'input window, operand 7, single buffered']
    #allocation19 [shape = 's32[1]{0}', space=sflag, size = 0x4, scoped, tag = 'scoped memory for tpu_custom_call.1']
    #allocation20 [shape = 'u8[8192]{0}', space=vmem, size = 0x2000, scoped, tag = 'input window, operand 8, single buffered']
    #allocation21 [shape = 'u8[512]{0}', space=vmem, size = 0x400, scoped, tag = 'input window, operand 9, single buffered']
    #allocation22 [shape = 's32[1]{0}', space=sflag, size = 0x4, scoped, tag = 'scoped memory for tpu_custom_call.1']
    #allocation23 [shape = 'u8[8192]{0}', space=vmem, size = 0x2000, scoped, tag = 'output window, operand 0']
    %15 = vsyncpa [#allocation7], 0
    %s16 = scalar_lea.sflag [#allocation7], 1
    %17 = vsyncpa %s16, 0
    %18 = vsyncpa [#allocation10], 0
    %s19 = scalar_lea.sflag [#allocation10], 1
    %20 = vsyncpa %s19, 0
    %21 = vsyncpa [#allocation13], 0
    %22 = vsyncpa [#allocation16], 0
    %23 = vsyncpa [#allocation19], 0
    %24 = vsyncpa [#allocation22], 0
    %25 = vsyncpa [#allocation8], 0
    %s26 = scalar_lea.sflag [#allocation8], 1
    %27 = vsyncpa %s26, 0
    loop: start=0, step=1, limit=4
    $region2: #{tpu_custom_call.1} parent=1 // loop_pre_header
      _
    $region3: #{tpu_custom_call.1} parent=1 // loop_header
      %s29 = sphi 0, %s33
      %p30 = scmp.ge.s32.totalorder %s29, 4
      %s36 = sphi 0, %s55
      %s37 = sphi 0, %s51
      %s38 = sphi 0, %s47
      %s39 = sphi 0, %s36
      %s40 = sphi 0, %s37
      %s41 = sphi 0, %s38
      %s42 = sphi 0, %s39
      %s43 = sphi 0, %s40
      %s44 = sphi 0, %s41
      %s60 = sphi 0, %s62
      %s63 = sphi 0, %s60
      %s64 = sphi 0, %s63
      %s80 = sphi 0, %s64
      %s88 = sphi 0, %s90
      %s91 = sphi 0, %s88
      %s92 = sphi 0, %s91
      %s108 = sphi 0, %s92
      %s112 = sphi 0, %s112
      %s114 = sphi 0, %s112
      %s115 = sphi 0, %s114
      %s129 = sphi 0, %s115
      %s133 = sphi 0, %s133
      %s135 = sphi 0, %s133
      %s136 = sphi 0, %s135
      %s150 = sphi 0, %s136
      %s154 = sphi 0, %s154
      %s156 = sphi 0, %s154
      %s157 = sphi 0, %s156
      %s171 = sphi 0, %s157
      %s175 = sphi 0, %s175
      %s177 = sphi 0, %s175
      %s178 = sphi 0, %s177
      %s192 = sphi 0, %s178
      %s196 = sphi 0, %s196
      %s198 = sphi 0, %s196
      %s199 = sphi 0, %s198
      %s213 = sphi 0, %s199
      %s217 = sphi 0, %s217
      %s219 = sphi 0, %s217
      %s220 = sphi 0, %s219
      %s234 = sphi 0, %s220
      %s238 = sphi 0, %s238
      %s240 = sphi 0, %s238
      %s241 = sphi 0, %s240
      %s255 = sphi 0, %s241
      %s259 = sphi 0, %s259
      %s261 = sphi 0, %s259
      %s262 = sphi 0, %s261
      %s276 = sphi 0, %s262
      %s284 = sphi 0, %s286
      %s287 = sphi 0, %s284
      %s288 = sphi 0, %s287
      %s304 = sphi 0, %s288
    $region4: #{tpu_custom_call.1} parent=1 // loop_header_branch
      %32 = sbr.rel (%p30) target = $region8
    $region5: #{tpu_custom_call.1} parent=1 // loop_body
      %s34 = ssub.s32 %s29, 1
      %s35 = ssub.s32 %s29, 2
      %s45 = sadd.s32 1, %s38
      %p46 = scmp.ge.s32.totalorder %s45, 1
      %s47 = scalar_select %p46, 0, %s45
      %s48 = sadd.s32 1, %s37
      %s49 = scalar_select %p46, %s48, %s37
      %p50 = scmp.ge.s32.totalorder %s49, 1
      %s51 = scalar_select %p50, 0, %s49
      %s52 = sadd.s32 1, %s36
      %s53 = scalar_select %p50, %s52, %s36
      %p54 = scmp.ge.s32.totalorder %s53, 2
      %s55 = scalar_select %p54, 0, %s53
      %s56 = ssub.s32 %s36, %s55
      %s57 = ssub.s32 %s37, %s51
      %s58 = sor.u32 %s56, %s57
      %p59 = scmp.eq.s32.totalorder %s58, 0
      %s61 = sadd.s32 %s60, 1
      %s62 = scalar_select %p59, %s60, %s61
      %p65 = pneg %p59
      %p66 = scmp.eq.s32.totalorder %s29, 1
      %p67 = por %p65, %p66
      %p68 = scmp.ne.s32.totalorder %s60, %s63
      %p69 = scmp.eq.s32.totalorder %s29, 0
      %p70 = por %p68, %p69
      %p71 = scmp.ne.s32.totalorder %s60, %s63
      %p72 = scmp.eq.s32.totalorder %s34, 1
      %p73 = por %p71, %p72
      %p74 = scmp.ne.s32.totalorder %s63, %s64
      %p75 = scmp.eq.s32.totalorder %s34, 0
      %p76 = por %p74, %p75
      %p77 = scmp.ne.s32.totalorder %s63, %s64
      %p78 = scmp.eq.s32.totalorder %s35, 1
      %p79 = por %p77, %p78
      %p81 = scmp.ne.s32.totalorder %s64, %s80
      %p82 = scmp.eq.s32.totalorder %s35, 0
      %p83 = por %p81, %p82
      %s84 = ssub.s32 %s36, %s55
      %s85 = ssub.s32 %s38, %s47
      %s86 = sor.u32 %s84, %s85
      %p87 = scmp.eq.s32.totalorder %s86, 0
      %s89 = sadd.s32 %s88, 1
      %s90 = scalar_select %p87, %s88, %s89
      %p93 = pneg %p87
      %p94 = scmp.eq.s32.totalorder %s29, 1
      %p95 = por %p93, %p94
      %p96 = scmp.ne.s32.totalorder %s88, %s91
      %p97 = scmp.eq.s32.totalorder %s29, 0
      %p98 = por %p96, %p97
      %p99 = scmp.ne.s32.totalorder %s88, %s91
      %p100 = scmp.eq.s32.totalorder %s34, 1
      %p101 = por %p99, %p100
      %p102 = scmp.ne.s32.totalorder %s91, %s92
      %p103 = scmp.eq.s32.totalorder %s34, 0
      %p104 = por %p102, %p103
      %p105 = scmp.ne.s32.totalorder %s91, %s92
      %p106 = scmp.eq.s32.totalorder %s35, 1
      %p107 = por %p105, %p106
      %p109 = scmp.ne.s32.totalorder %s92, %s108
      %p110 = scmp.eq.s32.totalorder %s35, 0
      %p111 = por %p109, %p110
      %s113 = sadd.s32 %s112, 1
      %p116 = scmp.eq.s32.totalorder %s29, 1
      %p117 = scmp.ne.s32.totalorder %s112, %s114
      %p118 = scmp.eq.s32.totalorder %s29, 0
      %p119 = por %p117, %p118
      %p120 = scmp.ne.s32.totalorder %s112, %s114
      %p121 = scmp.eq.s32.totalorder %s34, 1
      %p122 = por %p120, %p121
      %p123 = scmp.ne.s32.totalorder %s114, %s115
      %p124 = scmp.eq.s32.totalorder %s34, 0
      %p125 = por %p123, %p124
      %p126 = scmp.ne.s32.totalorder %s114, %s115
      %p127 = scmp.eq.s32.totalorder %s35, 1
      %p128 = por %p126, %p127
      %p130 = scmp.ne.s32.totalorder %s115, %s129
      %p131 = scmp.eq.s32.totalorder %s35, 0
      %p132 = por %p130, %p131
      %s134 = sadd.s32 %s133, 1
      %p137 = scmp.eq.s32.totalorder %s29, 1
      %p138 = scmp.ne.s32.totalorder %s133, %s135
      %p139 = scmp.eq.s32.totalorder %s29, 0
      %p140 = por %p138, %p139
      %p141 = scmp.ne.s32.totalorder %s133, %s135
      %p142 = scmp.eq.s32.totalorder %s34, 1
      %p143 = por %p141, %p142
      %p144 = scmp.ne.s32.totalorder %s135, %s136
      %p145 = scmp.eq.s32.totalorder %s34, 0
      %p146 = por %p144, %p145
      %p147 = scmp.ne.s32.totalorder %s135, %s136
      %p148 = scmp.eq.s32.totalorder %s35, 1
      %p149 = por %p147, %p148
      %p151 = scmp.ne.s32.totalorder %s136, %s150
      %p152 = scmp.eq.s32.totalorder %s35, 0
      %p153 = por %p151, %p152
      %s155 = sadd.s32 %s154, 1
      %p158 = scmp.eq.s32.totalorder %s29, 1
      %p159 = scmp.ne.s32.totalorder %s154, %s156
      %p160 = scmp.eq.s32.totalorder %s29, 0
      %p161 = por %p159, %p160
      %p162 = scmp.ne.s32.totalorder %s154, %s156
      %p163 = scmp.eq.s32.totalorder %s34, 1
      %p164 = por %p162, %p163
      %p165 = scmp.ne.s32.totalorder %s156, %s157
      %p166 = scmp.eq.s32.totalorder %s34, 0
      %p167 = por %p165, %p166
      %p168 = scmp.ne.s32.totalorder %s156, %s157
      %p169 = scmp.eq.s32.totalorder %s35, 1
      %p170 = por %p168, %p169
      %p172 = scmp.ne.s32.totalorder %s157, %s171
      %p173 = scmp.eq.s32.totalorder %s35, 0
      %p174 = por %p172, %p173
      %s176 = sadd.s32 %s175, 1
      %p179 = scmp.eq.s32.totalorder %s29, 1
      %p180 = scmp.ne.s32.totalorder %s175, %s177
      %p181 = scmp.eq.s32.totalorder %s29, 0
      %p182 = por %p180, %p181
      %p183 = scmp.ne.s32.totalorder %s175, %s177
      %p184 = scmp.eq.s32.totalorder %s34, 1
      %p185 = por %p183, %p184
      %p186 = scmp.ne.s32.totalorder %s177, %s178
      %p187 = scmp.eq.s32.totalorder %s34, 0
      %p188 = por %p186, %p187
      %p189 = scmp.ne.s32.totalorder %s177, %s178
      %p190 = scmp.eq.s32.totalorder %s35, 1
      %p191 = por %p189, %p190
      %p193 = scmp.ne.s32.totalorder %s178, %s192
      %p194 = scmp.eq.s32.totalorder %s35, 0
      %p195 = por %p193, %p194
      %s197 = sadd.s32 %s196, 1
      %p200 = scmp.eq.s32.totalorder %s29, 1
      %p201 = scmp.ne.s32.totalorder %s196, %s198
      %p202 = scmp.eq.s32.totalorder %s29, 0
      %p203 = por %p201, %p202
      %p204 = scmp.ne.s32.totalorder %s196, %s198
      %p205 = scmp.eq.s32.totalorder %s34, 1
      %p206 = por %p204, %p205
      %p207 = scmp.ne.s32.totalorder %s198, %s199
      %p208 = scmp.eq.s32.totalorder %s34, 0
      %p209 = por %p207, %p208
      %p210 = scmp.ne.s32.totalorder %s198, %s199
      %p211 = scmp.eq.s32.totalorder %s35, 1
      %p212 = por %p210, %p211
      %p214 = scmp.ne.s32.totalorder %s199, %s213
      %p215 = scmp.eq.s32.totalorder %s35, 0
      %p216 = por %p214, %p215
      %s218 = sadd.s32 %s217, 1
      %p221 = scmp.eq.s32.totalorder %s29, 1
      %p222 = scmp.ne.s32.totalorder %s217, %s219
      %p223 = scmp.eq.s32.totalorder %s29, 0
      %p224 = por %p222, %p223
      %p225 = scmp.ne.s32.totalorder %s217, %s219
      %p226 = scmp.eq.s32.totalorder %s34, 1
      %p227 = por %p225, %p226
      %p228 = scmp.ne.s32.totalorder %s219, %s220
      %p229 = scmp.eq.s32.totalorder %s34, 0
      %p230 = por %p228, %p229
      %p231 = scmp.ne.s32.totalorder %s219, %s220
      %p232 = scmp.eq.s32.totalorder %s35, 1
      %p233 = por %p231, %p232
      %p235 = scmp.ne.s32.totalorder %s220, %s234
      %p236 = scmp.eq.s32.totalorder %s35, 0
      %p237 = por %p235, %p236
      %s239 = sadd.s32 %s238, 1
      %p242 = scmp.eq.s32.totalorder %s29, 1
      %p243 = scmp.ne.s32.totalorder %s238, %s240
      %p244 = scmp.eq.s32.totalorder %s29, 0
      %p245 = por %p243, %p244
      %p246 = scmp.ne.s32.totalorder %s238, %s240
      %p247 = scmp.eq.s32.totalorder %s34, 1
      %p248 = por %p246, %p247
      %p249 = scmp.ne.s32.totalorder %s240, %s241
      %p250 = scmp.eq.s32.totalorder %s34, 0
      %p251 = por %p249, %p250
      %p252 = scmp.ne.s32.totalorder %s240, %s241
      %p253 = scmp.eq.s32.totalorder %s35, 1
      %p254 = por %p252, %p253
      %p256 = scmp.ne.s32.totalorder %s241, %s255
      %p257 = scmp.eq.s32.totalorder %s35, 0
      %p258 = por %p256, %p257
      %s260 = sadd.s32 %s259, 1
      %p263 = scmp.eq.s32.totalorder %s29, 1
      %p264 = scmp.ne.s32.totalorder %s259, %s261
      %p265 = scmp.eq.s32.totalorder %s29, 0
      %p266 = por %p264, %p265
      %p267 = scmp.ne.s32.totalorder %s259, %s261
      %p268 = scmp.eq.s32.totalorder %s34, 1
      %p269 = por %p267, %p268
      %p270 = scmp.ne.s32.totalorder %s261, %s262
      %p271 = scmp.eq.s32.totalorder %s34, 0
      %p272 = por %p270, %p271
      %p273 = scmp.ne.s32.totalorder %s261, %s262
      %p274 = scmp.eq.s32.totalorder %s35, 1
      %p275 = por %p273, %p274
      %p277 = scmp.ne.s32.totalorder %s262, %s276
      %p278 = scmp.eq.s32.totalorder %s35, 0
      %p279 = por %p277, %p278
      %s280 = ssub.s32 %s36, %s55
      %s281 = ssub.s32 %s37, %s51
      %s282 = sor.u32 %s280, %s281
      %p283 = scmp.eq.s32.totalorder %s282, 0
      %s285 = sadd.s32 %s284, 1
      %s286 = scalar_select %p283, %s284, %s285
      %p289 = pneg %p283
      %p290 = scmp.eq.s32.totalorder %s29, 1
      %p291 = por %p289, %p290
      %p292 = scmp.ne.s32.totalorder %s284, %s287
      %p293 = scmp.eq.s32.totalorder %s29, 0
      %p294 = por %p292, %p293
      %p295 = scmp.ne.s32.totalorder %s284, %s287
      %p296 = scmp.eq.s32.totalorder %s34, 1
      %p297 = por %p295, %p296
      %p298 = scmp.ne.s32.totalorder %s287, %s288
      %p299 = scmp.eq.s32.totalorder %s34, 0
      %p300 = por %p298, %p299
      %p301 = scmp.ne.s32.totalorder %s287, %s288
      %p302 = scmp.eq.s32.totalorder %s35, 1
      %p303 = por %p301, %p302
      %p305 = scmp.ne.s32.totalorder %s288, %s304
      %p306 = scmp.eq.s32.totalorder %s35, 0
      %p307 = por %p305, %p306
      %p308 = scmp.le.s32.totalorder 1, %s29
      %p309 = scmp.lt.s32.totalorder %s29, 3
      %p310 = pnand %p308, %p309
      %p311 = pneg %p310
      // Predicated region
      $region9: #{tpu_custom_call.1} parent=5 // pred_check
        _
      $region10: #{tpu_custom_call.1} parent=5 // pred_check_branch
        %313 = sbr.rel (%p310) target = $region12
      $region11: #{tpu_custom_call.1} parent=5 // pred_region
        %s314 = ssub.s32 %s29, 1
        // Predicated region
        $region13: #{tpu_custom_call.1} parent=11 // pred_check
          %p315 = pneg %p125
        $region14: #{tpu_custom_call.1} parent=11 // pred_check_branch
          %317 = sbr.rel (%p315) target = $region16
        $region15: #{tpu_custom_call.1} parent=11 // pred_region
          %s319 = ssub.s32 256, 256
          %320 = vsyncadd [#allocation10], %s319
          %s321 = sshll.u32 [#allocation11], 4
          %s322 = int_to_ptr.vmem [resolvable:$true] %s321
          %327 = dma.hbm_to_vmem [thread:$0]  %s2, 256, %s322, [#allocation10], 64, 64, 4
        $region16: #{tpu_custom_call.1} parent=11 // pred_fallthru
          _
        // Predicated region
        $region17: #{tpu_custom_call.1} parent=11 // pred_check
          %p328 = pneg %p146
        $region18: #{tpu_custom_call.1} parent=11 // pred_check_branch
          %330 = sbr.rel (%p328) target = $region20
        $region19: #{tpu_custom_call.1} parent=11 // pred_region
          %s332 = ssub.s32 16, 16
          %333 = vsyncadd [#allocation13], %s332
          %s335 = sshll.u32 [#allocation12], 4
          %s336 = int_to_ptr.vmem [resolvable:$true] %s335
          %338 = dma.hbm_to_vmem [thread:$0]  %s3, 16, %s336, [#allocation13]
        $region20: #{tpu_custom_call.1} parent=11 // pred_fallthru
          _
        // Predicated region
        $region21: #{tpu_custom_call.1} parent=11 // pred_check
          %p339 = pneg %p167
        $region22: #{tpu_custom_call.1} parent=11 // pred_check_branch
          %341 = sbr.rel (%p339) target = $region24
        $region23: #{tpu_custom_call.1} parent=11 // pred_region
          %s343 = ssub.s32 256, 256
          %344 = vsyncadd [#allocation13], %s343
          %s345 = sshll.u32 [#allocation14], 4
          %s346 = int_to_ptr.vmem [resolvable:$true] %s345
          %351 = dma.hbm_to_vmem [thread:$0]  %s4, 256, %s346, [#allocation13], 64, 64, 4
        $region24: #{tpu_custom_call.1} parent=11 // pred_fallthru
          _
        // Predicated region
        $region25: #{tpu_custom_call.1} parent=11 // pred_check
          %p352 = pneg %p188
        $region26: #{tpu_custom_call.1} parent=11 // pred_check_branch
          %354 = sbr.rel (%p352) target = $region28
        $region27: #{tpu_custom_call.1} parent=11 // pred_region
          %s356 = ssub.s32 16, 16
          %357 = vsyncadd [#allocation16], %s356
          %s359 = sshll.u32 [#allocation15], 4
          %s360 = int_to_ptr.vmem [resolvable:$true] %s359
          %362 = dma.hbm_to_vmem [thread:$0]  %s5, 16, %s360, [#allocation16]
        $region28: #{tpu_custom_call.1} parent=11 // pred_fallthru
          _
        // Predicated region
        $region29: #{tpu_custom_call.1} parent=11 // pred_check
          %p363 = pneg %p209
        $region30: #{tpu_custom_call.1} parent=11 // pred_check_branch
          %365 = sbr.rel (%p363) target = $region32
        $region31: #{tpu_custom_call.1} parent=11 // pred_region
          %s367 = ssub.s32 256, 256
          %368 = vsyncadd [#allocation16], %s367
          %s369 = sshll.u32 [#allocation17], 4
          %s370 = int_to_ptr.vmem [resolvable:$true] %s369
          %375 = dma.hbm_to_vmem [thread:$0]  %s6, 256, %s370, [#allocation16], 64, 64, 4
        $region32: #{tpu_custom_call.1} parent=11 // pred_fallthru
          _
        // Predicated region
        $region33: #{tpu_custom_call.1} parent=11 // pred_check
          %p376 = pneg %p230
        $region34: #{tpu_custom_call.1} parent=11 // pred_check_branch
          %378 = sbr.rel (%p376) target = $region36
        $region35: #{tpu_custom_call.1} parent=11 // pred_region
          %s380 = ssub.s32 16, 16
          %381 = vsyncadd [#allocation19], %s380
          %s383 = sshll.u32 [#allocation18], 4
          %s384 = int_to_ptr.vmem [resolvable:$true] %s383
          %386 = dma.hbm_to_vmem [thread:$0]  %s7, 16, %s384, [#allocation19]
        $region36: #{tpu_custom_call.1} parent=11 // pred_fallthru
          _
        // Predicated region
        $region37: #{tpu_custom_call.1} parent=11 // pred_check
          %p387 = pneg %p251
        $region38: #{tpu_custom_call.1} parent=11 // pred_check_branch
          %389 = sbr.rel (%p387) target = $region40
        $region39: #{tpu_custom_call.1} parent=11 // pred_region
          %s391 = ssub.s32 256, 256
          %392 = vsyncadd [#allocation19], %s391
          %s393 = sshll.u32 [#allocation20], 4
          %s394 = int_to_ptr.vmem [resolvable:$true] %s393
          %399 = dma.hbm_to_vmem [thread:$0]  %s8, 256, %s394, [#allocation19], 64, 64, 4
        $region40: #{tpu_custom_call.1} parent=11 // pred_fallthru
          _
        // Predicated region
        $region41: #{tpu_custom_call.1} parent=11 // pred_check
          %p400 = pneg %p272
        $region42: #{tpu_custom_call.1} parent=11 // pred_check_branch
          %402 = sbr.rel (%p400) target = $region44
        $region43: #{tpu_custom_call.1} parent=11 // pred_region
          %s404 = ssub.s32 16, 16
          %405 = vsyncadd [#allocation22], %s404
          %s407 = sshll.u32 [#allocation21], 4
          %s408 = int_to_ptr.vmem [resolvable:$true] %s407
          %410 = dma.hbm_to_vmem [thread:$0]  %s9, 16, %s408, [#allocation22]
        $region44: #{tpu_custom_call.1} parent=11 // pred_fallthru
          _
      $region12: #{tpu_custom_call.1} parent=5 // pred_fallthru
        _
      %p411 = scmp.lt.s32.totalorder %s29, 2
      // Predicated region
      $region45: #{tpu_custom_call.1} parent=5 // pred_check
        %p412 = pneg %p411
      $region46: #{tpu_custom_call.1} parent=5 // pred_check_branch
        %414 = sbr.rel (%p412) target = $region48
      $region47: #{tpu_custom_call.1} parent=5 // pred_region
        // Predicated region
        $region49: #{tpu_custom_call.1} parent=47 // pred_check
          %p415 = pneg %p70
        $region50: #{tpu_custom_call.1} parent=47 // pred_check_branch
          %417 = sbr.rel (%p415) target = $region52
        $region51: #{tpu_custom_call.1} parent=47 // pred_region
          %s418 = sand.u32 %s60, 1
          %s419 = scalar_lea.sflag [#allocation7], %s418
          %s420 = sand.u32 %s60, 1
          %s421 = smul.addr %s420, 4
          %s422 = scalar_lea.vmem [#allocation6], %s421
          %s424 = ssub.s32 64, 64
          %425 = vsyncadd %s419, %s424
          %s426 = sadd.s32 %s37, %s36
          %s427 = smul.addr %s426, 64
          %s428 = scalar_lea.hbm %s0, %s427
          %s430 = sshll.u32 %s422, 4
          %s431 = int_to_ptr.vmem [resolvable:$true] %s430
          %433 = dma.hbm_to_vmem [thread:$0]  %s428, 64, %s431, %s419
        $region52: #{tpu_custom_call.1} parent=47 // pred_fallthru
          _
        // Predicated region
        $region53: #{tpu_custom_call.1} parent=47 // pred_check
          %p434 = pneg %p98
        $region54: #{tpu_custom_call.1} parent=47 // pred_check_branch
          %436 = sbr.rel (%p434) target = $region56
        $region55: #{tpu_custom_call.1} parent=47 // pred_region
          %s437 = sand.u32 %s29, 1
          %s438 = scalar_lea.sflag [#allocation10], %s437
          %s439 = sand.u32 %s88, 1
          %s440 = smul.addr %s439, 4
          %s441 = scalar_lea.vmem [#allocation9], %s440
          %s443 = ssub.s32 64, 64
          %444 = vsyncadd %s438, %s443
          %s445 = sadd.s32 %s38, %s36
          %s446 = smul.addr %s445, 64
          %s447 = scalar_lea.hbm %s1, %s446
          %s449 = sshll.u32 %s441, 4
          %s450 = int_to_ptr.vmem [resolvable:$true] %s449
          %452 = dma.hbm_to_vmem [thread:$0]  %s447, 64, %s450, %s438
        $region56: #{tpu_custom_call.1} parent=47 // pred_fallthru
          _
      $region48: #{tpu_custom_call.1} parent=5 // pred_fallthru
        _
      %p453 = scmp.le.s32.totalorder 1, %s29
      %p454 = scmp.lt.s32.totalorder %s29, 3
      %p455 = pnand %p453, %p454
      %p456 = pneg %p455
      // Predicated region
      $region57: #{tpu_custom_call.1} parent=5 // pred_check
        _
      $region58: #{tpu_custom_call.1} parent=5 // pred_check_branch
        %458 = sbr.rel (%p455) target = $region60
      $region59: #{tpu_custom_call.1} parent=5 // pred_region
        %s459 = ssub.s32 %s29, 1
        %s460 = sand.u32 %s63, 1
        %s461 = scalar_lea.sflag [#allocation7], %s460
        %s462 = sand.u32 %s63, 1
        %s463 = smul.addr %s462, 4
        %s464 = scalar_lea.vmem [#allocation6], %s463
        // Predicated region
        $region61: #{tpu_custom_call.1} parent=59 // pred_check
          %p465 = pneg %p76
        $region62: #{tpu_custom_call.1} parent=59 // pred_check_branch
          %467 = sbr.rel (%p465) target = $region64
        $region63: #{tpu_custom_call.1} parent=59 // pred_region
          %468 = dma.done %s461, 64
        $region64: #{tpu_custom_call.1} parent=59 // pred_fallthru
          _
        %s469 = sand.u32 %s34, 1
        %s470 = scalar_lea.sflag [#allocation10], %s469
        %s471 = sand.u32 %s91, 1
        %s472 = smul.addr %s471, 4
        %s473 = scalar_lea.vmem [#allocation9], %s472
        // Predicated region
        $region65: #{tpu_custom_call.1} parent=59 // pred_check
          %p474 = pneg %p104
        $region66: #{tpu_custom_call.1} parent=59 // pred_check_branch
          %476 = sbr.rel (%p474) target = $region68
        $region67: #{tpu_custom_call.1} parent=59 // pred_region
          %477 = dma.done %s470, 64
        $region68: #{tpu_custom_call.1} parent=59 // pred_fallthru
          _
        // Predicated region
        $region69: #{tpu_custom_call.1} parent=59 // pred_check
          %p478 = pneg %p125
        $region70: #{tpu_custom_call.1} parent=59 // pred_check_branch
          %480 = sbr.rel (%p478) target = $region72
        $region71: #{tpu_custom_call.1} parent=59 // pred_region
          %481 = dma.done [#allocation10], 256
        $region72: #{tpu_custom_call.1} parent=59 // pred_fallthru
          _
        // Predicated region
        $region73: #{tpu_custom_call.1} parent=59 // pred_check
          %p482 = pneg %p146
        $region74: #{tpu_custom_call.1} parent=59 // pred_check_branch
          %484 = sbr.rel (%p482) target = $region76
        $region75: #{tpu_custom_call.1} parent=59 // pred_region
          %485 = dma.done [#allocation13], 16
        $region76: #{tpu_custom_call.1} parent=59 // pred_fallthru
          _
        // Predicated region
        $region77: #{tpu_custom_call.1} parent=59 // pred_check
          %p486 = pneg %p167
        $region78: #{tpu_custom_call.1} parent=59 // pred_check_branch
          %488 = sbr.rel (%p486) target = $region80
        $region79: #{tpu_custom_call.1} parent=59 // pred_region
          %489 = dma.done [#allocation13], 256
        $region80: #{tpu_custom_call.1} parent=59 // pred_fallthru
          _
        // Predicated region
        $region81: #{tpu_custom_call.1} parent=59 // pred_check
          %p490 = pneg %p188
        $region82: #{tpu_custom_call.1} parent=59 // pred_check_branch
          %492 = sbr.rel (%p490) target = $region84
        $region83: #{tpu_custom_call.1} parent=59 // pred_region
          %493 = dma.done [#allocation16], 16
        $region84: #{tpu_custom_call.1} parent=59 // pred_fallthru
          _
        // Predicated region
        $region85: #{tpu_custom_call.1} parent=59 // pred_check
          %p494 = pneg %p209
        $region86: #{tpu_custom_call.1} parent=59 // pred_check_branch
          %496 = sbr.rel (%p494) target = $region88
        $region87: #{tpu_custom_call.1} parent=59 // pred_region
          %497 = dma.done [#allocation16], 256
        $region88: #{tpu_custom_call.1} parent=59 // pred_fallthru
          _
        // Predicated region
        $region89: #{tpu_custom_call.1} parent=59 // pred_check
          %p498 = pneg %p230
        $region90: #{tpu_custom_call.1} parent=59 // pred_check_branch
          %500 = sbr.rel (%p498) target = $region92
        $region91: #{tpu_custom_call.1} parent=59 // pred_region
          %501 = dma.done [#allocation19], 16
        $region92: #{tpu_custom_call.1} parent=59 // pred_fallthru
          _
        // Predicated region
        $region93: #{tpu_custom_call.1} parent=59 // pred_check
          %p502 = pneg %p251
        $region94: #{tpu_custom_call.1} parent=59 // pred_check_branch
          %504 = sbr.rel (%p502) target = $region96
        $region95: #{tpu_custom_call.1} parent=59 // pred_region
          %505 = dma.done [#allocation19], 256
        $region96: #{tpu_custom_call.1} parent=59 // pred_fallthru
          _
        // Predicated region
        $region97: #{tpu_custom_call.1} parent=59 // pred_check
          %p506 = pneg %p272
        $region98: #{tpu_custom_call.1} parent=59 // pred_check_branch
          %508 = sbr.rel (%p506) target = $region100
        $region99: #{tpu_custom_call.1} parent=59 // pred_region
          %509 = dma.done [#allocation22], 16
        $region100: #{tpu_custom_call.1} parent=59 // pred_fallthru
          _
        %s510 = sand.u32 %s63, 1
        %s511 = scalar_lea.sflag [#allocation7], %s510
        %s512 = sand.u32 %s63, 1
        %s513 = smul.addr %s512, 4
        %s514 = scalar_lea.vmem [#allocation6], %s513
        %p515 = pneg %p76
        %p516 = pneg %p73
        %s517 = sand.u32 %s34, 1
        %s518 = scalar_lea.sflag [#allocation10], %s517
        %s519 = sand.u32 %s91, 1
        %s520 = smul.addr %s519, 4
        %s521 = scalar_lea.vmem [#allocation9], %s520
        %p522 = pneg %p104
        %p523 = pneg %p101
        %p524 = pneg %p125
        %p525 = pneg %p122
        %p526 = pneg %p146
        %p527 = pneg %p143
        %p528 = pneg %p167
        %p529 = pneg %p164
        %p530 = pneg %p188
        %p531 = pneg %p185
        %p532 = pneg %p209
        %p533 = pneg %p206
        %p534 = pneg %p230
        %p535 = pneg %p227
        %p536 = pneg %p251
        %p537 = pneg %p248
        %p538 = pneg %p272
        %p539 = pneg %p269
        %p540 = pneg %p300
        %p541 = pneg %p297
        %s542 = sand.u32 %s287, 1
        %s543 = scalar_lea.sflag [#allocation8], %s542
        %s544 = sand.u32 %s287, 1
        %s545 = smul.addr %s544, 8
        %s546 = scalar_lea.vmem [#allocation23], %s545
        %p548 = scmp.eq.s32.totalorder %s41, 0
        // Predicated region
        $region101: #{tpu_custom_call.1} parent=59 // pred_check
          %p549 = pneg %p548
        $region102: #{tpu_custom_call.1} parent=59 // pred_check_branch
          %551 = sbr.rel (%p549) target = $region104
        $region103: #{tpu_custom_call.1} parent=59 // pred_region
          %v552 = vld [vmem:[%s464] sm:$0xf]
          %v553 = vld [vmem:[#allocation11] sm:$0xf]
          %v554 = vld [vmem:[#allocation11 + $0x4] sm:$0xf]
          %v555 = vld [vmem:[#allocation11 + $0x8] sm:$0xf]
          %v556 = vld [vmem:[#allocation11 + $0xc] sm:$0xf]
          %v557 = vld [vmem:[#allocation12] sm:$0x1]
          %v559 = vlaneseq
          %v560 = vshrl.u32 %v559, 7
          %v561 = vsub.s32 0, %v560
          %v562 = vrot.slane %v557, %v561
          %v568 = vunpack.c.l.b16 %v553
          %v569 = vunpack.c.l.b16 %v554
          %v570 = vunpack.c.l.b16 %v555
          %v571 = vunpack.c.l.b16 %v556
          %v572 = vpack.c.b16 %v569, %v568
          %v573 = vpack.c.b16 %v571, %v570
          %vm576 = vcmask 261120
          %v578 = vsel %vm576, %v552, 0
          %580 = vmatprep.subr.bf16.mxu0 0
          %581 = vmatpush1.bf16.msra.mxu0 %v572
          %582 = vmatprep.subr.bf16.mxu0 0
          %583 = vmatpush1.bf16.msra.mxu0 %v573
          %584 = vmatprep.subr.bf16.mxu0 0
          %585 = vmatpush1.bf16.msra.mxu0 0
          %586 = vmatprep.subr.bf16.mxu0 0
          %587 = vmatpush1.bf16.msra.mxu0 0
          %588 = vmatprep.subr.bf16.mxu0 0
          %589 = vmatpush1.bf16.msra.mxu0 0
          %590 = vmatprep.subr.bf16.mxu0 0
          %591 = vmatpush1.bf16.msra.mxu0 0
          %592 = vmatprep.subr.bf16.mxu0 0
          %593 = vmatpush1.bf16.msra.mxu0 0
          %594 = vmatprep.subr.bf16.mxu0 0
          %595 = vmatpush1.bf16.msra.mxu0 0
          %596 = vmatprep.subr.bf16.mxu0 0
          %597 = vmatpush1.bf16.msra.mxu0 0
          %598 = vmatprep.subr.bf16.mxu0 0
          %599 = vmatpush1.bf16.msra.mxu0 0
          %600 = vmatprep.subr.bf16.mxu0 0
          %601 = vmatpush1.bf16.msra.mxu0 0
          %602 = vmatprep.subr.bf16.mxu0 0
          %603 = vmatpush1.bf16.msra.mxu0 0
          %604 = vmatprep.subr.bf16.mxu0 0
          %605 = vmatpush1.bf16.msra.mxu0 0
          %606 = vmatprep.subr.bf16.mxu0 0
          %607 = vmatpush1.bf16.msra.mxu0 0
          %608 = vmatprep.subr.bf16.mxu0 0
          %609 = vmatpush1.bf16.msra.mxu0 0
          %610 = vmatprep.subr.bf16.mxu0 0
          %611 = vmatpush1.bf16.msra.mxu0 0
          %612 = vmatprep.mubr.bf16.mxu0 0
          %613 = vmatmul.mubr.bf16.gmra.mrb[0].mxu0 %v578
          %v614 = vpop.f32.mrb[0].mxu0
          %v615 = vadd.f32 %v562, %v614
          %v616 = vpop.f32.mrb[0].mxu0
          %v617 = vpop.f32.mrb[0].mxu0
          %v618 = vpop.f32.mrb[0].mxu0
          %619 = vdwg.mxu0
          %v620 = vmul.f32 %v615, 0.35355338
          %v621 = vpack.c.bf16 %v620, %v620
          %vm622 = vcmask 257024
          %623 = vst.msk [vmem:[#allocation2] sm:$0xf] %vm622, %v621
          %vm624 = vcmask 7168
          %625 = vst.msk [vmem:[#allocation3] sm:$0xff] %vm624, -inf
          %626 = vst.msk [vmem:[#allocation3 + $0x8] sm:$0xff] %vm624, -inf
          %627 = vst.msk [vmem:[#allocation3 + $0x10] sm:$0xff] %vm624, -inf
          %628 = vst.msk [vmem:[#allocation3 + $0x18] sm:$0xff] %vm624, -inf
          %629 = vst.msk [vmem:[#allocation4] sm:$0xff] %vm624, 0.0
          %630 = vst.msk [vmem:[#allocation4 + $0x8] sm:$0xff] %vm624, 0.0
          %631 = vst.msk [vmem:[#allocation4 + $0x10] sm:$0xff] %vm624, 0.0
          %632 = vst.msk [vmem:[#allocation4 + $0x18] sm:$0xff] %vm624, 0.0
          %633 = vst.msk [vmem:[#allocation5] sm:$0xff] %vm576, 0.0
        $region104: #{tpu_custom_call.1} parent=59 // pred_fallthru
          _
        %p634 = scmp.le.s32.totalorder %s41, %s40
        // Predicated region
        $region105: #{tpu_custom_call.1} parent=59 // pred_check
          %p635 = pneg %p634
        $region106: #{tpu_custom_call.1} parent=59 // pred_check_branch
          %637 = sbr.rel (%p635) target = $region108
        $region107: #{tpu_custom_call.1} parent=59 // pred_region
          %v638 = vld [vmem:[%s473] sm:$0xf]
          %v639 = vld [vmem:[#allocation14] sm:$0xf]
          %v640 = vld [vmem:[#allocation14 + $0x4] sm:$0xf]
          %v641 = vld [vmem:[#allocation14 + $0x8] sm:$0xf]
          %v642 = vld [vmem:[#allocation14 + $0xc] sm:$0xf]
          %v643 = vld [vmem:[#allocation15] sm:$0x1]
          %v645 = vlaneseq
          %v646 = vshrl.u32 %v645, 7
          %v647 = vsub.s32 0, %v646
          %v648 = vrot.slane %v643, %v647
          %v654 = vunpack.c.l.b16 %v639
          %v655 = vunpack.c.l.b16 %v640
          %v656 = vunpack.c.l.b16 %v641
          %v657 = vunpack.c.l.b16 %v642
          %v658 = vpack.c.b16 %v655, %v654
          %v659 = vpack.c.b16 %v657, %v656
          %vm662 = vcmask 261120
          %v664 = vsel %vm662, %v638, 0
          %666 = vmatprep.subr.bf16.mxu0 0
          %667 = vmatpush1.bf16.msra.mxu0 %v658
          %668 = vmatprep.subr.bf16.mxu0 0
          %669 = vmatpush1.bf16.msra.mxu0 %v659
          %670 = vmatprep.subr.bf16.mxu0 0
          %671 = vmatpush1.bf16.msra.mxu0 0
          %672 = vmatprep.subr.bf16.mxu0 0
          %673 = vmatpush1.bf16.msra.mxu0 0
          %674 = vmatprep.subr.bf16.mxu0 0
          %675 = vmatpush1.bf16.msra.mxu0 0
          %676 = vmatprep.subr.bf16.mxu0 0
          %677 = vmatpush1.bf16.msra.mxu0 0
          %678 = vmatprep.subr.bf16.mxu0 0
          %679 = vmatpush1.bf16.msra.mxu0 0
          %680 = vmatprep.subr.bf16.mxu0 0
          %681 = vmatpush1.bf16.msra.mxu0 0
          %682 = vmatprep.subr.bf16.mxu0 0
          %683 = vmatpush1.bf16.msra.mxu0 0
          %684 = vmatprep.subr.bf16.mxu0 0
          %685 = vmatpush1.bf16.msra.mxu0 0
          %686 = vmatprep.subr.bf16.mxu0 0
          %687 = vmatpush1.bf16.msra.mxu0 0
          %688 = vmatprep.subr.bf16.mxu0 0
          %689 = vmatpush1.bf16.msra.mxu0 0
          %690 = vmatprep.subr.bf16.mxu0 0
          %691 = vmatpush1.bf16.msra.mxu0 0
          %692 = vmatprep.subr.bf16.mxu0 0
          %693 = vmatpush1.bf16.msra.mxu0 0
          %694 = vmatprep.subr.bf16.mxu0 0
          %695 = vmatpush1.bf16.msra.mxu0 0
          %696 = vmatprep.subr.bf16.mxu0 0
          %697 = vmatpush1.bf16.msra.mxu0 0
          %698 = vmatprep.mubr.bf16.mxu0 0
          %699 = vmatmul.mubr.bf16.gmra.mrb[0].mxu0 %v664
          %v700 = vpop.f32.mrb[0].mxu0
          %v701 = vadd.f32 %v648, %v700
          %v702 = vpop.f32.mrb[0].mxu0
          %v703 = vpop.f32.mrb[0].mxu0
          %v704 = vpop.f32.mrb[0].mxu0
          %705 = vdwg.mxu0
          %v706 = vpack.c.bf16 %v701, %v701
          %v707 = vld [vmem:[#allocation17] sm:$0xf]
          %v708 = vld [vmem:[#allocation17 + $0x4] sm:$0xf]
          %v709 = vld [vmem:[#allocation17 + $0x8] sm:$0xf]
          %v710 = vld [vmem:[#allocation17 + $0xc] sm:$0xf]
          %v711 = vld [vmem:[#allocation18] sm:$0x1]
          %v713 = vlaneseq
          %v714 = vshrl.u32 %v713, 7
          %v715 = vsub.s32 0, %v714
          %v716 = vrot.slane %v711, %v715
          %v722 = vunpack.c.l.b16 %v707
          %v723 = vunpack.c.l.b16 %v708
          %v724 = vunpack.c.l.b16 %v709
          %v725 = vunpack.c.l.b16 %v710
          %v726 = vpack.c.b16 %v723, %v722
          %v727 = vpack.c.b16 %v725, %v724
          %730 = vmatprep.subr.bf16.mxu0 0
          %731 = vmatpush1.bf16.msra.mxu0 %v726
          %732 = vmatprep.subr.bf16.mxu0 0
          %733 = vmatpush1.bf16.msra.mxu0 %v727
          %734 = vmatprep.subr.bf16.mxu0 0
          %735 = vmatpush1.bf16.msra.mxu0 0
          %736 = vmatprep.subr.bf16.mxu0 0
          %737 = vmatpush1.bf16.msra.mxu0 0
          %738 = vmatprep.subr.bf16.mxu0 0
          %739 = vmatpush1.bf16.msra.mxu0 0
          %740 = vmatprep.subr.bf16.mxu0 0
          %741 = vmatpush1.bf16.msra.mxu0 0
          %742 = vmatprep.subr.bf16.mxu0 0
          %743 = vmatpush1.bf16.msra.mxu0 0
          %744 = vmatprep.subr.bf16.mxu0 0
          %745 = vmatpush1.bf16.msra.mxu0 0
          %746 = vmatprep.subr.bf16.mxu0 0
          %747 = vmatpush1.bf16.msra.mxu0 0
          %748 = vmatprep.subr.bf16.mxu0 0
          %749 = vmatpush1.bf16.msra.mxu0 0
          %750 = vmatprep.subr.bf16.mxu0 0
          %751 = vmatpush1.bf16.msra.mxu0 0
          %752 = vmatprep.subr.bf16.mxu0 0
          %753 = vmatpush1.bf16.msra.mxu0 0
          %754 = vmatprep.subr.bf16.mxu0 0
          %755 = vmatpush1.bf16.msra.mxu0 0
          %756 = vmatprep.subr.bf16.mxu0 0
          %757 = vmatpush1.bf16.msra.mxu0 0
          %758 = vmatprep.subr.bf16.mxu0 0
          %759 = vmatpush1.bf16.msra.mxu0 0
          %760 = vmatprep.subr.bf16.mxu0 0
          %761 = vmatpush1.bf16.msra.mxu0 0
          %762 = vmatprep.mubr.bf16.mxu0 0
          %763 = vmatmul.mubr.bf16.gmra.mrb[0].mxu0 %v664
          %v764 = vpop.f32.mrb[0].mxu0
          %v765 = vadd.f32 %v716, %v764
          %v766 = vpop.f32.mrb[0].mxu0
          %v767 = vpop.f32.mrb[0].mxu0
          %v768 = vpop.f32.mrb[0].mxu0
          %769 = vdwg.mxu0
          %v770 = vpack.c.bf16 %v765, %v765
          %s771 = smul.u32 %s40, 8
          %v772 = vlaneseq
          %v773 = vshrl.u32 %v772, 7
          %v774 = vstv %s771
          %v775 = vadd.s32 %v774, %v773
          %s776 = smul.u32 %s41, 8
          %v777 = vlaneseq
          %v778 = vand.u32 %v777, 127
          %v779 = vstv %s776
          %v780 = vadd.s32 %v779, %v778
          %vm781 = vcmp.le.s32.totalorder %v780, %v775
          %v782 = vld [vmem:[#allocation2] sm:$0xf]
          %vm783 = vcmask 64512
          %v785 = vsel %vm783, %v782, 0
          %v788 = vsel %vm783, %v706, 0
          %790 = vmatprep.subr.bf16.mxu0 0
          %791 = vmatpush1.bf16.xpose.msra.mxu0 %v788
          %792 = vmatprep.subr.bf16.mxu0 0
          %793 = vmatpush1.bf16.xpose.msra.mxu0 0
          %794 = vmatprep.subr.bf16.mxu0 0
          %795 = vmatpush1.bf16.xpose.msra.mxu0 0
          %796 = vmatprep.subr.bf16.mxu0 0
          %797 = vmatpush1.bf16.xpose.msra.mxu0 0
          %798 = vmatprep.subr.bf16.mxu0 0
          %799 = vmatpush1.bf16.xpose.msra.mxu0 0
          %800 = vmatprep.subr.bf16.mxu0 0
          %801 = vmatpush1.bf16.xpose.msra.mxu0 0
          %802 = vmatprep.subr.bf16.mxu0 0
          %803 = vmatpush1.bf16.xpose.msra.mxu0 0
          %804 = vmatprep.subr.bf16.mxu0 0
          %805 = vmatpush1.bf16.xpose.msra.mxu0 0
          %806 = vmatprep.subr.bf16.mxu0 0
          %807 = vmatpush1.bf16.xpose.msra.mxu0 0
          %808 = vmatprep.subr.bf16.mxu0 0
          %809 = vmatpush1.bf16.xpose.msra.mxu0 0
          %810 = vmatprep.subr.bf16.mxu0 0
          %811 = vmatpush1.bf16.xpose.msra.mxu0 0
          %812 = vmatprep.subr.bf16.mxu0 0
          %813 = vmatpush1.bf16.xpose.msra.mxu0 0
          %814 = vmatprep.subr.bf16.mxu0 0
          %815 = vmatpush1.bf16.xpose.msra.mxu0 0
          %816 = vmatprep.subr.bf16.mxu0 0
          %817 = vmatpush1.bf16.xpose.msra.mxu0 0
          %818 = vmatprep.subr.bf16.mxu0 0
          %819 = vmatpush1.bf16.xpose.msra.mxu0 0
          %820 = vmatprep.subr.bf16.mxu0 0
          %821 = vmatpush1.bf16.xpose.msra.mxu0 0
          %822 = vmatprep.mubr.bf16.mxu0 0
          %823 = vmatmul.mubr.bf16.gmra.mrb[0].mxu0 %v785
          %v824 = vpop.f32.mrb[0].mxu0
          %v825 = vadd.f32 0.0, %v824
          %v826 = vpop.f32.mrb[0].mxu0
          %v827 = vpop.f32.mrb[0].mxu0
          %v828 = vpop.f32.mrb[0].mxu0
          %829 = vdwg.mxu0
          %v830 = vsel %vm781, %v825, -inf
          %v831 = vld [vmem:[#allocation3] sm:$0xff]
          %v832 = vsel %vm783, %v830, -inf
          %833 = vmax.xlane.f32.xlu0 %v832
          %v834 = vpop.xlane.xlu0 %833
          %v835 = vmax.f32 %v831, %v834
          %v836 = vsub.f32 %v831, %v835
          %v837 = vmul.f32 %v836, 1.442695
          %v838 = vpow.pop %v837
          %840 = vset.pattern.permute.xlu0 0
          %841 = vperm.xlu0 %840, %v835
          %v842 = vpop.permute.xlu0 %841
          %v844 = vsub.f32 %v830, %v842
          %v845 = vmul.f32 %v844, 1.442695
          %v846 = vpow.pop %v845
          %v847 = vld [vmem:[#allocation4] sm:$0xff]
          %v848 = vmul.f32 %v838, %v847
          %v849 = vsel %vm783, %v846, 0.0
          %850 = vadd.xlane.f32.xlu0 %v849
          %v851 = vpop.xlane.xlu0 %850
          %v852 = vadd.f32 %v848, %v851
          %vm853 = vcmask 7168
          %854 = vst.msk [vmem:[#allocation4] sm:$0xff] %vm853, %v852
          %v855 = vld [vmem:[#allocation5] sm:$0xff]
          %857 = vset.pattern.permute.xlu0 0
          %858 = vperm.xlu0 %857, %v838
          %v859 = vpop.permute.xlu0 %858
          %v861 = vmul.f32 %v859, %v855
          %v862 = vpack.c.bf16 %v846, %v846
          %v864 = vsel %vm783, %v862, 0
          %vm866 = vcmask 1043456
          %v868 = vsel %vm866, %v770, 0
          %870 = vmatprep.subr.bf16.mxu0 0
          %871 = vmatpush1.bf16.msra.mxu0 %v868
          %872 = vmatprep.subr.bf16.mxu0 0
          %873 = vmatpush1.bf16.msra.mxu0 0
          %874 = vmatprep.subr.bf16.mxu0 0
          %875 = vmatpush1.bf16.msra.mxu0 0
          %876 = vmatprep.subr.bf16.mxu0 0
          %877 = vmatpush1.bf16.msra.mxu0 0
          %878 = vmatprep.subr.bf16.mxu0 0
          %879 = vmatpush1.bf16.msra.mxu0 0
          %880 = vmatprep.subr.bf16.mxu0 0
          %881 = vmatpush1.bf16.msra.mxu0 0
          %882 = vmatprep.subr.bf16.mxu0 0
          %883 = vmatpush1.bf16.msra.mxu0 0
          %884 = vmatprep.subr.bf16.mxu0 0
          %885 = vmatpush1.bf16.msra.mxu0 0
          %886 = vmatprep.subr.bf16.mxu0 0
          %887 = vmatpush1.bf16.msra.mxu0 0
          %888 = vmatprep.subr.bf16.mxu0 0
          %889 = vmatpush1.bf16.msra.mxu0 0
          %890 = vmatprep.subr.bf16.mxu0 0
          %891 = vmatpush1.bf16.msra.mxu0 0
          %892 = vmatprep.subr.bf16.mxu0 0
          %893 = vmatpush1.bf16.msra.mxu0 0
          %894 = vmatprep.subr.bf16.mxu0 0
          %895 = vmatpush1.bf16.msra.mxu0 0
          %896 = vmatprep.subr.bf16.mxu0 0
          %897 = vmatpush1.bf16.msra.mxu0 0
          %898 = vmatprep.subr.bf16.mxu0 0
          %899 = vmatpush1.bf16.msra.mxu0 0
          %900 = vmatprep.subr.bf16.mxu0 0
          %901 = vmatpush1.bf16.msra.mxu0 0
          %902 = vmatprep.mubr.bf16.mxu0 0
          %903 = vmatmul.mubr.bf16.gmra.mrb[0].mxu0 %v864
          %v904 = vpop.f32.mrb[0].mxu0
          %v905 = vadd.f32 0.0, %v904
          %v906 = vpop.f32.mrb[0].mxu0
          %v907 = vpop.f32.mrb[0].mxu0
          %v908 = vpop.f32.mrb[0].mxu0
          %909 = vdwg.mxu0
          %v910 = vadd.f32 %v861, %v905
          %911 = vst.msk [vmem:[#allocation5] sm:$0xff] %vm783, %v910
          %912 = vst.msk [vmem:[#allocation3] sm:$0xff] %vm853, %v835
          %v913 = vld [vmem:[#allocation2] sm:$0xf]
          %v915 = vunpack.c.l.b16 %v913
          %v916 = vpack.c.b16 %v915, %v915
          %917 = vrot.lane.b32.xlu0 %v916, 120
          %v918 = vpop.permute.xlu0 %917
          %920 = vrot.lane.b32.xlu0 %v706, 120
          %v921 = vpop.permute.xlu0 %920
          %v923 = vsel %vm783, %v918, 0
          %v926 = vsel %vm783, %v921, 0
          %928 = vmatprep.subr.bf16.mxu0 0
          %929 = vmatpush1.bf16.xpose.msra.mxu0 %v926
          %930 = vmatprep.subr.bf16.mxu0 0
          %931 = vmatpush1.bf16.xpose.msra.mxu0 0
          %932 = vmatprep.subr.bf16.mxu0 0
          %933 = vmatpush1.bf16.xpose.msra.mxu0 0
          %934 = vmatprep.subr.bf16.mxu0 0
          %935 = vmatpush1.bf16.xpose.msra.mxu0 0
          %936 = vmatprep.subr.bf16.mxu0 0
          %937 = vmatpush1.bf16.xpose.msra.mxu0 0
          %938 = vmatprep.subr.bf16.mxu0 0
          %939 = vmatpush1.bf16.xpose.msra.mxu0 0
          %940 = vmatprep.subr.bf16.mxu0 0
          %941 = vmatpush1.bf16.xpose.msra.mxu0 0
          %942 = vmatprep.subr.bf16.mxu0 0
          %943 = vmatpush1.bf16.xpose.msra.mxu0 0
          %944 = vmatprep.subr.bf16.mxu0 0
          %945 = vmatpush1.bf16.xpose.msra.mxu0 0
          %946 = vmatprep.subr.bf16.mxu0 0
          %947 = vmatpush1.bf16.xpose.msra.mxu0 0
          %948 = vmatprep.subr.bf16.mxu0 0
          %949 = vmatpush1.bf16.xpose.msra.mxu0 0
          %950 = vmatprep.subr.bf16.mxu0 0
          %951 = vmatpush1.bf16.xpose.msra.mxu0 0
          %952 = vmatprep.subr.bf16.mxu0 0
          %953 = vmatpush1.bf16.xpose.msra.mxu0 0
          %954 = vmatprep.subr.bf16.mxu0 0
          %955 = vmatpush1.bf16.xpose.msra.mxu0 0
          %956 = vmatprep.subr.bf16.mxu0 0
          %957 = vmatpush1.bf16.xpose.msra.mxu0 0
          %958 = vmatprep.subr.bf16.mxu0 0
          %959 = vmatpush1.bf16.xpose.msra.mxu0 0
          %960 = vmatprep.mubr.bf16.mxu0 0
          %961 = vmatmul.mubr.bf16.gmra.mrb[0].mxu0 %v923
          %v962 = vpop.f32.mrb[0].mxu0
          %v963 = vadd.f32 0.0, %v962
          %v964 = vpop.f32.mrb[0].mxu0
          %v965 = vpop.f32.mrb[0].mxu0
          %v966 = vpop.f32.mrb[0].mxu0
          %967 = vdwg.mxu0
          %v968 = vsel %vm781, %v963, -inf
          %s969 = scalar_lea.vmem [#allocation3], 8
          %v970 = vld [vmem:[%s969] sm:$0xff]
          %v971 = vsel %vm783, %v968, -inf
          %972 = vmax.xlane.f32.xlu0 %v971
          %v973 = vpop.xlane.xlu0 %972
          %v974 = vmax.f32 %v970, %v973
          %v975 = vsub.f32 %v970, %v974
          %v976 = vmul.f32 %v975, 1.442695
          %v977 = vpow.pop %v976
          %979 = vset.pattern.permute.xlu0 0
          %980 = vperm.xlu0 %979, %v974
          %v981 = vpop.permute.xlu0 %980
          %v983 = vsub.f32 %v968, %v981
          %v984 = vmul.f32 %v983, 1.442695
          %v985 = vpow.pop %v984
          %s986 = scalar_lea.vmem [#allocation4], 8
          %v987 = vld [vmem:[%s986] sm:$0xff]
          %v988 = vmul.f32 %v977, %v987
          %v989 = vsel %vm783, %v985, 0.0
          %990 = vadd.xlane.f32.xlu0 %v989
          %v991 = vpop.xlane.xlu0 %990
          %v992 = vadd.f32 %v988, %v991
          %993 = vst.msk [vmem:[%s986] sm:$0xff] %vm853, %v992
          %v994 = vld [vmem:[#allocation5] sm:$0xff]
          %996 = vset.pattern.permute.xlu0 0
          %997 = vperm.xlu0 %996, %v977
          %v998 = vpop.permute.xlu0 %997
          %v1000 = vmul.f32 %v998, %v994
          %v1001 = vpack.c.bf16 %v985, %v985
          %1003 = vrot.lane.b32.xlu0 %v770, 120
          %v1004 = vpop.permute.xlu0 %1003
          %v1006 = vsel %vm783, %v1001, 0
          %v1009 = vsel %vm866, %v1004, 0
          %1011 = vmatprep.subr.bf16.mxu0 0
          %1012 = vmatpush1.bf16.msra.mxu0 %v1009
          %1013 = vmatprep.subr.bf16.mxu0 0
          %1014 = vmatpush1.bf16.msra.mxu0 0
          %1015 = vmatprep.subr.bf16.mxu0 0
          %1016 = vmatpush1.bf16.msra.mxu0 0
          %1017 = vmatprep.subr.bf16.mxu0 0
          %1018 = vmatpush1.bf16.msra.mxu0 0
          %1019 = vmatprep.subr.bf16.mxu0 0
          %1020 = vmatpush1.bf16.msra.mxu0 0
          %1021 = vmatprep.subr.bf16.mxu0 0
          %1022 = vmatpush1.bf16.msra.mxu0 0
          %1023 = vmatprep.subr.bf16.mxu0 0
          %1024 = vmatpush1.bf16.msra.mxu0 0
          %1025 = vmatprep.subr.bf16.mxu0 0
          %1026 = vmatpush1.bf16.msra.mxu0 0
          %1027 = vmatprep.subr.bf16.mxu0 0
          %1028 = vmatpush1.bf16.msra.mxu0 0
          %1029 = vmatprep.subr.bf16.mxu0 0
          %1030 = vmatpush1.bf16.msra.mxu0 0
          %1031 = vmatprep.subr.bf16.mxu0 0
          %1032 = vmatpush1.bf16.msra.mxu0 0
          %1033 = vmatprep.subr.bf16.mxu0 0
          %1034 = vmatpush1.bf16.msra.mxu0 0
          %1035 = vmatprep.subr.bf16.mxu0 0
          %1036 = vmatpush1.bf16.msra.mxu0 0
          %1037 = vmatprep.subr.bf16.mxu0 0
          %1038 = vmatpush1.bf16.msra.mxu0 0
          %1039 = vmatprep.subr.bf16.mxu0 0
          %1040 = vmatpush1.bf16.msra.mxu0 0
          %1041 = vmatprep.subr.bf16.mxu0 0
          %1042 = vmatpush1.bf16.msra.mxu0 0
          %1043 = vmatprep.mubr.bf16.mxu0 0
          %1044 = vmatmul.mubr.bf16.gmra.mrb[0].mxu0 %v1006
          %v1045 = vpop.f32.mrb[0].mxu0
          %v1046 = vadd.f32 0.0, %v1045
          %v1047 = vpop.f32.mrb[0].mxu0
          %v1048 = vpop.f32.mrb[0].mxu0
          %v1049 = vpop.f32.mrb[0].mxu0
          %1050 = vdwg.mxu0
          %1052 = vrot.lane.b32.xlu0 %v1046, 8
          %v1053 = vpop.permute.xlu0 %1052
          %v1055 = vadd.f32 %v1000, %v1053
          %vm1056 = vcmask 130112
          %1057 = vst.msk [vmem:[#allocation5] sm:$0xff] %vm1056, %v1055
          %1058 = vst.msk [vmem:[%s969] sm:$0xff] %vm853, %v974
          %v1059 = vld [vmem:[#allocation2] sm:$0xf]
          %v1061 = vunpack.c.l.b16 %v1059
          %v1062 = vpack.c.b16 %v1061, %v1061
          %1063 = vrot.lane.b32.xlu0 %v1062, 112
          %v1064 = vpop.permute.xlu0 %1063
          %1065 = vrot.lane.b32.xlu0 %v706, 112
          %v1066 = vpop.permute.xlu0 %1065
          %v1068 = vsel %vm783, %v1064, 0
          %v1071 = vsel %vm783, %v1066, 0
          %1073 = vmatprep.subr.bf16.mxu0 0
          %1074 = vmatpush1.bf16.xpose.msra.mxu0 %v1071
          %1075 = vmatprep.subr.bf16.mxu0 0
          %1076 = vmatpush1.bf16.xpose.msra.mxu0 0
          %1077 = vmatprep.subr.bf16.mxu0 0
          %1078 = vmatpush1.bf16.xpose.msra.mxu0 0
          %1079 = vmatprep.subr.bf16.mxu0 0
          %1080 = vmatpush1.bf16.xpose.msra.mxu0 0
          %1081 = vmatprep.subr.bf16.mxu0 0
          %1082 = vmatpush1.bf16.xpose.msra.mxu0 0
          %1083 = vmatprep.subr.bf16.mxu0 0
          %1084 = vmatpush1.bf16.xpose.msra.mxu0 0
          %1085 = vmatprep.subr.bf16.mxu0 0
          %1086 = vmatpush1.bf16.xpose.msra.mxu0 0
          %1087 = vmatprep.subr.bf16.mxu0 0
          %1088 = vmatpush1.bf16.xpose.msra.mxu0 0
          %1089 = vmatprep.subr.bf16.mxu0 0
          %1090 = vmatpush1.bf16.xpose.msra.mxu0 0
          %1091 = vmatprep.subr.bf16.mxu0 0
          %1092 = vmatpush1.bf16.xpose.msra.mxu0 0
          %1093 = vmatprep.subr.bf16.mxu0 0
          %1094 = vmatpush1.bf16.xpose.msra.mxu0 0
          %1095 = vmatprep.subr.bf16.mxu0 0
          %1096 = vmatpush1.bf16.xpose.msra.mxu0 0
          %1097 = vmatprep.subr.bf16.mxu0 0
          %1098 = vmatpush1.bf16.xpose.msra.mxu0 0
          %1099 = vmatprep.subr.bf16.mxu0 0
          %1100 = vmatpush1.bf16.xpose.msra.mxu0 0
          %1101 = vmatprep.subr.bf16.mxu0 0
          %1102 = vmatpush1.bf16.xpose.msra.mxu0 0
          %1103 = vmatprep.subr.bf16.mxu0 0
          %1104 = vmatpush1.bf16.xpose.msra.mxu0 0
          %1105 = vmatprep.mubr.bf16.mxu0 0
          %1106 = vmatmul.mubr.bf16.gmra.mrb[0].mxu0 %v1068
          %v1107 = vpop.f32.mrb[0].mxu0
          %v1108 = vadd.f32 0.0, %v1107
          %v1109 = vpop.f32.mrb[0].mxu0
          %v1110 = vpop.f32.mrb[0].mxu0
          %v1111 = vpop.f32.mrb[0].mxu0
          %1112 = vdwg.mxu0
          %v1113 = vsel %vm781, %v1108, -inf
          %s1114 = scalar_lea.vmem [#allocation3], 16
          %v1115 = vld [vmem:[%s1114] sm:$0xff]
          %v1116 = vsel %vm783, %v1113, -inf
          %1117 = vmax.xlane.f32.xlu0 %v1116
          %v1118 = vpop.xlane.xlu0 %1117
          %v1119 = vmax.f32 %v1115, %v1118
          %v1120 = vsub.f32 %v1115, %v1119
          %v1121 = vmul.f32 %v1120, 1.442695
          %v1122 = vpow.pop %v1121
          %1124 = vset.pattern.permute.xlu0 0
          %1125 = vperm.xlu0 %1124, %v1119
          %v1126 = vpop.permute.xlu0 %1125
          %v1128 = vsub.f32 %v1113, %v1126
          %v1129 = vmul.f32 %v1128, 1.442695
          %v1130 = vpow.pop %v1129
          %s1131 = scalar_lea.vmem [#allocation4], 16
          %v1132 = vld [vmem:[%s1131] sm:$0xff]
          %v1133 = vmul.f32 %v1122, %v1132
          %v1134 = vsel %vm783, %v1130, 0.0
          %1135 = vadd.xlane.f32.xlu0 %v1134
          %v1136 = vpop.xlane.xlu0 %1135
          %v1137 = vadd.f32 %v1133, %v1136
          %1138 = vst.msk [vmem:[%s1131] sm:$0xff] %vm853, %v1137
          %v1139 = vld [vmem:[#allocation5] sm:$0xff]
          %1141 = vset.pattern.permute.xlu0 0
          %1142 = vperm.xlu0 %1141, %v1122
          %v1143 = vpop.permute.xlu0 %1142
          %v1145 = vmul.f32 %v1143, %v1139
          %v1146 = vpack.c.bf16 %v1130, %v1130
          %1147 = vrot.lane.b32.xlu0 %v770, 112
          %v1148 = vpop.permute.xlu0 %1147
          %v1150 = vsel %vm783, %v1146, 0
          %v1153 = vsel %vm866, %v1148, 0
          %1155 = vmatprep.subr.bf16.mxu0 0
          %1156 = vmatpush1.bf16.msra.mxu0 %v1153
          %1157 = vmatprep.subr.bf16.mxu0 0
          %1158 = vmatpush1.bf16.msra.mxu0 0
          %1159 = vmatprep.subr.bf16.mxu0 0
          %1160 = vmatpush1.bf16.msra.mxu0 0
          %1161 = vmatprep.subr.bf16.mxu0 0
          %1162 = vmatpush1.bf16.msra.mxu0 0
          %1163 = vmatprep.subr.bf16.mxu0 0
          %1164 = vmatpush1.bf16.msra.mxu0 0
          %1165 = vmatprep.subr.bf16.mxu0 0
          %1166 = vmatpush1.bf16.msra.mxu0 0
          %1167 = vmatprep.subr.bf16.mxu0 0
          %1168 = vmatpush1.bf16.msra.mxu0 0
          %1169 = vmatprep.subr.bf16.mxu0 0
          %1170 = vmatpush1.bf16.msra.mxu0 0
          %1171 = vmatprep.subr.bf16.mxu0 0
          %1172 = vmatpush1.bf16.msra.mxu0 0
          %1173 = vmatprep.subr.bf16.mxu0 0
          %1174 = vmatpush1.bf16.msra.mxu0 0
          %1175 = vmatprep.subr.bf16.mxu0 0
          %1176 = vmatpush1.bf16.msra.mxu0 0
          %1177 = vmatprep.subr.bf16.mxu0 0
          %1178 = vmatpush1.bf16.msra.mxu0 0
          %1179 = vmatprep.subr.bf16.mxu0 0
          %1180 = vmatpush1.bf16.msra.mxu0 0
          %1181 = vmatprep.subr.bf16.mxu0 0
          %1182 = vmatpush1.bf16.msra.mxu0 0
          %1183 = vmatprep.subr.bf16.mxu0 0
          %1184 = vmatpush1.bf16.msra.mxu0 0
          %1185 = vmatprep.subr.bf16.mxu0 0
          %1186 = vmatpush1.bf16.msra.mxu0 0
          %1187 = vmatprep.mubr.bf16.mxu0 0
          %1188 = vmatmul.mubr.bf16.gmra.mrb[0].mxu0 %v1150
          %v1189 = vpop.f32.mrb[0].mxu0
          %v1190 = vadd.f32 0.0, %v1189
          %v1191 = vpop.f32.mrb[0].mxu0
          %v1192 = vpop.f32.mrb[0].mxu0
          %v1193 = vpop.f32.mrb[0].mxu0
          %1194 = vdwg.mxu0
          %1196 = vrot.lane.b32.xlu0 %v1190, 16
          %v1197 = vpop.permute.xlu0 %1196
          %v1199 = vadd.f32 %v1145, %v1197
          %vm1200 = vcmask 195712
          %1201 = vst.msk [vmem:[#allocation5] sm:$0xff] %vm1200, %v1199
          %1202 = vst.msk [vmem:[%s1114] sm:$0xff] %vm853, %v1119
          %v1203 = vld [vmem:[#allocation2] sm:$0xf]
          %v1205 = vunpack.c.l.b16 %v1203
          %v1206 = vpack.c.b16 %v1205, %v1205
          %1207 = vrot.lane.b32.xlu0 %v1206, 104
          %v1208 = vpop.permute.xlu0 %1207
          %1209 = vrot.lane.b32.xlu0 %v706, 104
          %v1210 = vpop.permute.xlu0 %1209
          %v1212 = vsel %vm783, %v1208, 0
          %v1215 = vsel %vm783, %v1210, 0
          %1217 = vmatprep.subr.bf16.mxu0 0
          %1218 = vmatpush1.bf16.xpose.msra.mxu0 %v1215
          %1219 = vmatprep.subr.bf16.mxu0 0
          %1220 = vmatpush1.bf16.xpose.msra.mxu0 0
          %1221 = vmatprep.subr.bf16.mxu0 0
          %1222 = vmatpush1.bf16.xpose.msra.mxu0 0
          %1223 = vmatprep.subr.bf16.mxu0 0
          %1224 = vmatpush1.bf16.xpose.msra.mxu0 0
          %1225 = vmatprep.subr.bf16.mxu0 0
          %1226 = vmatpush1.bf16.xpose.msra.mxu0 0
          %1227 = vmatprep.subr.bf16.mxu0 0
          %1228 = vmatpush1.bf16.xpose.msra.mxu0 0
          %1229 = vmatprep.subr.bf16.mxu0 0
          %1230 = vmatpush1.bf16.xpose.msra.mxu0 0
          %1231 = vmatprep.subr.bf16.mxu0 0
          %1232 = vmatpush1.bf16.xpose.msra.mxu0 0
          %1233 = vmatprep.subr.bf16.mxu0 0
          %1234 = vmatpush1.bf16.xpose.msra.mxu0 0
          %1235 = vmatprep.subr.bf16.mxu0 0
          %1236 = vmatpush1.bf16.xpose.msra.mxu0 0
          %1237 = vmatprep.subr.bf16.mxu0 0
          %1238 = vmatpush1.bf16.xpose.msra.mxu0 0
          %1239 = vmatprep.subr.bf16.mxu0 0
          %1240 = vmatpush1.bf16.xpose.msra.mxu0 0
          %1241 = vmatprep.subr.bf16.mxu0 0
          %1242 = vmatpush1.bf16.xpose.msra.mxu0 0
          %1243 = vmatprep.subr.bf16.mxu0 0
          %1244 = vmatpush1.bf16.xpose.msra.mxu0 0
          %1245 = vmatprep.subr.bf16.mxu0 0
          %1246 = vmatpush1.bf16.xpose.msra.mxu0 0
          %1247 = vmatprep.subr.bf16.mxu0 0
          %1248 = vmatpush1.bf16.xpose.msra.mxu0 0
          %1249 = vmatprep.mubr.bf16.mxu0 0
          %1250 = vmatmul.mubr.bf16.gmra.mrb[0].mxu0 %v1212
          %v1251 = vpop.f32.mrb[0].mxu0
          %v1252 = vadd.f32 0.0, %v1251
          %v1253 = vpop.f32.mrb[0].mxu0
          %v1254 = vpop.f32.mrb[0].mxu0
          %v1255 = vpop.f32.mrb[0].mxu0
          %1256 = vdwg.mxu0
          %v1257 = vsel %vm781, %v1252, -inf
          %s1258 = scalar_lea.vmem [#allocation3], 24
          %v1259 = vld [vmem:[%s1258] sm:$0xff]
          %v1260 = vsel %vm783, %v1257, -inf
          %1261 = vmax.xlane.f32.xlu0 %v1260
          %v1262 = vpop.xlane.xlu0 %1261
          %v1263 = vmax.f32 %v1259, %v1262
          %v1264 = vsub.f32 %v1259, %v1263
          %v1265 = vmul.f32 %v1264, 1.442695
          %v1266 = vpow.pop %v1265
          %1268 = vset.pattern.permute.xlu0 0
          %1269 = vperm.xlu0 %1268, %v1263
          %v1270 = vpop.permute.xlu0 %1269
          %v1272 = vsub.f32 %v1257, %v1270
          %v1273 = vmul.f32 %v1272, 1.442695
          %v1274 = vpow.pop %v1273
          %s1275 = scalar_lea.vmem [#allocation4], 24
          %v1276 = vld [vmem:[%s1275] sm:$0xff]
          %v1277 = vmul.f32 %v1266, %v1276
          %v1278 = vsel %vm783, %v1274, 0.0
          %1279 = vadd.xlane.f32.xlu0 %v1278
          %v1280 = vpop.xlane.xlu0 %1279
          %v1281 = vadd.f32 %v1277, %v1280
          %1282 = vst.msk [vmem:[%s1275] sm:$0xff] %vm853, %v1281
          %v1283 = vld [vmem:[#allocation5] sm:$0xff]
          %1285 = vset.pattern.permute.xlu0 0
          %1286 = vperm.xlu0 %1285, %v1266
          %v1287 = vpop.permute.xlu0 %1286
          %v1289 = vmul.f32 %v1287, %v1283
          %v1290 = vpack.c.bf16 %v1274, %v1274
          %1291 = vrot.lane.b32.xlu0 %v770, 104
          %v1292 = vpop.permute.xlu0 %1291
          %v1294 = vsel %vm783, %v1290, 0
          %v1297 = vsel %vm866, %v1292, 0
          %1299 = vmatprep.subr.bf16.mxu0 0
          %1300 = vmatpush1.bf16.msra.mxu0 %v1297
          %1301 = vmatprep.subr.bf16.mxu0 0
          %1302 = vmatpush1.bf16.msra.mxu0 0
          %1303 = vmatprep.subr.bf16.mxu0 0
          %1304 = vmatpush1.bf16.msra.mxu0 0
          %1305 = vmatprep.subr.bf16.mxu0 0
          %1306 = vmatpush1.bf16.msra.mxu0 0
          %1307 = vmatprep.subr.bf16.mxu0 0
          %1308 = vmatpush1.bf16.msra.mxu0 0
          %1309 = vmatprep.subr.bf16.mxu0 0
          %1310 = vmatpush1.bf16.msra.mxu0 0
          %1311 = vmatprep.subr.bf16.mxu0 0
          %1312 = vmatpush1.bf16.msra.mxu0 0
          %1313 = vmatprep.subr.bf16.mxu0 0
          %1314 = vmatpush1.bf16.msra.mxu0 0
          %1315 = vmatprep.subr.bf16.mxu0 0
          %1316 = vmatpush1.bf16.msra.mxu0 0
          %1317 = vmatprep.subr.bf16.mxu0 0
          %1318 = vmatpush1.bf16.msra.mxu0 0
          %1319 = vmatprep.subr.bf16.mxu0 0
          %1320 = vmatpush1.bf16.msra.mxu0 0
          %1321 = vmatprep.subr.bf16.mxu0 0
          %1322 = vmatpush1.bf16.msra.mxu0 0
          %1323 = vmatprep.subr.bf16.mxu0 0
          %1324 = vmatpush1.bf16.msra.mxu0 0
          %1325 = vmatprep.subr.bf16.mxu0 0
          %1326 = vmatpush1.bf16.msra.mxu0 0
          %1327 = vmatprep.subr.bf16.mxu0 0
          %1328 = vmatpush1.bf16.msra.mxu0 0
          %1329 = vmatprep.subr.bf16.mxu0 0
          %1330 = vmatpush1.bf16.msra.mxu0 0
          %1331 = vmatprep.mubr.bf16.mxu0 0
          %1332 = vmatmul.mubr.bf16.gmra.mrb[0].mxu0 %v1294
          %v1333 = vpop.f32.mrb[0].mxu0
          %v1334 = vadd.f32 0.0, %v1333
          %v1335 = vpop.f32.mrb[0].mxu0
          %v1336 = vpop.f32.mrb[0].mxu0
          %v1337 = vpop.f32.mrb[0].mxu0
          %1338 = vdwg.mxu0
          %1340 = vrot.lane.b32.xlu0 %v1334, 24
          %v1341 = vpop.permute.xlu0 %1340
          %v1343 = vadd.f32 %v1289, %v1341
          %vm1344 = vcmask 261312
          %1345 = vst.msk [vmem:[#allocation5] sm:$0xff] %vm1344, %v1343
          %1346 = vst.msk [vmem:[%s1258] sm:$0xff] %vm853, %v1263
        $region108: #{tpu_custom_call.1} parent=59 // pred_fallthru
          _
        // Predicated region
        $region109: #{tpu_custom_call.1} parent=59 // pred_check
          %p1347 = pneg %p548
        $region110: #{tpu_custom_call.1} parent=59 // pred_check_branch
          %1349 = sbr.rel (%p1347) target = $region112
        $region111: #{tpu_custom_call.1} parent=59 // pred_region
          %v1350 = vld [vmem:[#allocation5] sm:$0xff]
          %v1351 = vld [vmem:[#allocation4] sm:$0xff]
          %v1352 = vrcp.pop %v1351
          %1354 = vset.pattern.permute.xlu0 0
          %1355 = vperm.xlu0 %1354, %v1352
          %v1356 = vpop.permute.xlu0 %1355
          %v1358 = vmul.f32 %v1350, %v1356
          %vm1359 = vcmask 64512
          %1360 = vst.msk [vmem:[#allocation5] sm:$0xff] %vm1359, %v1358
          %v1361 = vld [vmem:[#allocation5] sm:$0xff]
          %s1362 = scalar_lea.vmem [#allocation4], 8
          %v1363 = vld [vmem:[%s1362] sm:$0xff]
          %v1364 = vrcp.pop %v1363
          %1366 = vset.pattern.permute.xlu0 0
          %1367 = vperm.xlu0 %1366, %v1364
          %v1368 = vpop.permute.xlu0 %1367
          %v1370 = vmul.f32 %v1361, %v1368
          %vm1371 = vcmask 130112
          %1372 = vst.msk [vmem:[#allocation5] sm:$0xff] %vm1371, %v1370
          %v1373 = vld [vmem:[#allocation5] sm:$0xff]
          %s1374 = scalar_lea.vmem [#allocation4], 16
          %v1375 = vld [vmem:[%s1374] sm:$0xff]
          %v1376 = vrcp.pop %v1375
          %1378 = vset.pattern.permute.xlu0 0
          %1379 = vperm.xlu0 %1378, %v1376
          %v1380 = vpop.permute.xlu0 %1379
          %v1382 = vmul.f32 %v1373, %v1380
          %vm1383 = vcmask 195712
          %1384 = vst.msk [vmem:[#allocation5] sm:$0xff] %vm1383, %v1382
          %v1385 = vld [vmem:[#allocation5] sm:$0xff]
          %s1386 = scalar_lea.vmem [#allocation4], 24
          %v1387 = vld [vmem:[%s1386] sm:$0xff]
          %v1388 = vrcp.pop %v1387
          %1390 = vset.pattern.permute.xlu0 0
          %1391 = vperm.xlu0 %1390, %v1388
          %v1392 = vpop.permute.xlu0 %1391
          %v1394 = vmul.f32 %v1385, %v1392
          %vm1395 = vcmask 261312
          %1396 = vst.msk [vmem:[#allocation5] sm:$0xff] %vm1395, %v1394
          %v1397 = vld [vmem:[#allocation5] sm:$0xff]
          %v1398 = vpack.c.bf16 %v1397, %v1397
          %v1399 = vld [vmem:[#allocation20] sm:$0xf]
          %v1400 = vld [vmem:[#allocation20 + $0x4] sm:$0xf]
          %v1401 = vld [vmem:[#allocation20 + $0x8] sm:$0xf]
          %v1402 = vld [vmem:[#allocation20 + $0xc] sm:$0xf]
          %v1403 = vld [vmem:[#allocation21] sm:$0x1]
          %v1405 = vlaneseq
          %v1406 = vshrl.u32 %v1405, 7
          %v1407 = vsub.s32 0, %v1406
          %v1408 = vrot.slane %v1403, %v1407
          %v1414 = vunpack.c.l.b16 %v1399
          %v1415 = vunpack.c.l.b16 %v1400
          %v1416 = vunpack.c.l.b16 %v1401
          %v1417 = vunpack.c.l.b16 %v1402
          %v1418 = vpack.c.b16 %v1415, %v1414
          %v1419 = vpack.c.b16 %v1417, %v1416
          %vm1422 = vcmask 261120
          %v1424 = vsel %vm1422, %v1398, 0
          %1426 = vmatprep.subr.bf16.mxu0 0
          %1427 = vmatpush1.bf16.msra.mxu0 %v1418
          %1428 = vmatprep.subr.bf16.mxu0 0
          %1429 = vmatpush1.bf16.msra.mxu0 %v1419
          %1430 = vmatprep.subr.bf16.mxu0 0
          %1431 = vmatpush1.bf16.msra.mxu0 0
          %1432 = vmatprep.subr.bf16.mxu0 0
          %1433 = vmatpush1.bf16.msra.mxu0 0
          %1434 = vmatprep.subr.bf16.mxu0 0
          %1435 = vmatpush1.bf16.msra.mxu0 0
          %1436 = vmatprep.subr.bf16.mxu0 0
          %1437 = vmatpush1.bf16.msra.mxu0 0
          %1438 = vmatprep.subr.bf16.mxu0 0
          %1439 = vmatpush1.bf16.msra.mxu0 0
          %1440 = vmatprep.subr.bf16.mxu0 0
          %1441 = vmatpush1.bf16.msra.mxu0 0
          %1442 = vmatprep.subr.bf16.mxu0 0
          %1443 = vmatpush1.bf16.msra.mxu0 0
          %1444 = vmatprep.subr.bf16.mxu0 0
          %1445 = vmatpush1.bf16.msra.mxu0 0
          %1446 = vmatprep.subr.bf16.mxu0 0
          %1447 = vmatpush1.bf16.msra.mxu0 0
          %1448 = vmatprep.subr.bf16.mxu0 0
          %1449 = vmatpush1.bf16.msra.mxu0 0
          %1450 = vmatprep.subr.bf16.mxu0 0
          %1451 = vmatpush1.bf16.msra.mxu0 0
          %1452 = vmatprep.subr.bf16.mxu0 0
          %1453 = vmatpush1.bf16.msra.mxu0 0
          %1454 = vmatprep.subr.bf16.mxu0 0
          %1455 = vmatpush1.bf16.msra.mxu0 0
          %1456 = vmatprep.subr.bf16.mxu0 0
          %1457 = vmatpush1.bf16.msra.mxu0 0
          %1458 = vmatprep.mubr.bf16.mxu0 0
          %1459 = vmatmul.mubr.bf16.gmra.mrb[0].mxu0 %v1424
          %v1460 = vpop.f32.mrb[0].mxu0
          %v1461 = vadd.f32 %v1408, %v1460
          %v1462 = vpop.f32.mrb[0].mxu0
          %v1463 = vpop.f32.mrb[0].mxu0
          %v1464 = vpop.f32.mrb[0].mxu0
          %1465 = vdwg.mxu0
          %1466 = vst.msk [vmem:[%s546] sm:$0xff] %vm1422, %v1461
        $region112: #{tpu_custom_call.1} parent=59 // pred_fallthru
          _
        %s1467 = sand.u32 %s287, 1
        %s1468 = scalar_lea.sflag [#allocation8], %s1467
        %s1469 = sand.u32 %s287, 1
        %s1470 = smul.addr %s1469, 8
        %s1471 = scalar_lea.vmem [#allocation23], %s1470
        // Predicated region
        $region113: #{tpu_custom_call.1} parent=59 // pred_check
          %p1472 = pneg %p297
        $region114: #{tpu_custom_call.1} parent=59 // pred_check_branch
          %1474 = sbr.rel (%p1472) target = $region116
        $region115: #{tpu_custom_call.1} parent=59 // pred_region
          %s1476 = ssub.s32 128, 128
          %1477 = vsyncadd %s1468, %s1476
          %s1478 = sadd.s32 %s40, %s39
          %s1479 = smul.addr %s1478, 128
          %s1480 = scalar_lea.hbm %s10, %s1479
          %s1482 = sshll.u32 %s1471, 4
          %s1483 = int_to_ptr.vmem [resolvable:$true] %s1482
          %1485 = dma.vmem_to_hbm [thread:$0]  %s1483, 128, %s1480, %s1468
        $region116: #{tpu_custom_call.1} parent=59 // pred_fallthru
          _
      $region60: #{tpu_custom_call.1} parent=5 // pred_fallthru
        _
      %p1486 = scmp.le.s32.totalorder 2, %s29
      // Predicated region
      $region117: #{tpu_custom_call.1} parent=5 // pred_check
        %p1487 = pneg %p1486
      $region118: #{tpu_custom_call.1} parent=5 // pred_check_branch
        %1489 = sbr.rel (%p1487) target = $region120
      $region119: #{tpu_custom_call.1} parent=5 // pred_region
        %s1490 = ssub.s32 %s29, 2
        // Predicated region
        $region121: #{tpu_custom_call.1} parent=119 // pred_check
          %p1491 = pneg %p303
        $region122: #{tpu_custom_call.1} parent=119 // pred_check_branch
          %1493 = sbr.rel (%p1491) target = $region124
        $region123: #{tpu_custom_call.1} parent=119 // pred_region
          %s1494 = sand.u32 %s288, 1
          %s1495 = scalar_lea.sflag [#allocation8], %s1494
          %s1496 = sand.u32 %s288, 1
          %s1497 = smul.addr %s1496, 8
          %s1498 = scalar_lea.vmem [#allocation23], %s1497
          %1499 = dma.done %s1495, 128
        $region124: #{tpu_custom_call.1} parent=119 // pred_fallthru
          _
      $region120: #{tpu_custom_call.1} parent=5 // pred_fallthru
        _
    $region6: #{tpu_custom_call.1} parent=1 // loop_footer
      %s33 = sadd.s32 1, %s29
    $region7: #{tpu_custom_call.1} parent=1 // loop_footer_branch
      %28 = sbr.rel target = $region3
    $region8: #{tpu_custom_call.1} parent=1 // loop_exit
      _
    %1500 = vsyncpa [#allocation7], 1
    %s1501 = scalar_lea.sflag [#allocation7], 1
    %1502 = vsyncpa %s1501, 1
    %1503 = vsyncpa [#allocation10], 1
    %s1504 = scalar_lea.sflag [#allocation10], 1
    %1505 = vsyncpa %s1504, 1
    %1506 = vsyncpa [#allocation13], 1
    %1507 = vsyncpa [#allocation16], 1
    %1508 = vsyncpa [#allocation19], 1
    %1509 = vsyncpa [#allocation22], 1
    %1510 = vsyncpa [#allocation8], 1
    %s1511 = scalar_lea.sflag [#allocation8], 1
    %1512 = vsyncpa %s1511, 1

// kernel: tpu_custom_call.1
$region0: #{tpu_custom_call.1}
  #allocation0 [shape = 'u32[]', space=smem, size = 0x4, offset = 0x4, fixed_abs, tag = 'smem constant byte address 0x4 - core index']
  #allocation1 [shape = 'u32[144,128]{1,0:T(1,128)}', space=vmem, size = 0x12000, scoped, tag = 'internal scratch']
  #allocation2 [shape = 'bf16[8,32]{1,0:T(8,128)(2,1)}', space=vmem, size = 0x800, scoped, tag = 'scratch operand']
  #allocation3 [shape = 'f32[4,8,1]{2,1,0:T(8,128)}', space=vmem, size = 0x4000, scoped, tag = 'scratch operand']
  #allocation4 [shape = 'f32[4,8,1]{2,1,0:T(8,128)}', space=vmem, size = 0x4000, scoped, tag = 'scratch operand']
  #allocation5 [shape = 'f32[8,32]{1,0:T(8,128)}', space=vmem, size = 0x1000, scoped, tag = 'scratch operand']
  %s0 = inlined_call_operand.hbm [shape: bf16[2,8,32], index: 0, kind: input, shape index: {}]
  %s1 = inlined_call_operand.hbm [shape: bf16[2,8,32], index: 1, kind: input, shape index: {}]
  %s2 = inlined_call_operand.hbm [shape: bf16[32,32], index: 2, kind: input, shape index: {}]
  %s3 = inlined_call_operand.hbm [shape: f32[1,32], index: 3, kind: input, shape index: {}]
  %s4 = inlined_call_operand.hbm [shape: bf16[32,32], index: 4, kind: input, shape index: {}]
  %s5 = inlined_call_operand.hbm [shape: f32[1,32], index: 5, kind: input, shape index: {}]
  %s6 = inlined_call_operand.hbm [shape: bf16[32,32], index: 6, kind: input, shape index: {}]
  %s7 = inlined_call_operand.hbm [shape: f32[1,32], index: 7, kind: input, shape index: {}]
  %s8 = inlined_call_operand.hbm [shape: bf16[32,32], index: 8, kind: input, shape index: {}]
  %s9 = inlined_call_operand.hbm [shape: f32[1,32], index: 9, kind: input, shape index: {}]
  %s10 = inlined_call_operand.hbm [shape: f32[2,8,32], index: 10, kind: output, shape index: {}]
  %s11 = sld [smem:[#allocation0]]
  $region125: #{tpu_custom_call.1} parent=0
    _
  %s13 = ssub.s32 1, %s11
  %s14 = scalar_select 0, %s13, %s11
  $region1: #{tpu_custom_call.1} parent=0
    #allocation6 [shape = 'u8[4096]{0}', space=vmem, size = 0x1000, scoped, tag = 'input window, operand 0']
    #allocation7 [shape = 's32[2]{0}', space=sflag, size = 0x8, scoped, tag = 'scoped memory for tpu_custom_call.1']
    #allocation8 [shape = 's32[2]{0}', space=sflag, size = 0x8, scoped, tag = 'scoped memory for tpu_custom_call.1']
    #allocation9 [shape = 'u8[4096]{0}', space=vmem, size = 0x1000, scoped, tag = 'input window, operand 1']
    #allocation10 [shape = 's32[2]{0}', space=sflag, size = 0x8, scoped, tag = 'scoped memory for tpu_custom_call.1']
    #allocation11 [shape = 'u8[8192]{0}', space=vmem, size = 0x2000, scoped, tag = 'input window, operand 2, single buffered']
    #allocation12 [shape = 'u8[512]{0}', space=vmem, size = 0x400, scoped, tag = 'input window, operand 3, single buffered']
    #allocation13 [shape = 's32[1]{0}', space=sflag, size = 0x4, scoped, tag = 'scoped memory for tpu_custom_call.1']
    #allocation14 [shape = 'u8[8192]{0}', space=vmem, size = 0x2000, scoped, tag = 'input window, operand 4, single buffered']
    #allocation15 [shape = 'u8[512]{0}', space=vmem, size = 0x400, scoped, tag = 'input window, operand 5, single buffered']
    #allocation16 [shape = 's32[1]{0}', space=sflag, size = 0x4, scoped, tag = 'scoped memory for tpu_custom_call.1']
    #allocation17 [shape = 'u8[8192]{0}', space=vmem, size = 0x2000, scoped, tag = 'input window, operand 6, single buffered']
    #allocation18 [shape = 'u8[512]{0}', space=vmem, size = 0x400, scoped, tag = 'input window, operand 7, single buffered']
    #allocation19 [shape = 's32[1]{0}', space=sflag, size = 0x4, scoped, tag = 'scoped memory for tpu_custom_call.1']
    #allocation20 [shape = 'u8[8192]{0}', space=vmem, size = 0x2000, scoped, tag = 'input window, operand 8, single buffered']
    #allocation21 [shape = 'u8[512]{0}', space=vmem, size = 0x400, scoped, tag = 'input window, operand 9, single buffered']
    #allocation22 [shape = 's32[1]{0}', space=sflag, size = 0x4, scoped, tag = 'scoped memory for tpu_custom_call.1']
    #allocation23 [shape = 'u8[8192]{0}', space=vmem, size = 0x2000, scoped, tag = 'output window, operand 0']
    %15 = vsyncpa [#allocation7], 0
    %s16 = scalar_lea.sflag [#allocation7], 1
    %17 = vsyncpa %s16, 0
    %18 = vsyncpa [#allocation10], 0
    %s19 = scalar_lea.sflag [#allocation10], 1
    %20 = vsyncpa %s19, 0
    %21 = vsyncpa [#allocation13], 0
    %22 = vsyncpa [#allocation16], 0
    %23 = vsyncpa [#allocation19], 0
    %24 = vsyncpa [#allocation22], 0
    %25 = vsyncpa [#allocation8], 0
    %s26 = scalar_lea.sflag [#allocation8], 1
    %27 = vsyncpa %s26, 0
    loop: start=0, step=1, limit=4
    $region2: #{tpu_custom_call.1} parent=1 // loop_pre_header
      _
    $region3: #{tpu_custom_call.1} parent=1 // loop_header
      %s29 = sphi 0, %s33
      %p30 = scmp.ge.s32.totalorder %s29, 4
      %s36 = sphi 0, %s55
      %s37 = sphi 0, %s51
      %s38 = sphi 0, %s47
      %s39 = sphi 0, %s36
      %s40 = sphi 0, %s37
      %s41 = sphi 0, %s38
      %s42 = sphi 0, %s39
      %s43 = sphi 0, %s40
      %s44 = sphi 0, %s41
      %s60 = sphi 0, %s62
      %s63 = sphi 0, %s60
      %s64 = sphi 0, %s63
      %s80 = sphi 0, %s64
      %s88 = sphi 0, %s90
      %s91 = sphi 0, %s88
      %s92 = sphi 0, %s91
      %s108 = sphi 0, %s92
      %s112 = sphi 0, %s112
      %s114 = sphi 0, %s112
      %s115 = sphi 0, %s114
      %s129 = sphi 0, %s115
      %s133 = sphi 0, %s133
      %s135 = sphi 0, %s133
      %s136 = sphi 0, %s135
      %s150 = sphi 0, %s136
      %s154 = sphi 0, %s154
      %s156 = sphi 0, %s154
      %s157 = sphi 0, %s156
      %s171 = sphi 0, %s157
      %s175 = sphi 0, %s175
      %s177 = sphi 0, %s175
      %s178 = sphi 0, %s177
      %s192 = sphi 0, %s178
      %s196 = sphi 0, %s196
      %s198 = sphi 0, %s196
      %s199 = sphi 0, %s198
      %s213 = sphi 0, %s199
      %s217 = sphi 0, %s217
      %s219 = sphi 0, %s217
      %s220 = sphi 0, %s219
      %s234 = sphi 0, %s220
      %s238 = sphi 0, %s238
      %s240 = sphi 0, %s238
      %s241 = sphi 0, %s240
      %s255 = sphi 0, %s241
      %s259 = sphi 0, %s259
      %s261 = sphi 0, %s259
      %s262 = sphi 0, %s261
      %s276 = sphi 0, %s262
      %s284 = sphi 0, %s286
      %s287 = sphi 0, %s284
      %s288 = sphi 0, %s287
      %s304 = sphi 0, %s288
    $region4: #{tpu_custom_call.1} parent=1 // loop_header_branch
      %32 = sbr.rel (%p30) target = $region8
    $region5: #{tpu_custom_call.1} parent=1 // loop_body
      %s34 = ssub.s32 %s29, 1
      %s35 = ssub.s32 %s29, 2
      %s45 = sadd.s32 1, %s38
      %p46 = scmp.ge.s32.totalorder %s45, 1
      %s47 = scalar_select %p46, 0, %s45
      %s48 = sadd.s32 1, %s37
      %s49 = scalar_select %p46, %s48, %s37
      %p50 = scmp.ge.s32.totalorder %s49, 1
      %s51 = scalar_select %p50, 0, %s49
      %s52 = sadd.s32 1, %s36
      %s53 = scalar_select %p50, %s52, %s36
      %p54 = scmp.ge.s32.totalorder %s53, 2
      %s55 = scalar_select %p54, 0, %s53
      %s56 = ssub.s32 %s36, %s55
      %s57 = ssub.s32 %s37, %s51
      %s58 = sor.u32 %s56, %s57
      %p59 = scmp.eq.s32.totalorder %s58, 0
      %s61 = sadd.s32 %s60, 1
      %s62 = scalar_select %p59, %s60, %s61
      %p65 = pneg %p59
      %p66 = scmp.eq.s32.totalorder %s29, 1
      %p67 = por %p65, %p66
      %p68 = scmp.ne.s32.totalorder %s60, %s63
      %p69 = scmp.eq.s32.totalorder %s29, 0
      %p70 = por %p68, %p69
      %p71 = scmp.ne.s32.totalorder %s60, %s63
      %p72 = scmp.eq.s32.totalorder %s34, 1
      %p73 = por %p71, %p72
      %p74 = scmp.ne.s32.totalorder %s63, %s64
      %p75 = scmp.eq.s32.totalorder %s34, 0
      %p76 = por %p74, %p75
      %p77 = scmp.ne.s32.totalorder %s63, %s64
      %p78 = scmp.eq.s32.totalorder %s35, 1
      %p79 = por %p77, %p78
      %p81 = scmp.ne.s32.totalorder %s64, %s80
      %p82 = scmp.eq.s32.totalorder %s35, 0
      %p83 = por %p81, %p82
      %s84 = ssub.s32 %s36, %s55
      %s85 = ssub.s32 %s38, %s47
      %s86 = sor.u32 %s84, %s85
      %p87 = scmp.eq.s32.totalorder %s86, 0
      %s89 = sadd.s32 %s88, 1
      %s90 = scalar_select %p87, %s88, %s89
      %p93 = pneg %p87
      %p94 = scmp.eq.s32.totalorder %s29, 1
      %p95 = por %p93, %p94
      %p96 = scmp.ne.s32.totalorder %s88, %s91
      %p97 = scmp.eq.s32.totalorder %s29, 0
      %p98 = por %p96, %p97
      %p99 = scmp.ne.s32.totalorder %s88, %s91
      %p100 = scmp.eq.s32.totalorder %s34, 1
      %p101 = por %p99, %p100
      %p102 = scmp.ne.s32.totalorder %s91, %s92
      %p103 = scmp.eq.s32.totalorder %s34, 0
      %p104 = por %p102, %p103
      %p105 = scmp.ne.s32.totalorder %s91, %s92
      %p106 = scmp.eq.s32.totalorder %s35, 1
      %p107 = por %p105, %p106
      %p109 = scmp.ne.s32.totalorder %s92, %s108
      %p110 = scmp.eq.s32.totalorder %s35, 0
      %p111 = por %p109, %p110
      %s113 = sadd.s32 %s112, 1
      %p116 = scmp.eq.s32.totalorder %s29, 1
      %p117 = scmp.ne.s32.totalorder %s112, %s114
      %p118 = scmp.eq.s32.totalorder %s29, 0
      %p119 = por %p117, %p118
      %p120 = scmp.ne.s32.totalorder %s112, %s114
      %p121 = scmp.eq.s32.totalorder %s34, 1
      %p122 = por %p120, %p121
      %p123 = scmp.ne.s32.totalorder %s114, %s115
      %p124 = scmp.eq.s32.totalorder %s34, 0
      %p125 = por %p123, %p124
      %p126 = scmp.ne.s32.totalorder %s114, %s115
      %p127 = scmp.eq.s32.totalorder %s35, 1
      %p128 = por %p126, %p127
      %p130 = scmp.ne.s32.totalorder %s115, %s129
      %p131 = scmp.eq.s32.totalorder %s35, 0
      %p132 = por %p130, %p131
      %s134 = sadd.s32 %s133, 1
      %p137 = scmp.eq.s32.totalorder %s29, 1
      %p138 = scmp.ne.s32.totalorder %s133, %s135
      %p139 = scmp.eq.s32.totalorder %s29, 0
      %p140 = por %p138, %p139
      %p141 = scmp.ne.s32.totalorder %s133, %s135
      %p142 = scmp.eq.s32.totalorder %s34, 1
      %p143 = por %p141, %p142
      %p144 = scmp.ne.s32.totalorder %s135, %s136
      %p145 = scmp.eq.s32.totalorder %s34, 0
      %p146 = por %p144, %p145
      %p147 = scmp.ne.s32.totalorder %s135, %s136
      %p148 = scmp.eq.s32.totalorder %s35, 1
      %p149 = por %p147, %p148
      %p151 = scmp.ne.s32.totalorder %s136, %s150
      %p152 = scmp.eq.s32.totalorder %s35, 0
      %p153 = por %p151, %p152
      %s155 = sadd.s32 %s154, 1
      %p158 = scmp.eq.s32.totalorder %s29, 1
      %p159 = scmp.ne.s32.totalorder %s154, %s156
      %p160 = scmp.eq.s32.totalorder %s29, 0
      %p161 = por %p159, %p160
      %p162 = scmp.ne.s32.totalorder %s154, %s156
      %p163 = scmp.eq.s32.totalorder %s34, 1
      %p164 = por %p162, %p163
      %p165 = scmp.ne.s32.totalorder %s156, %s157
      %p166 = scmp.eq.s32.totalorder %s34, 0
      %p167 = por %p165, %p166
      %p168 = scmp.ne.s32.totalorder %s156, %s157
      %p169 = scmp.eq.s32.totalorder %s35, 1
      %p170 = por %p168, %p169
      %p172 = scmp.ne.s32.totalorder %s157, %s171
      %p173 = scmp.eq.s32.totalorder %s35, 0
      %p174 = por %p172, %p173
      %s176 = sadd.s32 %s175, 1
      %p179 = scmp.eq.s32.totalorder %s29, 1
      %p180 = scmp.ne.s32.totalorder %s175, %s177
      %p181 = scmp.eq.s32.totalorder %s29, 0
      %p182 = por %p180, %p181
      %p183 = scmp.ne.s32.totalorder %s175, %s177
      %p184 = scmp.eq.s32.totalorder %s34, 1
      %p185 = por %p183, %p184
      %p186 = scmp.ne.s32.totalorder %s177, %s178
      %p187 = scmp.eq.s32.totalorder %s34, 0
      %p188 = por %p186, %p187
      %p189 = scmp.ne.s32.totalorder %s177, %s178
      %p190 = scmp.eq.s32.totalorder %s35, 1
      %p191 = por %p189, %p190
      %p193 = scmp.ne.s32.totalorder %s178, %s192
      %p194 = scmp.eq.s32.totalorder %s35, 0
      %p195 = por %p193, %p194
      %s197 = sadd.s32 %s196, 1
      %p200 = scmp.eq.s32.totalorder %s29, 1
      %p201 = scmp.ne.s32.totalorder %s196, %s198
      %p202 = scmp.eq.s32.totalorder %s29, 0
      %p203 = por %p201, %p202
      %p204 = scmp.ne.s32.totalorder %s196, %s198
      %p205 = scmp.eq.s32.totalorder %s34, 1
      %p206 = por %p204, %p205
      %p207 = scmp.ne.s32.totalorder %s198, %s199
      %p208 = scmp.eq.s32.totalorder %s34, 0
      %p209 = por %p207, %p208
      %p210 = scmp.ne.s32.totalorder %s198, %s199
      %p211 = scmp.eq.s32.totalorder %s35, 1
      %p212 = por %p210, %p211
      %p214 = scmp.ne.s32.totalorder %s199, %s213
      %p215 = scmp.eq.s32.totalorder %s35, 0
      %p216 = por %p214, %p215
      %s218 = sadd.s32 %s217, 1
      %p221 = scmp.eq.s32.totalorder %s29, 1
      %p222 = scmp.ne.s32.totalorder %s217, %s219
      %p223 = scmp.eq.s32.totalorder %s29, 0
      %p224 = por %p222, %p223
      %p225 = scmp.ne.s32.totalorder %s217, %s219
      %p226 = scmp.eq.s32.totalorder %s34, 1
      %p227 = por %p225, %p226
      %p228 = scmp.ne.s32.totalorder %s219, %s220
      %p229 = scmp.eq.s32.totalorder %s34, 0
      %p230 = por %p228, %p229
      %p231 = scmp.ne.s32.totalorder %s219, %s220
      %p232 = scmp.eq.s32.totalorder %s35, 1
      %p233 = por %p231, %p232
      %p235 = scmp.ne.s32.totalorder %s220, %s234
      %p236 = scmp.eq.s32.totalorder %s35, 0
      %p237 = por %p235, %p236
      %s239 = sadd.s32 %s238, 1
      %p242 = scmp.eq.s32.totalorder %s29, 1
      %p243 = scmp.ne.s32.totalorder %s238, %s240
      %p244 = scmp.eq.s32.totalorder %s29, 0
      %p245 = por %p243, %p244
      %p246 = scmp.ne.s32.totalorder %s238, %s240
      %p247 = scmp.eq.s32.totalorder %s34, 1
      %p248 = por %p246, %p247
      %p249 = scmp.ne.s32.totalorder %s240, %s241
      %p250 = scmp.eq.s32.totalorder %s34, 0
      %p251 = por %p249, %p250
      %p252 = scmp.ne.s32.totalorder %s240, %s241
      %p253 = scmp.eq.s32.totalorder %s35, 1
      %p254 = por %p252, %p253
      %p256 = scmp.ne.s32.totalorder %s241, %s255
      %p257 = scmp.eq.s32.totalorder %s35, 0
      %p258 = por %p256, %p257
      %s260 = sadd.s32 %s259, 1
      %p263 = scmp.eq.s32.totalorder %s29, 1
      %p264 = scmp.ne.s32.totalorder %s259, %s261
      %p265 = scmp.eq.s32.totalorder %s29, 0
      %p266 = por %p264, %p265
      %p267 = scmp.ne.s32.totalorder %s259, %s261
      %p268 = scmp.eq.s32.totalorder %s34, 1
      %p269 = por %p267, %p268
      %p270 = scmp.ne.s32.totalorder %s261, %s262
      %p271 = scmp.eq.s32.totalorder %s34, 0
      %p272 = por %p270, %p271
      %p273 = scmp.ne.s32.totalorder %s261, %s262
      %p274 = scmp.eq.s32.totalorder %s35, 1
      %p275 = por %p273, %p274
      %p277 = scmp.ne.s32.totalorder %s262, %s276
      %p278 = scmp.eq.s32.totalorder %s35, 0
      %p279 = por %p277, %p278
      %s280 = ssub.s32 %s36, %s55
      %s281 = ssub.s32 %s37, %s51
      %s282 = sor.u32 %s280, %s281
      %p283 = scmp.eq.s32.totalorder %s282, 0
      %s285 = sadd.s32 %s284, 1
      %s286 = scalar_select %p283, %s284, %s285
      %p289 = pneg %p283
      %p290 = scmp.eq.s32.totalorder %s29, 1
      %p291 = por %p289, %p290
      %p292 = scmp.ne.s32.totalorder %s284, %s287
      %p293 = scmp.eq.s32.totalorder %s29, 0
      %p294 = por %p292, %p293
      %p295 = scmp.ne.s32.totalorder %s284, %s287
      %p296 = scmp.eq.s32.totalorder %s34, 1
      %p297 = por %p295, %p296
      %p298 = scmp.ne.s32.totalorder %s287, %s288
      %p299 = scmp.eq.s32.totalorder %s34, 0
      %p300 = por %p298, %p299
      %p301 = scmp.ne.s32.totalorder %s287, %s288
      %p302 = scmp.eq.s32.totalorder %s35, 1
      %p303 = por %p301, %p302
      %p305 = scmp.ne.s32.totalorder %s288, %s304
      %p306 = scmp.eq.s32.totalorder %s35, 0
      %p307 = por %p305, %p306
      %p308 = scmp.le.s32.totalorder 1, %s29
      %p309 = scmp.lt.s32.totalorder %s29, 3
      %p310 = pnand %p308, %p309
      %p311 = pneg %p310
      // Predicated region
      $region9: #{tpu_custom_call.1} parent=5 // pred_check
        _
      $region10: #{tpu_custom_call.1} parent=5 // pred_check_branch
        %313 = sbr.rel (%p310) target = $region12
      $region11: #{tpu_custom_call.1} parent=5 // pred_region
        %s314 = ssub.s32 %s29, 1
        // Predicated region
        $region13: #{tpu_custom_call.1} parent=11 // pred_check
          %p315 = pneg %p125
        $region14: #{tpu_custom_call.1} parent=11 // pred_check_branch
          %317 = sbr.rel (%p315) target = $region16
        $region15: #{tpu_custom_call.1} parent=11 // pred_region
          %s319 = ssub.s32 256, 256
          %320 = vsyncadd [#allocation10], %s319
          %s321 = sshll.u32 [#allocation11], 4
          %s322 = int_to_ptr.vmem [resolvable:$true] %s321
          %327 = dma.hbm_to_vmem [thread:$0]  %s2, 256, %s322, [#allocation10], 64, 64, 4
        $region16: #{tpu_custom_call.1} parent=11 // pred_fallthru
          _
        // Predicated region
        $region17: #{tpu_custom_call.1} parent=11 // pred_check
          %p328 = pneg %p146
        $region18: #{tpu_custom_call.1} parent=11 // pred_check_branch
          %330 = sbr.rel (%p328) target = $region20
        $region19: #{tpu_custom_call.1} parent=11 // pred_region
          %s332 = ssub.s32 16, 16
          %333 = vsyncadd [#allocation13], %s332
          %s335 = sshll.u32 [#allocation12], 4
          %s336 = int_to_ptr.vmem [resolvable:$true] %s335
          %338 = dma.hbm_to_vmem [thread:$0]  %s3, 16, %s336, [#allocation13]
        $region20: #{tpu_custom_call.1} parent=11 // pred_fallthru
          _
        // Predicated region
        $region21: #{tpu_custom_call.1} parent=11 // pred_check
          %p339 = pneg %p167
        $region22: #{tpu_custom_call.1} parent=11 // pred_check_branch
          %341 = sbr.rel (%p339) target = $region24
        $region23: #{tpu_custom_call.1} parent=11 // pred_region
          %s343 = ssub.s32 256, 256
          %344 = vsyncadd [#allocation13], %s343
          %s345 = sshll.u32 [#allocation14], 4
          %s346 = int_to_ptr.vmem [resolvable:$true] %s345
          %351 = dma.hbm_to_vmem [thread:$0]  %s4, 256, %s346, [#allocation13], 64, 64, 4
        $region24: #{tpu_custom_call.1} parent=11 // pred_fallthru
          _
        // Predicated region
        $region25: #{tpu_custom_call.1} parent=11 // pred_check
          %p352 = pneg %p188
        $region26: #{tpu_custom_call.1} parent=11 // pred_check_branch
          %354 = sbr.rel (%p352) target = $region28
        $region27: #{tpu_custom_call.1} parent=11 // pred_region
          %s356 = ssub.s32 16, 16
          %357 = vsyncadd [#allocation16], %s356
          %s359 = sshll.u32 [#allocation15], 4
          %s360 = int_to_ptr.vmem [resolvable:$true] %s359
          %362 = dma.hbm_to_vmem [thread:$0]  %s5, 16, %s360, [#allocation16]
        $region28: #{tpu_custom_call.1} parent=11 // pred_fallthru
          _
        // Predicated region
        $region29: #{tpu_custom_call.1} parent=11 // pred_check
          %p363 = pneg %p209
        $region30: #{tpu_custom_call.1} parent=11 // pred_check_branch
          %365 = sbr.rel (%p363) target = $region32
        $region31: #{tpu_custom_call.1} parent=11 // pred_region
          %s367 = ssub.s32 256, 256
          %368 = vsyncadd [#allocation16], %s367
          %s369 = sshll.u32 [#allocation17], 4
          %s370 = int_to_ptr.vmem [resolvable:$true] %s369
          %375 = dma.hbm_to_vmem [thread:$0]  %s6, 256, %s370, [#allocation16], 64, 64, 4
        $region32: #{tpu_custom_call.1} parent=11 // pred_fallthru
          _
        // Predicated region
        $region33: #{tpu_custom_call.1} parent=11 // pred_check
          %p376 = pneg %p230
        $region34: #{tpu_custom_call.1} parent=11 // pred_check_branch
          %378 = sbr.rel (%p376) target = $region36
        $region35: #{tpu_custom_call.1} parent=11 // pred_region
          %s380 = ssub.s32 16, 16
          %381 = vsyncadd [#allocation19], %s380
          %s383 = sshll.u32 [#allocation18], 4
          %s384 = int_to_ptr.vmem [resolvable:$true] %s383
          %386 = dma.hbm_to_vmem [thread:$0]  %s7, 16, %s384, [#allocation19]
        $region36: #{tpu_custom_call.1} parent=11 // pred_fallthru
          _
        // Predicated region
        $region37: #{tpu_custom_call.1} parent=11 // pred_check
          %p387 = pneg %p251
        $region38: #{tpu_custom_call.1} parent=11 // pred_check_branch
          %389 = sbr.rel (%p387) target = $region40
        $region39: #{tpu_custom_call.1} parent=11 // pred_region
          %s391 = ssub.s32 256, 256
          %392 = vsyncadd [#allocation19], %s391
          %s393 = sshll.u32 [#allocation20], 4
          %s394 = int_to_ptr.vmem [resolvable:$true] %s393
          %399 = dma.hbm_to_vmem [thread:$0]  %s8, 256, %s394, [#allocation19], 64, 64, 4
        $region40: #{tpu_custom_call.1} parent=11 // pred_fallthru
          _
        // Predicated region
        $region41: #{tpu_custom_call.1} parent=11 // pred_check
          %p400 = pneg %p272
        $region42: #{tpu_custom_call.1} parent=11 // pred_check_branch
          %402 = sbr.rel (%p400) target = $region44
        $region43: #{tpu_custom_call.1} parent=11 // pred_region
          %s404 = ssub.s32 16, 16
          %405 = vsyncadd [#allocation22], %s404
          %s407 = sshll.u32 [#allocation21], 4
          %s408 = int_to_ptr.vmem [resolvable:$true] %s407
          %410 = dma.hbm_to_vmem [thread:$0]  %s9, 16, %s408, [#allocation22]
        $region44: #{tpu_custom_call.1} parent=11 // pred_fallthru
          _
      $region12: #{tpu_custom_call.1} parent=5 // pred_fallthru
        _
      %p411 = scmp.lt.s32.totalorder %s29, 2
      // Predicated region
      $region45: #{tpu_custom_call.1} parent=5 // pred_check
        %p412 = pneg %p411
      $region46: #{tpu_custom_call.1} parent=5 // pred_check_branch
        %414 = sbr.rel (%p412) target = $region48
      $region47: #{tpu_custom_call.1} parent=5 // pred_region
        // Predicated region
        $region49: #{tpu_custom_call.1} parent=47 // pred_check
          %p415 = pneg %p70
        $region50: #{tpu_custom_call.1} parent=47 // pred_check_branch
          %417 = sbr.rel (%p415) target = $region52
        $region51: #{tpu_custom_call.1} parent=47 // pred_region
          %s418 = sand.u32 %s60, 1
          %s419 = scalar_lea.sflag [#allocation7], %s418
          %s420 = sand.u32 %s60, 1
          %s421 = smul.addr %s420, 4
          %s422 = scalar_lea.vmem [#allocation6], %s421
          %s424 = ssub.s32 64, 64
          %425 = vsyncadd %s419, %s424
          %s426 = sadd.s32 %s37, %s36
          %s427 = smul.addr %s426, 64
          %s428 = scalar_lea.hbm %s0, %s427
          %s430 = sshll.u32 %s422, 4
          %s431 = int_to_ptr.vmem [resolvable:$true] %s430
          %433 = dma.hbm_to_vmem [thread:$0]  %s428, 64, %s431, %s419
        $region52: #{tpu_custom_call.1} parent=47 // pred_fallthru
          _
        // Predicated region
        $region53: #{tpu_custom_call.1} parent=47 // pred_check
          %p434 = pneg %p98
        $region54: #{tpu_custom_call.1} parent=47 // pred_check_branch
          %436 = sbr.rel (%p434) target = $region56
        $region55: #{tpu_custom_call.1} parent=47 // pred_region
          %s437 = sand.u32 %s29, 1
          %s438 = scalar_lea.sflag [#allocation10], %s437
          %s439 = sand.u32 %s88, 1
          %s440 = smul.addr %s439, 4
          %s441 = scalar_lea.vmem [#allocation9], %s440
          %s443 = ssub.s32 64, 64
          %444 = vsyncadd %s438, %s443
          %s445 = sadd.s32 %s38, %s36
          %s446 = smul.addr %s445, 64
          %s447 = scalar_lea.hbm %s1, %s446
          %s449 = sshll.u32 %s441, 4
          %s450 = int_to_ptr.vmem [resolvable:$true] %s449
          %452 = dma.hbm_to_vmem [thread:$0]  %s447, 64, %s450, %s438
        $region56: #{tpu_custom_call.1} parent=47 // pred_fallthru
          _
      $region48: #{tpu_custom_call.1} parent=5 // pred_fallthru
        _
      %p453 = scmp.le.s32.totalorder 1, %s29
      %p454 = scmp.lt.s32.totalorder %s29, 3
      %p455 = pnand %p453, %p454
      %p456 = pneg %p455
      // Predicated region
      $region57: #{tpu_custom_call.1} parent=5 // pred_check
        _
      $region58: #{tpu_custom_call.1} parent=5 // pred_check_branch
        %458 = sbr.rel (%p455) target = $region60
      $region59: #{tpu_custom_call.1} parent=5 // pred_region
        %s459 = ssub.s32 %s29, 1
        %s460 = sand.u32 %s63, 1
        %s461 = scalar_lea.sflag [#allocation7], %s460
        %s462 = sand.u32 %s63, 1
        %s463 = smul.addr %s462, 4
        %s464 = scalar_lea.vmem [#allocation6], %s463
        // Predicated region
        $region61: #{tpu_custom_call.1} parent=59 // pred_check
          %p465 = pneg %p76
        $region62: #{tpu_custom_call.1} parent=59 // pred_check_branch
          %467 = sbr.rel (%p465) target = $region64
        $region63: #{tpu_custom_call.1} parent=59 // pred_region
          %468 = dma.done %s461, 64
        $region64: #{tpu_custom_call.1} parent=59 // pred_fallthru
          _
        %s469 = sand.u32 %s34, 1
        %s470 = scalar_lea.sflag [#allocation10], %s469
        %s471 = sand.u32 %s91, 1
        %s472 = smul.addr %s471, 4
        %s473 = scalar_lea.vmem [#allocation9], %s472
        // Predicated region
        $region65: #{tpu_custom_call.1} parent=59 // pred_check
          %p474 = pneg %p104
        $region66: #{tpu_custom_call.1} parent=59 // pred_check_branch
          %476 = sbr.rel (%p474) target = $region68
        $region67: #{tpu_custom_call.1} parent=59 // pred_region
          %477 = dma.done %s470, 64
        $region68: #{tpu_custom_call.1} parent=59 // pred_fallthru
          _
        // Predicated region
        $region69: #{tpu_custom_call.1} parent=59 // pred_check
          %p478 = pneg %p125
        $region70: #{tpu_custom_call.1} parent=59 // pred_check_branch
          %480 = sbr.rel (%p478) target = $region72
        $region71: #{tpu_custom_call.1} parent=59 // pred_region
          %481 = dma.done [#allocation10], 256
        $region72: #{tpu_custom_call.1} parent=59 // pred_fallthru
          _
        // Predicated region
        $region73: #{tpu_custom_call.1} parent=59 // pred_check
          %p482 = pneg %p146
        $region74: #{tpu_custom_call.1} parent=59 // pred_check_branch
          %484 = sbr.rel (%p482) target = $region76
        $region75: #{tpu_custom_call.1} parent=59 // pred_region
          %485 = dma.done [#allocation13], 16
        $region76: #{tpu_custom_call.1} parent=59 // pred_fallthru
          _
        // Predicated region
        $region77: #{tpu_custom_call.1} parent=59 // pred_check
          %p486 = pneg %p167
        $region78: #{tpu_custom_call.1} parent=59 // pred_check_branch
          %488 = sbr.rel (%p486) target = $region80
        $region79: #{tpu_custom_call.1} parent=59 // pred_region
          %489 = dma.done [#allocation13], 256
        $region80: #{tpu_custom_call.1} parent=59 // pred_fallthru
          _
        // Predicated region
        $region81: #{tpu_custom_call.1} parent=59 // pred_check
          %p490 = pneg %p188
        $region82: #{tpu_custom_call.1} parent=59 // pred_check_branch
          %492 = sbr.rel (%p490) target = $region84
        $region83: #{tpu_custom_call.1} parent=59 // pred_region
          %493 = dma.done [#allocation16], 16
        $region84: #{tpu_custom_call.1} parent=59 // pred_fallthru
          _
        // Predicated region
        $region85: #{tpu_custom_call.1} parent=59 // pred_check
          %p494 = pneg %p209
        $region86: #{tpu_custom_call.1} parent=59 // pred_check_branch
          %496 = sbr.rel (%p494) target = $region88
        $region87: #{tpu_custom_call.1} parent=59 // pred_region
          %497 = dma.done [#allocation16], 256
        $region88: #{tpu_custom_call.1} parent=59 // pred_fallthru
          _
        // Predicated region
        $region89: #{tpu_custom_call.1} parent=59 // pred_check
          %p498 = pneg %p230
        $region90: #{tpu_custom_call.1} parent=59 // pred_check_branch
          %500 = sbr.rel (%p498) target = $region92
        $region91: #{tpu_custom_call.1} parent=59 // pred_region
          %501 = dma.done [#allocation19], 16
        $region92: #{tpu_custom_call.1} parent=59 // pred_fallthru
          _
        // Predicated region
        $region93: #{tpu_custom_call.1} parent=59 // pred_check
          %p502 = pneg %p251
        $region94: #{tpu_custom_call.1} parent=59 // pred_check_branch
          %504 = sbr.rel (%p502) target = $region96
        $region95: #{tpu_custom_call.1} parent=59 // pred_region
          %505 = dma.done [#allocation19], 256
        $region96: #{tpu_custom_call.1} parent=59 // pred_fallthru
          _
        // Predicated region
        $region97: #{tpu_custom_call.1} parent=59 // pred_check
          %p506 = pneg %p272
        $region98: #{tpu_custom_call.1} parent=59 // pred_check_branch
          %508 = sbr.rel (%p506) target = $region100
        $region99: #{tpu_custom_call.1} parent=59 // pred_region
          %509 = dma.done [#allocation22], 16
        $region100: #{tpu_custom_call.1} parent=59 // pred_fallthru
          _
        %s510 = sand.u32 %s63, 1
        %s511 = scalar_lea.sflag [#allocation7], %s510
        %s512 = sand.u32 %s63, 1
        %s513 = smul.addr %s512, 4
        %s514 = scalar_lea.vmem [#allocation6], %s513
        %p515 = pneg %p76
        %p516 = pneg %p73
        %s517 = sand.u32 %s34, 1
        %s518 = scalar_lea.sflag [#allocation10], %s517
        %s519 = sand.u32 %s91, 1
        %s520 = smul.addr %s519, 4
        %s521 = scalar_lea.vmem [#allocation9], %s520
        %p522 = pneg %p104
        %p523 = pneg %p101
        %p524 = pneg %p125
        %p525 = pneg %p122
        %p526 = pneg %p146
        %p527 = pneg %p143
        %p528 = pneg %p167
        %p529 = pneg %p164
        %p530 = pneg %p188
        %p531 = pneg %p185
        %p532 = pneg %p209
        %p533 = pneg %p206
        %p534 = pneg %p230
        %p535 = pneg %p227
        %p536 = pneg %p251
        %p537 = pneg %p248
        %p538 = pneg %p272
        %p539 = pneg %p269
        %p540 = pneg %p300
        %p541 = pneg %p297
        %s542 = sand.u32 %s287, 1
        %s543 = scalar_lea.sflag [#allocation8], %s542
        %s544 = sand.u32 %s287, 1
        %s545 = smul.addr %s544, 8
        %s546 = scalar_lea.vmem [#allocation23], %s545
        %p548 = scmp.eq.s32.totalorder %s41, 0
        // Predicated region
        $region101: #{tpu_custom_call.1} parent=59 // pred_check
          %p549 = pneg %p548
        $region102: #{tpu_custom_call.1} parent=59 // pred_check_branch
          %551 = sbr.rel (%p549) target = $region104
        $region103: #{tpu_custom_call.1} parent=59 // pred_region
          %v552 = vld [vmem:[%s464] sm:$0xf]
          %v553 = vld [vmem:[#allocation11] sm:$0xf]
          %v554 = vld [vmem:[#allocation11 + $0x4] sm:$0xf]
          %v555 = vld [vmem:[#allocation11 + $0x8] sm:$0xf]
          %v556 = vld [vmem:[#allocation11 + $0xc] sm:$0xf]
          %v557 = vld [vmem:[#allocation12] sm:$0x1]
          %v559 = vlaneseq
          %v560 = vshrl.u32 %v559, 7
          %v561 = vsub.s32 0, %v560
          %v562 = vrot.slane %v557, %v561
          %v568 = vunpack.c.l.b16 %v553
          %v569 = vunpack.c.l.b16 %v554
          %v570 = vunpack.c.l.b16 %v555
          %v571 = vunpack.c.l.b16 %v556
          %v572 = vpack.c.b16 %v569, %v568
          %v573 = vpack.c.b16 %v571, %v570
          %vm576 = vcmask 261120
          %v578 = vsel %vm576, %v552, 0
          %580 = vmatprep.subr.bf16.mxu0 0
          %581 = vmatpush1.bf16.msra.mxu0 %v572
          %582 = vmatprep.subr.bf16.mxu0 0
          %583 = vmatpush1.bf16.msra.mxu0 %v573
          %584 = vmatprep.subr.bf16.mxu0 0
          %585 = vmatpush1.bf16.msra.mxu0 0
          %586 = vmatprep.subr.bf16.mxu0 0
          %587 = vmatpush1.bf16.msra.mxu0 0
          %588 = vmatprep.subr.bf16.mxu0 0
          %589 = vmatpush1.bf16.msra.mxu0 0
          %590 = vmatprep.subr.bf16.mxu0 0
          %591 = vmatpush1.bf16.msra.mxu0 0
          %592 = vmatprep.subr.bf16.mxu0 0
          %593 = vmatpush1.bf16.msra.mxu0 0
          %594 = vmatprep.subr.bf16.mxu0 0
          %595 = vmatpush1.bf16.msra.mxu0 0
          %596 = vmatprep.subr.bf16.mxu0 0
          %597 = vmatpush1.bf16.msra.mxu0 0
          %598 = vmatprep.subr.bf16.mxu0 0
          %599 = vmatpush1.bf16.msra.mxu0 0
          %600 = vmatprep.subr.bf16.mxu0 0
          %601 = vmatpush1.bf16.msra.mxu0 0
          %602 = vmatprep.subr.bf16.mxu0 0
          %603 = vmatpush1.bf16.msra.mxu0 0
          %604 = vmatprep.subr.bf16.mxu0 0
          %605 = vmatpush1.bf16.msra.mxu0 0
          %606 = vmatprep.subr.bf16.mxu0 0
          %607 = vmatpush1.bf16.msra.mxu0 0
          %608 = vmatprep.subr.bf16.mxu0 0
          %609 = vmatpush1.bf16.msra.mxu0 0
          %610 = vmatprep.subr.bf16.mxu0 0
          %611 = vmatpush1.bf16.msra.mxu0 0
          %612 = vmatprep.mubr.bf16.mxu0 0
          %613 = vmatmul.mubr.bf16.gmra.mrb[0].mxu0 %v578
          %v614 = vpop.f32.mrb[0].mxu0
          %v615 = vadd.f32 %v562, %v614
          %v616 = vpop.f32.mrb[0].mxu0
          %v617 = vpop.f32.mrb[0].mxu0
          %v618 = vpop.f32.mrb[0].mxu0
          %619 = vdwg.mxu0
          %v620 = vmul.f32 %v615, 0.35355338
          %v621 = vpack.c.bf16 %v620, %v620
          %vm622 = vcmask 257024
          %623 = vst.msk [vmem:[#allocation2] sm:$0xf] %vm622, %v621
          %vm624 = vcmask 7168
          %625 = vst.msk [vmem:[#allocation3] sm:$0xff] %vm624, -inf
          %626 = vst.msk [vmem:[#allocation3 + $0x8] sm:$0xff] %vm624, -inf
          %627 = vst.msk [vmem:[#allocation3 + $0x10] sm:$0xff] %vm624, -inf
          %628 = vst.msk [vmem:[#allocation3 + $0x18] sm:$0xff] %vm624, -inf
          %629 = vst.msk [vmem:[#allocation4] sm:$0xff] %vm624, 0.0
          %630 = vst.msk [vmem:[#allocation4 + $0x8] sm:$0xff] %vm624, 0.0
          %631 = vst.msk [vmem:[#allocation4 + $0x10] sm:$0xff] %vm624, 0.0
          %632 = vst.msk [vmem:[#allocation4 + $0x18] sm:$0xff] %vm624, 0.0
          %633 = vst.msk [vmem:[#allocation5] sm:$0xff] %vm576, 0.0
        $region104: #{tpu_custom_call.1} parent=59 // pred_fallthru
          _
        %p634 = scmp.le.s32.totalorder %s41, %s40
        // Predicated region
        $region105: #{tpu_custom_call.1} parent=59 // pred_check
          %p635 = pneg %p634
        $region106: #{tpu_custom_call.1} parent=59 // pred_check_branch
          %637 = sbr.rel (%p635) target = $region108
        $region107: #{tpu_custom_call.1} parent=59 // pred_region
          %v638 = vld [vmem:[%s473] sm:$0xf]
          %v639 = vld [vmem:[#allocation14] sm:$0xf]
          %v640 = vld [vmem:[#allocation14 + $0x4] sm:$0xf]
          %v641 = vld [vmem:[#allocation14 + $0x8] sm:$0xf]
          %v642 = vld [vmem:[#allocation14 + $0xc] sm:$0xf]
          %v643 = vld [vmem:[#allocation15] sm:$0x1]
          %v645 = vlaneseq
          %v646 = vshrl.u32 %v645, 7
          %v647 = vsub.s32 0, %v646
          %v648 = vrot.slane %v643, %v647
          %v654 = vunpack.c.l.b16 %v639
          %v655 = vunpack.c.l.b16 %v640
          %v656 = vunpack.c.l.b16 %v641
          %v657 = vunpack.c.l.b16 %v642
          %v658 = vpack.c.b16 %v655, %v654
          %v659 = vpack.c.b16 %v657, %v656
          %vm662 = vcmask 261120
          %v664 = vsel %vm662, %v638, 0
          %666 = vmatprep.subr.bf16.mxu0 0
          %667 = vmatpush1.bf16.msra.mxu0 %v658
          %668 = vmatprep.subr.bf16.mxu0 0
          %669 = vmatpush1.bf16.msra.mxu0 %v659
          %670 = vmatprep.subr.bf16.mxu0 0
          %671 = vmatpush1.bf16.msra.mxu0 0
          %672 = vmatprep.subr.bf16.mxu0 0
          %673 = vmatpush1.bf16.msra.mxu0 0
          %674 = vmatprep.subr.bf16.mxu0 0
          %675 = vmatpush1.bf16.msra.mxu0 0
          %676 = vmatprep.subr.bf16.mxu0 0
          %677 = vmatpush1.bf16.msra.mxu0 0
          %678 = vmatprep.subr.bf16.mxu0 0
          %679 = vmatpush1.bf16.msra.mxu0 0
          %680 = vmatprep.subr.bf16.mxu0 0
          %681 = vmatpush1.bf16.msra.mxu0 0
          %682 = vmatprep.subr.bf16.mxu0 0
          %683 = vmatpush1.bf16.msra.mxu0 0
          %684 = vmatprep.subr.bf16.mxu0 0
          %685 = vmatpush1.bf16.msra.mxu0 0
          %686 = vmatprep.subr.bf16.mxu0 0
          %687 = vmatpush1.bf16.msra.mxu0 0
          %688 = vmatprep.subr.bf16.mxu0 0
          %689 = vmatpush1.bf16.msra.mxu0 0
          %690 = vmatprep.subr.bf16.mxu0 0
          %691 = vmatpush1.bf16.msra.mxu0 0
          %692 = vmatprep.subr.bf16.mxu0 0
          %693 = vmatpush1.bf16.msra.mxu0 0
          %694 = vmatprep.subr.bf16.mxu0 0
          %695 = vmatpush1.bf16.msra.mxu0 0
          %696 = vmatprep.subr.bf16.mxu0 0
          %697 = vmatpush1.bf16.msra.mxu0 0
          %698 = vmatprep.mubr.bf16.mxu0 0
          %699 = vmatmul.mubr.bf16.gmra.mrb[0].mxu0 %v664
          %v700 = vpop.f32.mrb[0].mxu0
          %v701 = vadd.f32 %v648, %v700
          %v702 = vpop.f32.mrb[0].mxu0
          %v703 = vpop.f32.mrb[0].mxu0
          %v704 = vpop.f32.mrb[0].mxu0
          %705 = vdwg.mxu0
          %v706 = vpack.c.bf16 %v701, %v701
          %v707 = vld [vmem:[#allocation17] sm:$0xf]
          %v708 = vld [vmem:[#allocation17 + $0x4] sm:$0xf]
          %v709 = vld [vmem:[#allocation17 + $0x8] sm:$0xf]
          %v710 = vld [vmem:[#allocation17 + $0xc] sm:$0xf]
          %v711 = vld [vmem:[#allocation18] sm:$0x1]
          %v713 = vlaneseq
          %v714 = vshrl.u32 %v713, 7
          %v715 = vsub.s32 0, %v714
          %v716 = vrot.slane %v711, %v715
          %v722 = vunpack.c.l.b16 %v707
          %v723 = vunpack.c.l.b16 %v708
          %v724 = vunpack.c.l.b16 %v709
          %v725 = vunpack.c.l.b16 %v710
          %v726 = vpack.c.b16 %v723, %v722
          %v727 = vpack.c.b16 %v725, %v724
          %730 = vmatprep.subr.bf16.mxu0 0
          %731 = vmatpush1.bf16.msra.mxu0 %v726
          %732 = vmatprep.subr.bf16.mxu0 0
          %733 = vmatpush1.bf16.msra.mxu0 %v727
          %734 = vmatprep.subr.bf16.mxu0 0
          %735 = vmatpush1.bf16.msra.mxu0 0
          %736 = vmatprep.subr.bf16.mxu0 0
          %737 = vmatpush1.bf16.msra.mxu0 0
          %738 = vmatprep.subr.bf16.mxu0 0
          %739 = vmatpush1.bf16.msra.mxu0 0
          %740 = vmatprep.subr.bf16.mxu0 0
          %741 = vmatpush1.bf16.msra.mxu0 0
          %742 = vmatprep.subr.bf16.mxu0 0
          %743 = vmatpush1.bf16.msra.mxu0 0
          %744 = vmatprep.subr.bf16.mxu0 0
          %745 = vmatpush1.bf16.msra.mxu0 0
          %746 = vmatprep.subr.bf16.mxu0 0
          %747 = vmatpush1.bf16.msra.mxu0 0
          %748 = vmatprep.subr.bf16.mxu0 0
          %749 = vmatpush1.bf16.msra.mxu0 0
          %750 = vmatprep.subr.bf16.mxu0 0
          %751 = vmatpush1.bf16.msra.mxu0 0
          %752 = vmatprep.subr.bf16.mxu0 0
          %753 = vmatpush1.bf16.msra.mxu0 0
          %754 = vmatprep.subr.bf16.mxu0 0
          %755 = vmatpush1.bf16.msra.mxu0 0
          %756 = vmatprep.subr.bf16.mxu0 0
          %757 = vmatpush1.bf16.msra.mxu0 0
          %758 = vmatprep.subr.bf16.mxu0 0
          %759 = vmatpush1.bf16.msra.mxu0 0
          %760 = vmatprep.subr.bf16.mxu0 0
          %761 = vmatpush1.bf16.msra.mxu0 0
          %762 = vmatprep.mubr.bf16.mxu0 0
          %763 = vmatmul.mubr.bf16.gmra.mrb[0].mxu0 %v664
          %v764 = vpop.f32.mrb[0].mxu0
          %v765 = vadd.f32 %v716, %v764
          %v766 = vpop.f32.mrb[0].mxu0
          %v767 = vpop.f32.mrb[0].mxu0
          %v768 = vpop.f32.mrb[0].mxu0
          %769 = vdwg.mxu0
          %v770 = vpack.c.bf16 %v765, %v765
          %s771 = smul.u32 %s40, 8
          %v772 = vlaneseq
          %v773 = vshrl.u32 %v772, 7
          %v774 = vstv %s771
          %v775 = vadd.s32 %v774, %v773
          %s776 = smul.u32 %s41, 8
          %v777 = vlaneseq
          %v778 = vand.u32 %v777, 127
          %v779 = vstv %s776
          %v780 = vadd.s32 %v779, %v778
          %vm781 = vcmp.le.s32.totalorder %v780, %v775
          %v782 = vld [vmem:[#allocation2] sm:$0xf]
          %vm783 = vcmask 64512
          %v785 = vsel %vm783, %v782, 0
          %v788 = vsel %vm783, %v706, 0
          %790 = vmatprep.subr.bf16.mxu0 0
          %791 = vmatpush1.bf16.xpose.msra.mxu0 %v788
          %792 = vmatprep.subr.bf16.mxu0 0
          %793 = vmatpush1.bf16.xpose.msra.mxu0 0
          %794 = vmatprep.subr.bf16.mxu0 0
          %795 = vmatpush1.bf16.xpose.msra.mxu0 0
          %796 = vmatprep.subr.bf16.mxu0 0
          %797 = vmatpush1.bf16.xpose.msra.mxu0 0
          %798 = vmatprep.subr.bf16.mxu0 0
          %799 = vmatpush1.bf16.xpose.msra.mxu0 0
          %800 = vmatprep.subr.bf16.mxu0 0
          %801 = vmatpush1.bf16.xpose.msra.mxu0 0
          %802 = vmatprep.subr.bf16.mxu0 0
          %803 = vmatpush1.bf16.xpose.msra.mxu0 0
          %804 = vmatprep.subr.bf16.mxu0 0
          %805 = vmatpush1.bf16.xpose.msra.mxu0 0
          %806 = vmatprep.subr.bf16.mxu0 0
          %807 = vmatpush1.bf16.xpose.msra.mxu0 0
          %808 = vmatprep.subr.bf16.mxu0 0
          %809 = vmatpush1.bf16.xpose.msra.mxu0 0
          %810 = vmatprep.subr.bf16.mxu0 0
          %811 = vmatpush1.bf16.xpose.msra.mxu0 0
          %812 = vmatprep.subr.bf16.mxu0 0
          %813 = vmatpush1.bf16.xpose.msra.mxu0 0
          %814 = vmatprep.subr.bf16.mxu0 0
          %815 = vmatpush1.bf16.xpose.msra.mxu0 0
          %816 = vmatprep.subr.bf16.mxu0 0
          %817 = vmatpush1.bf16.xpose.msra.mxu0 0
          %818 = vmatprep.subr.bf16.mxu0 0
          %819 = vmatpush1.bf16.xpose.msra.mxu0 0
          %820 = vmatprep.subr.bf16.mxu0 0
          %821 = vmatpush1.bf16.xpose.msra.mxu0 0
          %822 = vmatprep.mubr.bf16.mxu0 0
          %823 = vmatmul.mubr.bf16.gmra.mrb[0].mxu0 %v785
          %v824 = vpop.f32.mrb[0].mxu0
          %v825 = vadd.f32 0.0, %v824
          %v826 = vpop.f32.mrb[0].mxu0
          %v827 = vpop.f32.mrb[0].mxu0
          %v828 = vpop.f32.mrb[0].mxu0
          %829 = vdwg.mxu0
          %v830 = vsel %vm781, %v825, -inf
          %v831 = vld [vmem:[#allocation3] sm:$0xff]
          %v832 = vsel %vm783, %v830, -inf
          %833 = vmax.xlane.f32.xlu0 %v832
          %v834 = vpop.xlane.xlu0 %833
          %v835 = vmax.f32 %v831, %v834
          %v836 = vsub.f32 %v831, %v835
          %v837 = vmul.f32 %v836, 1.442695
          %v838 = vpow.pop %v837
          %840 = vset.pattern.permute.xlu0 0
          %841 = vperm.xlu0 %840, %v835
          %v842 = vpop.permute.xlu0 %841
          %v844 = vsub.f32 %v830, %v842
          %v845 = vmul.f32 %v844, 1.442695
          %v846 = vpow.pop %v845
          %v847 = vld [vmem:[#allocation4] sm:$0xff]
          %v848 = vmul.f32 %v838, %v847
          %v849 = vsel %vm783, %v846, 0.0
          %850 = vadd.xlane.f32.xlu0 %v849
          %v851 = vpop.xlane.xlu0 %850
          %v852 = vadd.f32 %v848, %v851
          %vm853 = vcmask 7168
          %854 = vst.msk [vmem:[#allocation4] sm:$0xff] %vm853, %v852
          %v855 = vld [vmem:[#allocation5] sm:$0xff]
          %857 = vset.pattern.permute.xlu0 0
          %858 = vperm.xlu0 %857, %v838
          %v859 = vpop.permute.xlu0 %858
          %v861 = vmul.f32 %v859, %v855
          %v862 = vpack.c.bf16 %v846, %v846
          %v864 = vsel %vm783, %v862, 0
          %vm866 = vcmask 1043456
          %v868 = vsel %vm866, %v770, 0
          %870 = vmatprep.subr.bf16.mxu0 0
          %871 = vmatpush1.bf16.msra.mxu0 %v868
          %872 = vmatprep.subr.bf16.mxu0 0
          %873 = vmatpush1.bf16.msra.mxu0 0
          %874 = vmatprep.subr.bf16.mxu0 0
          %875 = vmatpush1.bf16.msra.mxu0 0
          %876 = vmatprep.subr.bf16.mxu0 0
          %877 = vmatpush1.bf16.msra.mxu0 0
          %878 = vmatprep.subr.bf16.mxu0 0
          %879 = vmatpush1.bf16.msra.mxu0 0
          %880 = vmatprep.subr.bf16.mxu0 0
          %881 = vmatpush1.bf16.msra.mxu0 0
          %882 = vmatprep.subr.bf16.mxu0 0
          %883 = vmatpush1.bf16.msra.mxu0 0
          %884 = vmatprep.subr.bf16.mxu0 0
          %885 = vmatpush1.bf16.msra.mxu0 0
          %886 = vmatprep.subr.bf16.mxu0 0
          %887 = vmatpush1.bf16.msra.mxu0 0
          %888 = vmatprep.subr.bf16.mxu0 0
          %889 = vmatpush1.bf16.msra.mxu0 0
          %890 = vmatprep.subr.bf16.mxu0 0
          %891 = vmatpush1.bf16.msra.mxu0 0
          %892 = vmatprep.subr.bf16.mxu0 0
          %893 = vmatpush1.bf16.msra.mxu0 0
          %894 = vmatprep.subr.bf16.mxu0 0
          %895 = vmatpush1.bf16.msra.mxu0 0
          %896 = vmatprep.subr.bf16.mxu0 0
          %897 = vmatpush1.bf16.msra.mxu0 0
          %898 = vmatprep.subr.bf16.mxu0 0
          %899 = vmatpush1.bf16.msra.mxu0 0
          %900 = vmatprep.subr.bf16.mxu0 0
          %901 = vmatpush1.bf16.msra.mxu0 0
          %902 = vmatprep.mubr.bf16.mxu0 0
          %903 = vmatmul.mubr.bf16.gmra.mrb[0].mxu0 %v864
          %v904 = vpop.f32.mrb[0].mxu0
          %v905 = vadd.f32 0.0, %v904
          %v906 = vpop.f32.mrb[0].mxu0
          %v907 = vpop.f32.mrb[0].mxu0
          %v908 = vpop.f32.mrb[0].mxu0
          %909 = vdwg.mxu0
          %v910 = vadd.f32 %v861, %v905
          %911 = vst.msk [vmem:[#allocation5] sm:$0xff] %vm783, %v910
          %912 = vst.msk [vmem:[#allocation3] sm:$0xff] %vm853, %v835
          %v913 = vld [vmem:[#allocation2] sm:$0xf]
          %v915 = vunpack.c.l.b16 %v913
          %v916 = vpack.c.b16 %v915, %v915
          %917 = vrot.lane.b32.xlu0 %v916, 120
          %v918 = vpop.permute.xlu0 %917
          %920 = vrot.lane.b32.xlu0 %v706, 120
          %v921 = vpop.permute.xlu0 %920
          %v923 = vsel %vm783, %v918, 0
          %v926 = vsel %vm783, %v921, 0
          %928 = vmatprep.subr.bf16.mxu0 0
          %929 = vmatpush1.bf16.xpose.msra.mxu0 %v926
          %930 = vmatprep.subr.bf16.mxu0 0
          %931 = vmatpush1.bf16.xpose.msra.mxu0 0
          %932 = vmatprep.subr.bf16.mxu0 0
          %933 = vmatpush1.bf16.xpose.msra.mxu0 0
          %934 = vmatprep.subr.bf16.mxu0 0
          %935 = vmatpush1.bf16.xpose.msra.mxu0 0
          %936 = vmatprep.subr.bf16.mxu0 0
          %937 = vmatpush1.bf16.xpose.msra.mxu0 0
          %938 = vmatprep.subr.bf16.mxu0 0
          %939 = vmatpush1.bf16.xpose.msra.mxu0 0
          %940 = vmatprep.subr.bf16.mxu0 0
          %941 = vmatpush1.bf16.xpose.msra.mxu0 0
          %942 = vmatprep.subr.bf16.mxu0 0
          %943 = vmatpush1.bf16.xpose.msra.mxu0 0
          %944 = vmatprep.subr.bf16.mxu0 0
          %945 = vmatpush1.bf16.xpose.msra.mxu0 0
          %946 = vmatprep.subr.bf16.mxu0 0
          %947 = vmatpush1.bf16.xpose.msra.mxu0 0
          %948 = vmatprep.subr.bf16.mxu0 0
          %949 = vmatpush1.bf16.xpose.msra.mxu0 0
          %950 = vmatprep.subr.bf16.mxu0 0
          %951 = vmatpush1.bf16.xpose.msra.mxu0 0
          %952 = vmatprep.subr.bf16.mxu0 0
          %953 = vmatpush1.bf16.xpose.msra.mxu0 0
          %954 = vmatprep.subr.bf16.mxu0 0
          %955 = vmatpush1.bf16.xpose.msra.mxu0 0
          %956 = vmatprep.subr.bf16.mxu0 0
          %957 = vmatpush1.bf16.xpose.msra.mxu0 0
          %958 = vmatprep.subr.bf16.mxu0 0
          %959 = vmatpush1.bf16.xpose.msra.mxu0 0
          %960 = vmatprep.mubr.bf16.mxu0 0
          %961 = vmatmul.mubr.bf16.gmra.mrb[0].mxu0 %v923
          %v962 = vpop.f32.mrb[0].mxu0
          %v963 = vadd.f32 0.0, %v962
          %v964 = vpop.f32.mrb[0].mxu0
          %v965 = vpop.f32.mrb[0].mxu0
          %v966 = vpop.f32.mrb[0].mxu0
          %967 = vdwg.mxu0
          %v968 = vsel %vm781, %v963, -inf
          %s969 = scalar_lea.vmem [#allocation3], 8
          %v970 = vld [vmem:[%s969] sm:$0xff]
          %v971 = vsel %vm783, %v968, -inf
          %972 = vmax.xlane.f32.xlu0 %v971
          %v973 = vpop.xlane.xlu0 %972
          %v974 = vmax.f32 %v970, %v973
          %v975 = vsub.f32 %v970, %v974
          %v976 = vmul.f32 %v975, 1.442695
          %v977 = vpow.pop %v976
          %979 = vset.pattern.permute.xlu0 0
          %980 = vperm.xlu0 %979, %v974
          %v981 = vpop.permute.xlu0 %980
          %v983 = vsub.f32 %v968, %v981
          %v984 = vmul.f32 %v983, 1.442695
          %v985 = vpow.pop %v984
          %s986 = scalar_lea.vmem [#allocation4], 8
          %v987 = vld [vmem:[%s986] sm:$0xff]
          %v988 = vmul.f32 %v977, %v987
          %v989 = vsel %vm783, %v985, 0.0
          %990 = vadd.xlane.f32.xlu0 %v989
          %v991 = vpop.xlane.xlu0 %990
          %v992 = vadd.f32 %v988, %v991
          %993 = vst.msk [vmem:[%s986] sm:$0xff] %vm853, %v992
          %v994 = vld [vmem:[#allocation5] sm:$0xff]
          %996 = vset.pattern.permute.xlu0 0
          %997 = vperm.xlu0 %996, %v977
          %v998 = vpop.permute.xlu0 %997
          %v1000 = vmul.f32 %v998, %v994
          %v1001 = vpack.c.bf16 %v985, %v985
          %1003 = vrot.lane.b32.xlu0 %v770, 120
          %v1004 = vpop.permute.xlu0 %1003
          %v1006 = vsel %vm783, %v1001, 0
          %v1009 = vsel %vm866, %v1004, 0
          %1011 = vmatprep.subr.bf16.mxu0 0
          %1012 = vmatpush1.bf16.msra.mxu0 %v1009
          %1013 = vmatprep.subr.bf16.mxu0 0
          %1014 = vmatpush1.bf16.msra.mxu0 0
          %1015 = vmatprep.subr.bf16.mxu0 0
          %1016 = vmatpush1.bf16.msra.mxu0 0
          %1017 = vmatprep.subr.bf16.mxu0 0
          %1018 = vmatpush1.bf16.msra.mxu0 0
          %1019 = vmatprep.subr.bf16.mxu0 0
          %1020 = vmatpush1.bf16.msra.mxu0 0
          %1021 = vmatprep.subr.bf16.mxu0 0
          %1022 = vmatpush1.bf16.msra.mxu0 0
          %1023 = vmatprep.subr.bf16.mxu0 0
          %1024 = vmatpush1.bf16.msra.mxu0 0
          %1025 = vmatprep.subr.bf16.mxu0 0
          %1026 = vmatpush1.bf16.msra.mxu0 0
          %1027 = vmatprep.subr.bf16.mxu0 0
          %1028 = vmatpush1.bf16.msra.mxu0 0
          %1029 = vmatprep.subr.bf16.mxu0 0
          %1030 = vmatpush1.bf16.msra.mxu0 0
          %1031 = vmatprep.subr.bf16.mxu0 0
          %1032 = vmatpush1.bf16.msra.mxu0 0
          %1033 = vmatprep.subr.bf16.mxu0 0
          %1034 = vmatpush1.bf16.msra.mxu0 0
          %1035 = vmatprep.subr.bf16.mxu0 0
          %1036 = vmatpush1.bf16.msra.mxu0 0
          %1037 = vmatprep.subr.bf16.mxu0 0
          %1038 = vmatpush1.bf16.msra.mxu0 0
          %1039 = vmatprep.subr.bf16.mxu0 0
          %1040 = vmatpush1.bf16.msra.mxu0 0
          %1041 = vmatprep.subr.bf16.mxu0 0
          %1042 = vmatpush1.bf16.msra.mxu0 0
          %1043 = vmatprep.mubr.bf16.mxu0 0
          %1044 = vmatmul.mubr.bf16.gmra.mrb[0].mxu0 %v1006
          %v1045 = vpop.f32.mrb[0].mxu0
          %v1046 = vadd.f32 0.0, %v1045
          %v1047 = vpop.f32.mrb[0].mxu0
          %v1048 = vpop.f32.mrb[0].mxu0
          %v1049 = vpop.f32.mrb[0].mxu0
          %1050 = vdwg.mxu0
          %1052 = vrot.lane.b32.xlu0 %v1046, 8
          %v1053 = vpop.permute.xlu0 %1052
          %v1055 = vadd.f32 %v1000, %v1053
          %vm1056 = vcmask 130112
          %1057 = vst.msk [vmem:[#allocation5] sm:$0xff] %vm1056, %v1055
          %1058 = vst.msk [vmem:[%s969] sm:$0xff] %vm853, %v974
          %v1059 = vld [vmem:[#allocation2] sm:$0xf]
          %v1061 = vunpack.c.l.b16 %v1059
          %v1062 = vpack.c.b16 %v1061, %v1061
          %1063 = vrot.lane.b32.xlu0 %v1062, 112
          %v1064 = vpop.permute.xlu0 %1063
          %1065 = vrot.lane.b32.xlu0 %v706, 112
          %v1066 = vpop.permute.xlu0 %1065
          %v1068 = vsel %vm783, %v1064, 0
          %v1071 = vsel %vm783, %v1066, 0
          %1073 = vmatprep.subr.bf16.mxu0 0
          %1074 = vmatpush1.bf16.xpose.msra.mxu0 %v1071
          %1075 = vmatprep.subr.bf16.mxu0 0
          %1076 = vmatpush1.bf16.xpose.msra.mxu0 0
          %1077 = vmatprep.subr.bf16.mxu0 0
          %1078 = vmatpush1.bf16.xpose.msra.mxu0 0
          %1079 = vmatprep.subr.bf16.mxu0 0
          %1080 = vmatpush1.bf16.xpose.msra.mxu0 0
          %1081 = vmatprep.subr.bf16.mxu0 0
          %1082 = vmatpush1.bf16.xpose.msra.mxu0 0
          %1083 = vmatprep.subr.bf16.mxu0 0
          %1084 = vmatpush1.bf16.xpose.msra.mxu0 0
          %1085 = vmatprep.subr.bf16.mxu0 0
          %1086 = vmatpush1.bf16.xpose.msra.mxu0 0
          %1087 = vmatprep.subr.bf16.mxu0 0
          %1088 = vmatpush1.bf16.xpose.msra.mxu0 0
          %1089 = vmatprep.subr.bf16.mxu0 0
          %1090 = vmatpush1.bf16.xpose.msra.mxu0 0
          %1091 = vmatprep.subr.bf16.mxu0 0
          %1092 = vmatpush1.bf16.xpose.msra.mxu0 0
          %1093 = vmatprep.subr.bf16.mxu0 0
          %1094 = vmatpush1.bf16.xpose.msra.mxu0 0
          %1095 = vmatprep.subr.bf16.mxu0 0
          %1096 = vmatpush1.bf16.xpose.msra.mxu0 0
          %1097 = vmatprep.subr.bf16.mxu0 0
          %1098 = vmatpush1.bf16.xpose.msra.mxu0 0
          %1099 = vmatprep.subr.bf16.mxu0 0
          %1100 = vmatpush1.bf16.xpose.msra.mxu0 0
          %1101 = vmatprep.subr.bf16.mxu0 0
          %1102 = vmatpush1.bf16.xpose.msra.mxu0 0
          %1103 = vmatprep.subr.bf16.mxu0 0
          %1104 = vmatpush1.bf16.xpose.msra.mxu0 0
          %1105 = vmatprep.mubr.bf16.mxu0 0
          %1106 = vmatmul.mubr.bf16.gmra.mrb[0].mxu0 %v1068
          %v1107 = vpop.f32.mrb[0].mxu0
          %v1108 = vadd.f32 0.0, %v1107
          %v1109 = vpop.f32.mrb[0].mxu0
          %v1110 = vpop.f32.mrb[0].mxu0
          %v1111 = vpop.f32.mrb[0].mxu0
          %1112 = vdwg.mxu0
          %v1113 = vsel %vm781, %v1108, -inf
          %s1114 = scalar_lea.vmem [#allocation3], 16
          %v1115 = vld [vmem:[%s1114] sm:$0xff]
          %v1116 = vsel %vm783, %v1113, -inf
          %1117 = vmax.xlane.f32.xlu0 %v1116
          %v1118 = vpop.xlane.xlu0 %1117
          %v1119 = vmax.f32 %v1115, %v1118
          %v1120 = vsub.f32 %v1115, %v1119
          %v1121 = vmul.f32 %v1120, 1.442695
          %v1122 = vpow.pop %v1121
          %1124 = vset.pattern.permute.xlu0 0
          %1125 = vperm.xlu0 %1124, %v1119
          %v1126 = vpop.permute.xlu0 %1125
          %v1128 = vsub.f32 %v1113, %v1126
          %v1129 = vmul.f32 %v1128, 1.442695
          %v1130 = vpow.pop %v1129
          %s1131 = scalar_lea.vmem [#allocation4], 16
          %v1132 = vld [vmem:[%s1131] sm:$0xff]
          %v1133 = vmul.f32 %v1122, %v1132
          %v1134 = vsel %vm783, %v1130, 0.0
          %1135 = vadd.xlane.f32.xlu0 %v1134
          %v1136 = vpop.xlane.xlu0 %1135
          %v1137 = vadd.f32 %v1133, %v1136
          %1138 = vst.msk [vmem:[%s1131] sm:$0xff] %vm853, %v1137
          %v1139 = vld [vmem:[#allocation5] sm:$0xff]
          %1141 = vset.pattern.permute.xlu0 0
          %1142 = vperm.xlu0 %1141, %v1122
          %v1143 = vpop.permute.xlu0 %1142
          %v1145 = vmul.f32 %v1143, %v1139
          %v1146 = vpack.c.bf16 %v1130, %v1130
          %1147 = vrot.lane.b32.xlu0 %v770, 112
          %v1148 = vpop.permute.xlu0 %1147
          %v1150 = vsel %vm783, %v1146, 0
          %v1153 = vsel %vm866, %v1148, 0
          %1155 = vmatprep.subr.bf16.mxu0 0
          %1156 = vmatpush1.bf16.msra.mxu0 %v1153
          %1157 = vmatprep.subr.bf16.mxu0 0
          %1158 = vmatpush1.bf16.msra.mxu0 0
          %1159 = vmatprep.subr.bf16.mxu0 0
          %1160 = vmatpush1.bf16.msra.mxu0 0
          %1161 = vmatprep.subr.bf16.mxu0 0
          %1162 = vmatpush1.bf16.msra.mxu0 0
          %1163 = vmatprep.subr.bf16.mxu0 0
          %1164 = vmatpush1.bf16.msra.mxu0 0
          %1165 = vmatprep.subr.bf16.mxu0 0
          %1166 = vmatpush1.bf16.msra.mxu0 0
          %1167 = vmatprep.subr.bf16.mxu0 0
          %1168 = vmatpush1.bf16.msra.mxu0 0
          %1169 = vmatprep.subr.bf16.mxu0 0
          %1170 = vmatpush1.bf16.msra.mxu0 0
          %1171 = vmatprep.subr.bf16.mxu0 0
          %1172 = vmatpush1.bf16.msra.mxu0 0
          %1173 = vmatprep.subr.bf16.mxu0 0
          %1174 = vmatpush1.bf16.msra.mxu0 0
          %1175 = vmatprep.subr.bf16.mxu0 0
          %1176 = vmatpush1.bf16.msra.mxu0 0
          %1177 = vmatprep.subr.bf16.mxu0 0
          %1178 = vmatpush1.bf16.msra.mxu0 0
          %1179 = vmatprep.subr.bf16.mxu0 0
          %1180 = vmatpush1.bf16.msra.mxu0 0
          %1181 = vmatprep.subr.bf16.mxu0 0
          %1182 = vmatpush1.bf16.msra.mxu0 0
          %1183 = vmatprep.subr.bf16.mxu0 0
          %1184 = vmatpush1.bf16.msra.mxu0 0
          %1185 = vmatprep.subr.bf16.mxu0 0
          %1186 = vmatpush1.bf16.msra.mxu0 0
          %1187 = vmatprep.mubr.bf16.mxu0 0
          %1188 = vmatmul.mubr.bf16.gmra.mrb[0].mxu0 %v1150
          %v1189 = vpop.f32.mrb[0].mxu0
          %v1190 = vadd.f32 0.0, %v1189
          %v1191 = vpop.f32.mrb[0].mxu0
          %v1192 = vpop.f32.mrb[0].mxu0
          %v1193 = vpop.f32.mrb[0].mxu0
          %1194 = vdwg.mxu0
          %1196 = vrot.lane.b32.xlu0 %v1190, 16
          %v1197 = vpop.permute.xlu0 %1196
          %v1199 = vadd.f32 %v1145, %v1197
          %vm1200 = vcmask 195712
          %1201 = vst.msk [vmem:[#allocation5] sm:$0xff] %vm1200, %v1199
          %1202 = vst.msk [vmem:[%s1114] sm:$0xff] %vm853, %v1119
          %v1203 = vld [vmem:[#allocation2] sm:$0xf]
          %v1205 = vunpack.c.l.b16 %v1203
          %v1206 = vpack.c.b16 %v1205, %v1205
          %1207 = vrot.lane.b32.xlu0 %v1206, 104
          %v1208 = vpop.permute.xlu0 %1207
          %1209 = vrot.lane.b32.xlu0 %v706, 104
          %v1210 = vpop.permute.xlu0 %1209
          %v1212 = vsel %vm783, %v1208, 0
          %v1215 = vsel %vm783, %v1210, 0
          %1217 = vmatprep.subr.bf16.mxu0 0
          %1218 = vmatpush1.bf16.xpose.msra.mxu0 %v1215
          %1219 = vmatprep.subr.bf16.mxu0 0
          %1220 = vmatpush1.bf16.xpose.msra.mxu0 0
          %1221 = vmatprep.subr.bf16.mxu0 0
          %1222 = vmatpush1.bf16.xpose.msra.mxu0 0
          %1223 = vmatprep.subr.bf16.mxu0 0
          %1224 = vmatpush1.bf16.xpose.msra.mxu0 0
          %1225 = vmatprep.subr.bf16.mxu0 0
          %1226 = vmatpush1.bf16.xpose.msra.mxu0 0
          %1227 = vmatprep.subr.bf16.mxu0 0
          %1228 = vmatpush1.bf16.xpose.msra.mxu0 0
          %1229 = vmatprep.subr.bf16.mxu0 0
          %1230 = vmatpush1.bf16.xpose.msra.mxu0 0
          %1231 = vmatprep.subr.bf16.mxu0 0
          %1232 = vmatpush1.bf16.xpose.msra.mxu0 0
          %1233 = vmatprep.subr.bf16.mxu0 0
          %1234 = vmatpush1.bf16.xpose.msra.mxu0 0
          %1235 = vmatprep.subr.bf16.mxu0 0
          %1236 = vmatpush1.bf16.xpose.msra.mxu0 0
          %1237 = vmatprep.subr.bf16.mxu0 0
          %1238 = vmatpush1.bf16.xpose.msra.mxu0 0
          %1239 = vmatprep.subr.bf16.mxu0 0
          %1240 = vmatpush1.bf16.xpose.msra.mxu0 0
          %1241 = vmatprep.subr.bf16.mxu0 0
          %1242 = vmatpush1.bf16.xpose.msra.mxu0 0
          %1243 = vmatprep.subr.bf16.mxu0 0
          %1244 = vmatpush1.bf16.xpose.msra.mxu0 0
          %1245 = vmatprep.subr.bf16.mxu0 0
          %1246 = vmatpush1.bf16.xpose.msra.mxu0 0
          %1247 = vmatprep.subr.bf16.mxu0 0
          %1248 = vmatpush1.bf16.xpose.msra.mxu0 0
          %1249 = vmatprep.mubr.bf16.mxu0 0
          %1250 = vmatmul.mubr.bf16.gmra.mrb[0].mxu0 %v1212
          %v1251 = vpop.f32.mrb[0].mxu0
          %v1252 = vadd.f32 0.0, %v1251
          %v1253 = vpop.f32.mrb[0].mxu0
          %v1254 = vpop.f32.mrb[0].mxu0
          %v1255 = vpop.f32.mrb[0].mxu0
          %1256 = vdwg.mxu0
          %v1257 = vsel %vm781, %v1252, -inf
          %s1258 = scalar_lea.vmem [#allocation3], 24
          %v1259 = vld [vmem:[%s1258] sm:$0xff]
          %v1260 = vsel %vm783, %v1257, -inf
          %1261 = vmax.xlane.f32.xlu0 %v1260
          %v1262 = vpop.xlane.xlu0 %1261
          %v1263 = vmax.f32 %v1259, %v1262
          %v1264 = vsub.f32 %v1259, %v1263
          %v1265 = vmul.f32 %v1264, 1.442695
          %v1266 = vpow.pop %v1265
          %1268 = vset.pattern.permute.xlu0 0
          %1269 = vperm.xlu0 %1268, %v1263
          %v1270 = vpop.permute.xlu0 %1269
          %v1272 = vsub.f32 %v1257, %v1270
          %v1273 = vmul.f32 %v1272, 1.442695
          %v1274 = vpow.pop %v1273
          %s1275 = scalar_lea.vmem [#allocation4], 24
          %v1276 = vld [vmem:[%s1275] sm:$0xff]
          %v1277 = vmul.f32 %v1266, %v1276
          %v1278 = vsel %vm783, %v1274, 0.0
          %1279 = vadd.xlane.f32.xlu0 %v1278
          %v1280 = vpop.xlane.xlu0 %1279
          %v1281 = vadd.f32 %v1277, %v1280
          %1282 = vst.msk [vmem:[%s1275] sm:$0xff] %vm853, %v1281
          %v1283 = vld [vmem:[#allocation5] sm:$0xff]
          %1285 = vset.pattern.permute.xlu0 0
          %1286 = vperm.xlu0 %1285, %v1266
          %v1287 = vpop.permute.xlu0 %1286
          %v1289 = vmul.f32 %v1287, %v1283
          %v1290 = vpack.c.bf16 %v1274, %v1274
          %1291 = vrot.lane.b32.xlu0 %v770, 104
          %v1292 = vpop.permute.xlu0 %1291
          %v1294 = vsel %vm783, %v1290, 0
          %v1297 = vsel %vm866, %v1292, 0
          %1299 = vmatprep.subr.bf16.mxu0 0
          %1300 = vmatpush1.bf16.msra.mxu0 %v1297
          %1301 = vmatprep.subr.bf16.mxu0 0
          %1302 = vmatpush1.bf16.msra.mxu0 0
          %1303 = vmatprep.subr.bf16.mxu0 0
          %1304 = vmatpush1.bf16.msra.mxu0 0
          %1305 = vmatprep.subr.bf16.mxu0 0
          %1306 = vmatpush1.bf16.msra.mxu0 0
          %1307 = vmatprep.subr.bf16.mxu0 0
          %1308 = vmatpush1.bf16.msra.mxu0 0
          %1309 = vmatprep.subr.bf16.mxu0 0
          %1310 = vmatpush1.bf16.msra.mxu0 0
          %1311 = vmatprep.subr.bf16.mxu0 0
          %1312 = vmatpush1.bf16.msra.mxu0 0
          %1313 = vmatprep.subr.bf16.mxu0 0
          %1314 = vmatpush1.bf16.msra.mxu0 0
          %1315 = vmatprep.subr.bf16.mxu0 0
          %1316 = vmatpush1.bf16.msra.mxu0 0
          %1317 = vmatprep.subr.bf16.mxu0 0
          %1318 = vmatpush1.bf16.msra.mxu0 0
          %1319 = vmatprep.subr.bf16.mxu0 0
          %1320 = vmatpush1.bf16.msra.mxu0 0
          %1321 = vmatprep.subr.bf16.mxu0 0
          %1322 = vmatpush1.bf16.msra.mxu0 0
          %1323 = vmatprep.subr.bf16.mxu0 0
          %1324 = vmatpush1.bf16.msra.mxu0 0
          %1325 = vmatprep.subr.bf16.mxu0 0
          %1326 = vmatpush1.bf16.msra.mxu0 0
          %1327 = vmatprep.subr.bf16.mxu0 0
          %1328 = vmatpush1.bf16.msra.mxu0 0
          %1329 = vmatprep.subr.bf16.mxu0 0
          %1330 = vmatpush1.bf16.msra.mxu0 0
          %1331 = vmatprep.mubr.bf16.mxu0 0
          %1332 = vmatmul.mubr.bf16.gmra.mrb[0].mxu0 %v1294
          %v1333 = vpop.f32.mrb[0].mxu0
          %v1334 = vadd.f32 0.0, %v1333
          %v1335 = vpop.f32.mrb[0].mxu0
          %v1336 = vpop.f32.mrb[0].mxu0
          %v1337 = vpop.f32.mrb[0].mxu0
          %1338 = vdwg.mxu0
          %1340 = vrot.lane.b32.xlu0 %v1334, 24
          %v1341 = vpop.permute.xlu0 %1340
          %v1343 = vadd.f32 %v1289, %v1341
          %vm1344 = vcmask 261312
          %1345 = vst.msk [vmem:[#allocation5] sm:$0xff] %vm1344, %v1343
          %1346 = vst.msk [vmem:[%s1258] sm:$0xff] %vm853, %v1263
        $region108: #{tpu_custom_call.1} parent=59 // pred_fallthru
          _
        // Predicated region
        $region109: #{tpu_custom_call.1} parent=59 // pred_check
          %p1347 = pneg %p548
        $region110: #{tpu_custom_call.1} parent=59 // pred_check_branch
          %1349 = sbr.rel (%p1347) target = $region112
        $region111: #{tpu_custom_call.1} parent=59 // pred_region
          %v1350 = vld [vmem:[#allocation5] sm:$0xff]
          %v1351 = vld [vmem:[#allocation4] sm:$0xff]
          %v1352 = vrcp.pop %v1351
          %1354 = vset.pattern.permute.xlu0 0
          %1355 = vperm.xlu0 %1354, %v1352
          %v1356 = vpop.permute.xlu0 %1355
          %v1358 = vmul.f32 %v1350, %v1356
          %vm1359 = vcmask 64512
          %1360 = vst.msk [vmem:[#allocation5] sm:$0xff] %vm1359, %v1358
          %v1361 = vld [vmem:[#allocation5] sm:$0xff]
          %s1362 = scalar_lea.vmem [#allocation4], 8
          %v1363 = vld [vmem:[%s1362] sm:$0xff]
          %v1364 = vrcp.pop %v1363
          %1366 = vset.pattern.permute.xlu0 0
          %1367 = vperm.xlu0 %1366, %v1364
          %v1368 = vpop.permute.xlu0 %1367
          %v1370 = vmul.f32 %v1361, %v1368
          %vm1371 = vcmask 130112
          %1372 = vst.msk [vmem:[#allocation5] sm:$0xff] %vm1371, %v1370
          %v1373 = vld [vmem:[#allocation5] sm:$0xff]
          %s1374 = scalar_lea.vmem [#allocation4], 16
          %v1375 = vld [vmem:[%s1374] sm:$0xff]
          %v1376 = vrcp.pop %v1375
          %1378 = vset.pattern.permute.xlu0 0
          %1379 = vperm.xlu0 %1378, %v1376
          %v1380 = vpop.permute.xlu0 %1379
          %v1382 = vmul.f32 %v1373, %v1380
          %vm1383 = vcmask 195712
          %1384 = vst.msk [vmem:[#allocation5] sm:$0xff] %vm1383, %v1382
          %v1385 = vld [vmem:[#allocation5] sm:$0xff]
          %s1386 = scalar_lea.vmem [#allocation4], 24
          %v1387 = vld [vmem:[%s1386] sm:$0xff]
          %v1388 = vrcp.pop %v1387
          %1390 = vset.pattern.permute.xlu0 0
          %1391 = vperm.xlu0 %1390, %v1388
          %v1392 = vpop.permute.xlu0 %1391
          %v1394 = vmul.f32 %v1385, %v1392
          %vm1395 = vcmask 261312
          %1396 = vst.msk [vmem:[#allocation5] sm:$0xff] %vm1395, %v1394
          %v1397 = vld [vmem:[#allocation5] sm:$0xff]
          %v1398 = vpack.c.bf16 %v1397, %v1397
          %v1399 = vld [vmem:[#allocation20] sm:$0xf]
          %v1400 = vld [vmem:[#allocation20 + $0x4] sm:$0xf]
          %v1401 = vld [vmem:[#allocation20 + $0x8] sm:$0xf]
          %v1402 = vld [vmem:[#allocation20 + $0xc] sm:$0xf]
          %v1403 = vld [vmem:[#allocation21] sm:$0x1]
          %v1405 = vlaneseq
          %v1406 = vshrl.u32 %v1405, 7
          %v1407 = vsub.s32 0, %v1406
          %v1408 = vrot.slane %v1403, %v1407
          %v1414 = vunpack.c.l.b16 %v1399
          %v1415 = vunpack.c.l.b16 %v1400
          %v1416 = vunpack.c.l.b16 %v1401
          %v1417 = vunpack.c.l.b16 %v1402
          %v1418 = vpack.c.b16 %v1415, %v1414
          %v1419 = vpack.c.b16 %v1417, %v1416
          %vm1422 = vcmask 261120
          %v1424 = vsel %vm1422, %v1398, 0
          %1426 = vmatprep.subr.bf16.mxu0 0
          %1427 = vmatpush1.bf16.msra.mxu0 %v1418
          %1428 = vmatprep.subr.bf16.mxu0 0
          %1429 = vmatpush1.bf16.msra.mxu0 %v1419
          %1430 = vmatprep.subr.bf16.mxu0 0
          %1431 = vmatpush1.bf16.msra.mxu0 0
          %1432 = vmatprep.subr.bf16.mxu0 0
          %1433 = vmatpush1.bf16.msra.mxu0 0
          %1434 = vmatprep.subr.bf16.mxu0 0
          %1435 = vmatpush1.bf16.msra.mxu0 0
          %1436 = vmatprep.subr.bf16.mxu0 0
          %1437 = vmatpush1.bf16.msra.mxu0 0
          %1438 = vmatprep.subr.bf16.mxu0 0
          %1439 = vmatpush1.bf16.msra.mxu0 0
          %1440 = vmatprep.subr.bf16.mxu0 0
          %1441 = vmatpush1.bf16.msra.mxu0 0
          %1442 = vmatprep.subr.bf16.mxu0 0
          %1443 = vmatpush1.bf16.msra.mxu0 0
          %1444 = vmatprep.subr.bf16.mxu0 0
          %1445 = vmatpush1.bf16.msra.mxu0 0
          %1446 = vmatprep.subr.bf16.mxu0 0
          %1447 = vmatpush1.bf16.msra.mxu0 0
          %1448 = vmatprep.subr.bf16.mxu0 0
          %1449 = vmatpush1.bf16.msra.mxu0 0
          %1450 = vmatprep.subr.bf16.mxu0 0
          %1451 = vmatpush1.bf16.msra.mxu0 0
          %1452 = vmatprep.subr.bf16.mxu0 0
          %1453 = vmatpush1.bf16.msra.mxu0 0
          %1454 = vmatprep.subr.bf16.mxu0 0
          %1455 = vmatpush1.bf16.msra.mxu0 0
          %1456 = vmatprep.subr.bf16.mxu0 0
          %1457 = vmatpush1.bf16.msra.mxu0 0
          %1458 = vmatprep.mubr.bf16.mxu0 0
          %1459 = vmatmul.mubr.bf16.gmra.mrb[0].mxu0 %v1424
          %v1460 = vpop.f32.mrb[0].mxu0
          %v1461 = vadd.f32 %v1408, %v1460
          %v1462 = vpop.f32.mrb[0].mxu0
          %v1463 = vpop.f32.mrb[0].mxu0
          %v1464 = vpop.f32.mrb[0].mxu0
          %1465 = vdwg.mxu0
          %1466 = vst.msk [vmem:[%s546] sm:$0xff] %vm1422, %v1461
        $region112: #{tpu_custom_call.1} parent=59 // pred_fallthru
          _
        %s1467 = sand.u32 %s287, 1
        %s1468 = scalar_lea.sflag [#allocation8], %s1467
        %s1469 = sand.u32 %s287, 1
        %s1470 = smul.addr %s1469, 8
        %s1471 = scalar_lea.vmem [#allocation23], %s1470
        // Predicated region
        $region113: #{tpu_custom_call.1} parent=59 // pred_check
          %p1472 = pneg %p297
        $region114: #{tpu_custom_call.1} parent=59 // pred_check_branch
          %1474 = sbr.rel (%p1472) target = $region116
        $region115: #{tpu_custom_call.1} parent=59 // pred_region
          %s1476 = ssub.s32 128, 128
          %1477 = vsyncadd %s1468, %s1476
          %s1478 = sadd.s32 %s40, %s39
          %s1479 = smul.addr %s1478, 128
          %s1480 = scalar_lea.hbm %s10, %s1479
          %s1482 = sshll.u32 %s1471, 4
          %s1483 = int_to_ptr.vmem [resolvable:$true] %s1482
          %1485 = dma.vmem_to_hbm [thread:$0]  %s1483, 128, %s1480, %s1468
        $region116: #{tpu_custom_call.1} parent=59 // pred_fallthru
          _
      $region60: #{tpu_custom_call.1} parent=5 // pred_fallthru
        _
      %p1486 = scmp.le.s32.totalorder 2, %s29
      // Predicated region
      $region117: #{tpu_custom_call.1} parent=5 // pred_check
        %p1487 = pneg %p1486
      $region118: #{tpu_custom_call.1} parent=5 // pred_check_branch
        %1489 = sbr.rel (%p1487) target = $region120
      $region119: #{tpu_custom_call.1} parent=5 // pred_region
        %s1490 = ssub.s32 %s29, 2
        // Predicated region
        $region121: #{tpu_custom_call.1} parent=119 // pred_check
          %p1491 = pneg %p303
        $region122: #{tpu_custom_call.1} parent=119 // pred_check_branch
          %1493 = sbr.rel (%p1491) target = $region124
        $region123: #{tpu_custom_call.1} parent=119 // pred_region
          %s1494 = sand.u32 %s288, 1
          %s1495 = scalar_lea.sflag [#allocation8], %s1494
          %s1496 = sand.u32 %s288, 1
          %s1497 = smul.addr %s1496, 8
          %s1498 = scalar_lea.vmem [#allocation23], %s1497
          %1499 = dma.done %s1495, 128
        $region124: #{tpu_custom_call.1} parent=119 // pred_fallthru
          _
      $region120: #{tpu_custom_call.1} parent=5 // pred_fallthru
        _
    $region6: #{tpu_custom_call.1} parent=1 // loop_footer
      %s33 = sadd.s32 1, %s29
    $region7: #{tpu_custom_call.1} parent=1 // loop_footer_branch
      %28 = sbr.rel target = $region3
    $region8: #{tpu_custom_call.1} parent=1 // loop_exit
      _
    %1500 = vsyncpa [#allocation7], 1
    %s1501 = scalar_lea.sflag [#allocation7], 1
    %1502 = vsyncpa %s1501, 1
    %1503 = vsyncpa [#allocation10], 1
    %s1504 = scalar_lea.sflag [#allocation10], 1
    %1505 = vsyncpa %s1504, 1
    %1506 = vsyncpa [#allocation13], 1
    %1507 = vsyncpa [#allocation16], 1
    %1508 = vsyncpa [#allocation19], 1
    %1509 = vsyncpa [#allocation22], 1
    %1510 = vsyncpa [#allocation8], 1
    %s1511 = scalar_lea.sflag [#allocation8], 1
    %1512 = vsyncpa %s1511, 1

</llo_original>
